<compile_context>
chip_gen: v7x
topology: tpu7x:2x2x1
jax: 0.10.0
libtpu: 0.0.40
codegen_flags: <defaults>
</compile_context>

<pallas_src>
import functools

import jax
import jax.numpy as jnp
import numpy as np
from jax import lax
from jax.experimental import pallas as pl
from jax.experimental.pallas import tpu as pltpu

C_FEAT = 128   # mask / feature channels, fixed by ConvTranspose2d(128, 128, ...)
KSIZE = 8      # ConvTranspose2d kernel size
STRIDE = 4     # ConvTranspose2d stride
PAD = 2        # ConvTranspose2d padding


# ---------------------------- sizing helpers ----------------------------

def _round_up(x, m):
    return ((x + m - 1) // m) * m


@functools.lru_cache(maxsize=1)
def _vmem_limit_bytes():
    """Scoped-VMEM limit per generation: ~100 MiB on 128 MiB chips (v5e/v6e),
    ~40 MiB on 64 MiB chips (v7x)."""
    mib = 1024 * 1024
    cap = 64 * mib
    try:
        info = pltpu.get_tpu_info()
        cap = int(getattr(info, "vmem_capacity_bytes", None)
                  or getattr(info, "vmem_size_bytes", cap))
    except Exception:
        pass
    return int(max(32 * mib, min(cap - 24 * mib, (cap * 25) // 32)))


def _pick_row_tile(hi, wi, vmem_limit):
    """Decoder feature rows per grid step, sized from the real per-step VMEM footprint:
    double-buffered f32 output block + in-kernel temporaries, after subtracting the
    resident (double-buffered) padded feature map and packed weights."""
    c = C_FEAT
    fp_bytes = 2 * (hi + 2) * (wi + 2) * c * 2                # padded bf16 features x2
    w_bytes = 2 * 4 * (STRIDE * c) * (STRIDE * c) * 2         # packed bf16 weights x2
    fixed = fp_bytes + w_bytes + 2 * 1024 * 1024              # + bias / misc slack
    out_row = 2 * STRIDE * wi * STRIDE * c * 4                # f32 output block x2
    tmp_row = wi * STRIDE * c * (2 + 2 + 4)                   # window copies + xg + y
    avail = vmem_limit - fixed
    th = int(avail // (out_row + tmp_row)) if avail > 0 else 1
    return max(1, min(hi, th))


# ---------------------------- encoder (synthetic trunk) ----------------------------

def _enc_kernel(x_ref, w_ref, b_ref, o_ref):
    """o = relu(x @ w + b); bf16 operands, f32 accumulation, bf16 output."""
    acc = jnp.dot(x_ref[...], w_ref[...], preferred_element_type=jnp.float32)
    o_ref[...] = jnp.maximum(acc + b_ref[...], 0.0).astype(o_ref.dtype)


def patchify_conv(x_nhwc, w_enc, b_enc):
    """4x4 / stride-4 conv as an M-tiled im2col matmul, + ReLU.  Returns bf16 features."""
    n, h, w, cin = x_nhwc.shape
    hi, wi = h // STRIDE, w // STRIDE
    # bf16 before the im2col reshape/transpose halves its HBM read+write.
    # TODO(synk): fuse the 4x4 patch gather into the pallas_call (BlockSpec over raw
    #             (1, 4*rows, W, cin) input rows + in-kernel regroup) to kill the
    #             host-side im2col round trip entirely.
    xb = x_nhwc.astype(jnp.bfloat16)
    patches = xb.reshape(n, hi, STRIDE, wi, STRIDE, cin)
    patches = jnp.transpose(patches, (0, 1, 3, 2, 4, 5)).reshape(
        n * hi * wi, STRIDE * STRIDE * cin)
    m, k = patches.shape
    tm = min(512, _round_up(m, 8))
    m_pad = _round_up(m, tm)              # pad M instead of one huge fallback block
    if m_pad != m:
        patches = jnp.pad(patches, ((0, m_pad - m), (0, 0)))

    out = pl.pallas_call(
        _enc_kernel,
        out_shape=jax.ShapeDtypeStruct((m_pad, C_FEAT), jnp.bfloat16),
        grid=(m_pad // tm,),
        in_specs=[
            pl.BlockSpec((tm, k), lambda i: (i, 0)),
            pl.BlockSpec((k, C_FEAT), lambda i: (0, 0)),        # weight resident
            pl.BlockSpec((1, C_FEAT), lambda i: (0, 0)),        # bias resident
        ],
        out_specs=pl.BlockSpec((tm, C_FEAT), lambda i: (i, 0)),
        compiler_params=pltpu.CompilerParams(
            dimension_semantics=("parallel",),
            vmem_limit_bytes=_vmem_limit_bytes()),
    )(patches, w_enc.astype(jnp.bfloat16),
      b_enc.reshape(1, C_FEAT).astype(jnp.float32))
    return out[:m].reshape(n, hi, wi, C_FEAT)


# ---------------------------- decoder (ConvTranspose2d 128->128, k8 s4 p2) ----------------------------
#
# For output row oh = 4*R + bh (bh in [0,4)):  oh + PAD = ih*STRIDE + kh  gives 2 taps:
#   bh < 2 : (ih = R-1, kh = bh+6), (ih = R,   kh = bh+2)
#   bh >= 2: (ih = R,   kh = bh+2), (ih = R+1, kh = bh-2)
# so offsets {0,1} and {2,3} each share a pair of input rows (same along W).  Grouping
# (gh, gw) in {0,1}^2 -> the 4 in-group offsets share one 2x2 input neighborhood and
# become a single (th*Wi, 512) @ (512, 512) matmul whose 512 output columns are
# (obh, obw, C_out), obh/obw in {0,1}.

def _ktap(g, o, d):
    """Kernel index for group half g, in-group offset o, tap d (same for H and W)."""
    if g == 0:
        return o + 6 if d == 0 else o + 2
    return o + 4 if d == 0 else o


def _pack_group_weights(w_dec):
    """(C,C,8,8) PyTorch ConvTranspose weight -> (4, 4C, 4C) per-group matmul weights.

    rows:  (dh, dw, c_in)   cols: (obh, obw, c_out)
    """
    groups = []
    for gh in range(2):
        for gw in range(2):
            rows = []
            for dh in range(2):
                for dw in range(2):
                    cols = []
                    for obh in range(2):
                        for obw in range(2):
                            kh = _ktap(gh, obh, dh)
                            kw = _ktap(gw, obw, dw)
                            cols.append(w_dec[:, :, kh, kw])          # (Cin, Cout)
                    rows.append(jnp.concatenate(cols, axis=1))        # (Cin, 4*Cout)
            groups.append(jnp.concatenate(rows, axis=0))              # (4*Cin, 4*Cout)
    return jnp.stack(groups, axis=0)                                   # (4, 4C, 4C)


def _deconv_kernel(fp_ref, w_ref, b_ref, o_ref, *, th, wi):
    """One (batch, row-tile) step of the ConvTranspose2d tail.

    fp_ref : (1, Hi_pad+2, Wi_pad+2, C) zero-padded features (bf16), resident per batch
    w_ref  : (4, 4C, 4C)                packed group weights (bf16), grid-resident
    b_ref  : (1, 4C)                    bias tiled over the 4 in-group output offsets (f32)
    o_ref  : (1, th, 4, Wi_pad, 4C)     output rows of this tile, depth-to-space layout
    """
    c = C_FEAT
    i = pl.program_id(1)
    base = pl.multiple_of(i * th, th)          # first padded feature row of this tile
    bias = b_ref[...]                          # (1, 4C) f32 — added once per group

    for gh in range(2):                        # output-row sub-offsets {2*gh, 2*gh+1}
        for gw in range(2):                    # output-col sub-offsets {2*gw, 2*gw+1}
            g = gh * 2 + gw
            wg = w_ref[g]                      # (4C, 4C) bf16
            # 2x2 shifted windows shared by this group's 4 sub-pixel offsets,
            # concatenated once along lanes -> one big MXU dot with M = th*wi.
            xg = jnp.concatenate(
                [fp_ref[0, pl.ds(base + gh + dh, th), pl.ds(gw + dw, wi), :]
                 for dh in range(2) for dw in range(2)], axis=-1)        # (th, wi, 4C)
            y = jnp.dot(xg.reshape(th * wi, STRIDE * c), wg,
                        preferred_element_type=jnp.float32) + bias       # (th*wi, 4C)
            for obh in range(2):               # 2 lane-dense (th, wi, 2C) stores
                slab = y[:, obh * 2 * c:(obh + 1) * 2 * c].reshape(th, wi, 2 * c)
                o_ref[0, :, 2 * gh + obh, :, 2 * gw * c:(2 * gw + 2) * c] = (
                    slab.astype(o_ref.dtype))


def conv_transpose_4x(feat_bf16, w_dec, b_dec):
    """ConvTranspose2d(128,128,k=8,s=4,p=2) in NHWC; returns (N, 4Hi, 4Wi, 128) f32."""
    n, hi, wi, c = feat_bf16.shape
    vmem_limit = _vmem_limit_bytes()
    wi_pad = _round_up(wi, 8)                      # keep in-kernel reshapes sublane-friendly
    th = _pick_row_tile(hi, wi_pad, vmem_limit)
    hi_pad = _round_up(hi, th)                     # pad Hi instead of degrading to th=1
    # Zero halo (+1 row/col each side) and the Hi/Wi tile padding folded into one pad.
    # TODO(synk): for very large images the per-image feature map may not fit VMEM;
    #             switch in_specs[0] to memory_space=pl.ANY + manual make_async_copy of
    #             (th+2)-row halo slabs, and single-buffer the grid-invariant inputs
    #             (pipeline_mode=pl.Buffered(1)) to reclaim the double-buffer copy.
    fp = jnp.pad(feat_bf16,
                 ((0, 0), (1, 1 + hi_pad - hi), (1, 1 + wi_pad - wi), (0, 0)))
    wg = _pack_group_weights(w_dec).astype(jnp.bfloat16)                 # (4, 4C, 4C)
    bt = jnp.tile(b_dec.astype(jnp.float32), STRIDE).reshape(1, STRIDE * c)
    kernel = functools.partial(_deconv_kernel, th=th, wi=wi_pad)

    out = pl.pallas_call(
        kernel,
        out_shape=jax.ShapeDtypeStruct((n, hi_pad, STRIDE, wi_pad, STRIDE * c),
                                       jnp.float32),
        grid=(n, hi_pad // th),
        in_specs=[
            pl.BlockSpec((1, hi_pad + 2, wi_pad + 2, c), lambda b, i: (b, 0, 0, 0)),
            pl.BlockSpec((4, STRIDE * c, STRIDE * c), lambda b, i: (0, 0, 0)),   # resident
            pl.BlockSpec((1, STRIDE * c), lambda b, i: (0, 0)),                  # resident
        ],
        out_specs=pl.BlockSpec((1, th, STRIDE, wi_pad, STRIDE * c),
                               lambda b, i: (b, i, 0, 0, 0)),
        compiler_params=pltpu.CompilerParams(
            dimension_semantics=("parallel", "parallel"),
            vmem_limit_bytes=vmem_limit),
    )(fp, wg, bt)
    if hi_pad != hi or wi_pad != wi:
        out = out[:, :hi, :, :wi]
    # (N, Hi, 4, Wi, 4C) row-major is exactly (N, 4Hi, 4Wi, C): free reshape, no transpose.
    # TODO(synk): optional bf16 writeback + bf16 NHWC->NCHW transpose would halve the
    #             dominant full-resolution HBM traffic at ~4e-3 relative rounding cost.
    return out.reshape(n, hi * STRIDE, wi * STRIDE, c)


# ---------------------------- parameters & forward ----------------------------

def init_params(key, c_in):
    k1, k2, k3, k4 = jax.random.split(key, 4)
    w_enc = 0.05 * jax.random.normal(k1, (STRIDE * STRIDE * c_in, C_FEAT), jnp.float32)
    b_enc = 0.05 * jax.random.normal(k2, (C_FEAT,), jnp.float32)
    # PyTorch ConvTranspose2d weight layout: (in_channels, out_channels, kH, kW)
    w_dec = 0.05 * jax.random.normal(k3, (C_FEAT, C_FEAT, KSIZE, KSIZE), jnp.float32)
    b_dec = 0.05 * jax.random.normal(k4, (C_FEAT,), jnp.float32)
    return dict(w_enc=w_enc, b_enc=b_enc, w_dec=w_dec, b_dec=b_dec)


def model_forward(params, x_nchw):
    """Model.forward: masks = model(x)[0]; return resize(masks, x.shape[2:])."""
    n, cin, h, w = x_nchw.shape
    if h % STRIDE or w % STRIDE:
        # TODO(synk): real inputs need explicit padding to a multiple of 4 (backbone stride).
        raise ValueError("spatial dims must be multiples of 4")
    x = jnp.transpose(x_nchw.astype(jnp.bfloat16), (0, 2, 3, 1))         # NCHW -> NHWC
    feat = patchify_conv(x, params["w_enc"], params["b_enc"])            # (N, H/4, W/4, 128) bf16
    masks = conv_transpose_4x(feat, params["w_dec"], params["b_dec"])    # (N, H, W, 128) f32
    masks = jnp.transpose(masks, (0, 3, 1, 2))                           # back to NCHW
    if masks.shape[2:] != (h, w):
        # TODO(synk): exact torch `resize` flavor unspecified; bilinear fallback.
        masks = jax.image.resize(masks, masks.shape[:2] + (h, w), method="bilinear")
    return masks


# ---------------------------- pure-JAX reference (bf16-operand matched) ----------------------------

def _reference_forward(params, x_nchw):
    x = jnp.transpose(x_nchw, (0, 2, 3, 1)).astype(jnp.float32)
    n, h, w, cin = x.shape
    hi, wi = h // STRIDE, w // STRIDE
    patches = x.reshape(n, hi, STRIDE, wi, STRIDE, cin)
    patches = jnp.transpose(patches, (0, 1, 3, 2, 4, 5)).reshape(n * hi * wi, -1)
    pb = patches.astype(jnp.bfloat16).astype(jnp.float32)
    wb = params["w_enc"].astype(jnp.bfloat16).astype(jnp.float32)
    feat = jnp.maximum(
        jnp.dot(pb, wb, precision=lax.Precision.HIGHEST) + params["b_enc"], 0.0)
    feat = feat.astype(jnp.bfloat16).astype(jnp.float32).reshape(n, hi, wi, C_FEAT)
    # ConvTranspose == lhs-dilated conv with spatially flipped kernel, pad = k-1-p
    w_conv = jnp.transpose(params["w_dec"][:, :, ::-1, ::-1], (2, 3, 0, 1))
    w_conv = w_conv.astype(jnp.bfloat16).astype(jnp.float32)
    q = KSIZE - 1 - PAD
    masks = lax.conv_general_dilated(
        feat, w_conv, window_strides=(1, 1), padding=[(q, q), (q, q)],
        lhs_dilation=(STRIDE, STRIDE),
        dimension_numbers=("NHWC", "HWIO", "NHWC"),
        precision=lax.Precision.HIGHEST) + params["b_dec"]
    return jnp.transpose(masks, (0, 3, 1, 2))


if __name__ == "__main__":
    key = jax.random.PRNGKey(0)
    kx, kp = jax.random.split(key)
    params = init_params(kp, c_in=4)
    fwd = jax.jit(model_forward)

    # Second (smaller) shape exercises the Hi/Wi tile-padding path (wi=4 -> wi_pad=8).
    for shape in ((2, 4, 32, 32), (1, 4, 16, 16)):
        x = jax.random.normal(kx, shape, jnp.float32)                    # NCHW
        out = jax.block_until_ready(fwd(params, x))
        assert out.shape == (shape[0], C_FEAT, shape[2], shape[3]), out.shape
        ref = jax.block_until_ready(_reference_forward(params, x))
        np.testing.assert_allclose(np.asarray(out), np.asarray(ref), rtol=2e-3, atol=2e-3)

    print("KERNEL_OK")
</pallas_src>

<mosaic_0001>
module attributes {stable_mosaic.version = 11 : i64} {
  func.func @_enc_kernel(%arg0: i32, %arg1: memref<128x64xbf16, #tpu.memory_space<vmem>>, %arg2: memref<64x128xbf16, #tpu.memory_space<vmem>>, %arg3: memref<1x128xf32, #tpu.memory_space<vmem>>, %arg4: memref<128x128xbf16, #tpu.memory_space<vmem>>) attributes {dimension_semantics = [#tpu.dimension_semantics<parallel>], iteration_bounds = array<i64: 1>, scalar_prefetch = 0 : i64, scratch_operands = 0 : i64, tpu.core_type = #tpu.core_type<tc>, window_params = [{transform_indices = @transform_0, window_bounds = array<i64: 128, 64>}, {pipeline_mode = #tpu.pipeline_mode<synchronous>, transform_indices = @transform_1, window_bounds = array<i64: 64, 128>}, {pipeline_mode = #tpu.pipeline_mode<synchronous>, transform_indices = @transform_2, window_bounds = array<i64: 1, 128>}, {transform_indices = @transform_3, window_bounds = array<i64: 128, 128>}]} {
    %c0 = arith.constant 0 : index
    %c0_0 = arith.constant 0 : index
    %0 = vector.load %arg1[%c0, %c0_0] : memref<128x64xbf16, #tpu.memory_space<vmem>>, vector<128x64xbf16>
    %c0_1 = arith.constant 0 : index
    %c0_2 = arith.constant 0 : index
    %1 = vector.load %arg2[%c0_1, %c0_2] : memref<64x128xbf16, #tpu.memory_space<vmem>>, vector<64x128xbf16>
    %cst = arith.constant dense<0.000000e+00> : vector<128x128xf32>
    %2 = tpu.matmul %0, %1, %cst {dimension_numbers = #tpu.dot_dimension_numbers<[1], [0], [0], [1], [0, 0, 1, 1], [], []>} : vector<128x64xbf16>, vector<64x128xbf16>, vector<128x128xf32> -> vector<128x128xf32>
    %c0_3 = arith.constant 0 : index
    %c0_4 = arith.constant 0 : index
    %3 = vector.load %arg3[%c0_3, %c0_4] : memref<1x128xf32, #tpu.memory_space<vmem>>, vector<1x128xf32>
    %4 = vector.broadcast %3 : vector<1x128xf32> to vector<128x128xf32>
    %5 = arith.addf %2, %4 : vector<128x128xf32>
    %cst_5 = arith.constant 0.000000e+00 : f32
    %6 = vector.broadcast %cst_5 : f32 to vector<128x128xf32>
    %7 = arith.maximumf %5, %6 : vector<128x128xf32>
    %8 = arith.truncf %7 : vector<128x128xf32> to vector<128x128xbf16>
    %c0_6 = arith.constant 0 : index
    %c0_7 = arith.constant 0 : index
    %9 = vector.load %arg4[%c0_6, %c0_7] : memref<128x128xbf16, #tpu.memory_space<vmem>>, vector<128x128xbf16>
    tpu.vector_store %arg4[%c0_6, %c0_7], %8 {strides = array<i32>} : memref<128x128xbf16, #tpu.memory_space<vmem>>, vector<128x128xbf16>,
    return
  }
  func.func @transform_0(%arg0: i32) -> (i32, i32) {
    %c0_i32 = arith.constant 0 : i32
    %c0_i32_0 = arith.constant 0 : i32
    return %arg0, %c0_i32 : i32, i32
  }
  func.func @transform_1(%arg0: i32) -> (i32, i32) {
    %c0_i32 = arith.constant 0 : i32
    %c0_i32_0 = arith.constant 0 : i32
    %c0_i32_1 = arith.constant 0 : i32
    return %c0_i32, %c0_i32_0 : i32, i32
  }
  func.func @transform_2(%arg0: i32) -> (i32, i32) {
    %c0_i32 = arith.constant 0 : i32
    %c0_i32_0 = arith.constant 0 : i32
    %c0_i32_1 = arith.constant 0 : i32
    return %c0_i32, %c0_i32_0 : i32, i32
  }
  func.func @transform_3(%arg0: i32) -> (i32, i32) {
    %c0_i32 = arith.constant 0 : i32
    %c0_i32_0 = arith.constant 0 : i32
    return %arg0, %c0_i32 : i32, i32
  }
}

module attributes {stable_mosaic.version = 11 : i64} {
  func.func @_deconv_kernel(%arg0: i32, %arg1: i32, %arg2: memref<1x10x10x128xbf16, #tpu.memory_space<vmem>>, %arg3: memref<4x512x512xbf16, #tpu.memory_space<vmem>>, %arg4: memref<1x512xf32, #tpu.memory_space<vmem>>, %arg5: memref<1x8x4x8x512xf32, #tpu.memory_space<vmem>>) attributes {dimension_semantics = [#tpu.dimension_semantics<parallel>, #tpu.dimension_semantics<parallel>], iteration_bounds = array<i64: 2, 1>, scalar_prefetch = 0 : i64, scratch_operands = 0 : i64, tpu.core_type = #tpu.core_type<tc>, window_params = [{transform_indices = @transform_0, window_bounds = array<i64: 1, 10, 10, 128>}, {pipeline_mode = #tpu.pipeline_mode<synchronous>, transform_indices = @transform_1, window_bounds = array<i64: 4, 512, 512>}, {pipeline_mode = #tpu.pipeline_mode<synchronous>, transform_indices = @transform_2, window_bounds = array<i64: 1, 512>}, {transform_indices = @transform_3, window_bounds = array<i64: 1, 8, 4, 8, 512>}]} {
    %c8_i32 = arith.constant 8 : i32
    %0 = arith.muli %arg1, %c8_i32 : i32
    %1 = tpu.assume_multiple %0, 8 : i32
    %c0 = arith.constant 0 : index
    %c0_0 = arith.constant 0 : index
    %2 = vector.load %arg4[%c0, %c0_0] : memref<1x512xf32, #tpu.memory_space<vmem>>, vector<1x512xf32>
    %c0_1 = arith.constant 0 : index
    %c0_2 = arith.constant 0 : index
    %c0_3 = arith.constant 0 : index
    %3 = vector.load %arg3[%c0_1, %c0_2, %c0_3] : memref<4x512x512xbf16, #tpu.memory_space<vmem>>, vector<1x512x512xbf16>
    %4 = vector.shape_cast %3 : vector<1x512x512xbf16> to vector<512x512xbf16>
    %c0_i32 = arith.constant 0 : i32
    %5 = arith.addi %1, %c0_i32 : i32
    %c0_i32_4 = arith.constant 0 : i32
    %6 = arith.addi %5, %c0_i32_4 : i32
    %c0_5 = arith.constant 0 : index
    %7 = arith.index_cast %6 : i32 to index
    %c0_6 = arith.constant 0 : index
    %c0_7 = arith.constant 0 : index
    %8 = vector.load %arg2[%c0_5, %7, %c0_6, %c0_7] : memref<1x10x10x128xbf16, #tpu.memory_space<vmem>>, vector<1x8x8x128xbf16>
    %9 = vector.shape_cast %8 : vector<1x8x8x128xbf16> to vector<8x8x128xbf16>
    %c0_i32_8 = arith.constant 0 : i32
    %10 = arith.addi %1, %c0_i32_8 : i32
    %c0_i32_9 = arith.constant 0 : i32
    %11 = arith.addi %10, %c0_i32_9 : i32
    %c0_10 = arith.constant 0 : index
    %12 = arith.index_cast %11 : i32 to index
    %c1 = arith.constant 1 : index
    %c0_11 = arith.constant 0 : index
    %13 = vector.load %arg2[%c0_10, %12, %c1, %c0_11] : memref<1x10x10x128xbf16, #tpu.memory_space<vmem>>, vector<1x8x8x128xbf16>
    %14 = vector.shape_cast %13 : vector<1x8x8x128xbf16> to vector<8x8x128xbf16>
    %c0_i32_12 = arith.constant 0 : i32
    %15 = arith.addi %1, %c0_i32_12 : i32
    %c1_i32 = arith.constant 1 : i32
    %16 = arith.addi %15, %c1_i32 : i32
    %c0_13 = arith.constant 0 : index
    %17 = arith.index_cast %16 : i32 to index
    %c0_14 = arith.constant 0 : index
    %c0_15 = arith.constant 0 : index
    %18 = vector.load %arg2[%c0_13, %17, %c0_14, %c0_15] : memref<1x10x10x128xbf16, #tpu.memory_space<vmem>>, vector<1x8x8x128xbf16>
    %19 = vector.shape_cast %18 : vector<1x8x8x128xbf16> to vector<8x8x128xbf16>
    %c0_i32_16 = arith.constant 0 : i32
    %20 = arith.addi %1, %c0_i32_16 : i32
    %c1_i32_17 = arith.constant 1 : i32
    %21 = arith.addi %20, %c1_i32_17 : i32
    %c0_18 = arith.constant 0 : index
    %22 = arith.index_cast %21 : i32 to index
    %c1_19 = arith.constant 1 : index
    %c0_20 = arith.constant 0 : index
    %23 = vector.load %arg2[%c0_18, %22, %c1_19, %c0_20] : memref<1x10x10x128xbf16, #tpu.memory_space<vmem>>, vector<1x8x8x128xbf16>
    %24 = vector.shape_cast %23 : vector<1x8x8x128xbf16> to vector<8x8x128xbf16>
    %25 = tpu.concatenate %9, %14, %19, %24 in 2 : vector<8x8x128xbf16>, vector<8x8x128xbf16>, vector<8x8x128xbf16>, vector<8x8x128xbf16> -> vector<8x8x512xbf16>
    %26 = vector.shape_cast %25 : vector<8x8x512xbf16> to vector<64x512xbf16>
    %cst = arith.constant dense<0.000000e+00> : vector<64x512xf32>
    %27 = tpu.matmul %26, %4, %cst {dimension_numbers = #tpu.dot_dimension_numbers<[1], [0], [0], [1], [0, 0, 1, 1], [], []>} : vector<64x512xbf16>, vector<512x512xbf16>, vector<64x512xf32> -> vector<64x512xf32>
    %28 = vector.broadcast %2 : vector<1x512xf32> to vector<64x512xf32>
    %29 = arith.addf %27, %28 : vector<64x512xf32>
    %30 = vector.extract_strided_slice %29 {offsets = [0, 0], sizes = [64, 256], strides = [1, 1]} : vector<64x512xf32> to vector<64x256xf32>
    %31 = vector.shape_cast %30 : vector<64x256xf32> to vector<8x8x256xf32>
    %c0_21 = arith.constant 0 : index
    %c0_22 = arith.constant 0 : index
    %c0_23 = arith.constant 0 : index
    %c0_24 = arith.constant 0 : index
    %c0_25 = arith.constant 0 : index
    %32 = vector.load %arg5[%c0_21, %c0_22, %c0_23, %c0_24, %c0_25] : memref<1x8x4x8x512xf32, #tpu.memory_space<vmem>>, vector<1x8x1x8x256xf32>
    %33 = vector.shape_cast %32 : vector<1x8x1x8x256xf32> to vector<8x8x256xf32>
    %34 = vector.shape_cast %31 : vector<8x8x256xf32> to vector<1x8x1x8x256xf32>
    tpu.vector_store %arg5[%c0_21, %c0_22, %c0_23, %c0_24, %c0_25], %34 {strides = array<i32>} : memref<1x8x4x8x512xf32, #tpu.memory_space<vmem>>, vector<1x8x1x8x256xf32>,
    %35 = vector.extract_strided_slice %29 {offsets = [0, 256], sizes = [64, 256], strides = [1, 1]} : vector<64x512xf32> to vector<64x256xf32>
    %36 = vector.shape_cast %35 : vector<64x256xf32> to vector<8x8x256xf32>
    %c0_26 = arith.constant 0 : index
    %c0_27 = arith.constant 0 : index
    %c1_28 = arith.constant 1 : index
    %c0_29 = arith.constant 0 : index
    %c0_30 = arith.constant 0 : index
    %37 = vector.load %arg5[%c0_26, %c0_27, %c1_28, %c0_29, %c0_30] : memref<1x8x4x8x512xf32, #tpu.memory_space<vmem>>, vector<1x8x1x8x256xf32>
    %38 = vector.shape_cast %37 : vector<1x8x1x8x256xf32> to vector<8x8x256xf32>
    %39 = vector.shape_cast %36 : vector<8x8x256xf32> to vector<1x8x1x8x256xf32>
    tpu.vector_store %arg5[%c0_26, %c0_27, %c1_28, %c0_29, %c0_30], %39 {strides = array<i32>} : memref<1x8x4x8x512xf32, #tpu.memory_space<vmem>>, vector<1x8x1x8x256xf32>,
    %c1_31 = arith.constant 1 : index
    %c0_32 = arith.constant 0 : index
    %c0_33 = arith.constant 0 : index
    %40 = vector.load %arg3[%c1_31, %c0_32, %c0_33] : memref<4x512x512xbf16, #tpu.memory_space<vmem>>, vector<1x512x512xbf16>
    %41 = vector.shape_cast %40 : vector<1x512x512xbf16> to vector<512x512xbf16>
    %c0_i32_34 = arith.constant 0 : i32
    %42 = arith.addi %1, %c0_i32_34 : i32
    %c0_i32_35 = arith.constant 0 : i32
    %43 = arith.addi %42, %c0_i32_35 : i32
    %c0_36 = arith.constant 0 : index
    %44 = arith.index_cast %43 : i32 to index
    %c1_37 = arith.constant 1 : index
    %c0_38 = arith.constant 0 : index
    %45 = vector.load %arg2[%c0_36, %44, %c1_37, %c0_38] : memref<1x10x10x128xbf16, #tpu.memory_space<vmem>>, vector<1x8x8x128xbf16>
    %46 = vector.shape_cast %45 : vector<1x8x8x128xbf16> to vector<8x8x128xbf16>
    %c0_i32_39 = arith.constant 0 : i32
    %47 = arith.addi %1, %c0_i32_39 : i32
    %c0_i32_40 = arith.constant 0 : i32
    %48 = arith.addi %47, %c0_i32_40 : i32
    %c0_41 = arith.constant 0 : index
    %49 = arith.index_cast %48 : i32 to index
    %c2 = arith.constant 2 : index
    %c0_42 = arith.constant 0 : index
    %50 = vector.load %arg2[%c0_41, %49, %c2, %c0_42] : memref<1x10x10x128xbf16, #tpu.memory_space<vmem>>, vector<1x8x8x128xbf16>
    %51 = vector.shape_cast %50 : vector<1x8x8x128xbf16> to vector<8x8x128xbf16>
    %c0_i32_43 = arith.constant 0 : i32
    %52 = arith.addi %1, %c0_i32_43 : i32
    %c1_i32_44 = arith.constant 1 : i32
    %53 = arith.addi %52, %c1_i32_44 : i32
    %c0_45 = arith.constant 0 : index
    %54 = arith.index_cast %53 : i32 to index
    %c1_46 = arith.constant 1 : index
    %c0_47 = arith.constant 0 : index
    %55 = vector.load %arg2[%c0_45, %54, %c1_46, %c0_47] : memref<1x10x10x128xbf16, #tpu.memory_space<vmem>>, vector<1x8x8x128xbf16>
    %56 = vector.shape_cast %55 : vector<1x8x8x128xbf16> to vector<8x8x128xbf16>
    %c0_i32_48 = arith.constant 0 : i32
    %57 = arith.addi %1, %c0_i32_48 : i32
    %c1_i32_49 = arith.constant 1 : i32
    %58 = arith.addi %57, %c1_i32_49 : i32
    %c0_50 = arith.constant 0 : index
    %59 = arith.index_cast %58 : i32 to index
    %c2_51 = arith.constant 2 : index
    %c0_52 = arith.constant 0 : index
    %60 = vector.load %arg2[%c0_50, %59, %c2_51, %c0_52] : memref<1x10x10x128xbf16, #tpu.memory_space<vmem>>, vector<1x8x8x128xbf16>
    %61 = vector.shape_cast %60 : vector<1x8x8x128xbf16> to vector<8x8x128xbf16>
    %62 = tpu.concatenate %46, %51, %56, %61 in 2 : vector<8x8x128xbf16>, vector<8x8x128xbf16>, vector<8x8x128xbf16>, vector<8x8x128xbf16> -> vector<8x8x512xbf16>
    %63 = vector.shape_cast %62 : vector<8x8x512xbf16> to vector<64x512xbf16>
    %cst_53 = arith.constant dense<0.000000e+00> : vector<64x512xf32>
    %64 = tpu.matmul %63, %41, %cst_53 {dimension_numbers = #tpu.dot_dimension_numbers<[1], [0], [0], [1], [0, 0, 1, 1], [], []>} : vector<64x512xbf16>, vector<512x512xbf16>, vector<64x512xf32> -> vector<64x512xf32>
    %65 = vector.broadcast %2 : vector<1x512xf32> to vector<64x512xf32>
    %66 = arith.addf %64, %65 : vector<64x512xf32>
    %67 = vector.extract_strided_slice %66 {offsets = [0, 0], sizes = [64, 256], strides = [1, 1]} : vector<64x512xf32> to vector<64x256xf32>
    %68 = vector.shape_cast %67 : vector<64x256xf32> to vector<8x8x256xf32>
    %c0_54 = arith.constant 0 : index
    %c0_55 = arith.constant 0 : index
    %c0_56 = arith.constant 0 : index
    %c0_57 = arith.constant 0 : index
    %c256 = arith.constant 256 : index
    %69 = vector.load %arg5[%c0_54, %c0_55, %c0_56, %c0_57, %c256] : memref<1x8x4x8x512xf32, #tpu.memory_space<vmem>>, vector<1x8x1x8x256xf32>
    %70 = vector.shape_cast %69 : vector<1x8x1x8x256xf32> to vector<8x8x256xf32>
    %71 = vector.shape_cast %68 : vector<8x8x256xf32> to vector<1x8x1x8x256xf32>
    tpu.vector_store %arg5[%c0_54, %c0_55, %c0_56, %c0_57, %c256], %71 {strides = array<i32>} : memref<1x8x4x8x512xf32, #tpu.memory_space<vmem>>, vector<1x8x1x8x256xf32>,
    %72 = vector.extract_strided_slice %66 {offsets = [0, 256], sizes = [64, 256], strides = [1, 1]} : vector<64x512xf32> to vector<64x256xf32>
    %73 = vector.shape_cast %72 : vector<64x256xf32> to vector<8x8x256xf32>
    %c0_58 = arith.constant 0 : index
    %c0_59 = arith.constant 0 : index
    %c1_60 = arith.constant 1 : index
    %c0_61 = arith.constant 0 : index
    %c256_62 = arith.constant 256 : index
    %74 = vector.load %arg5[%c0_58, %c0_59, %c1_60, %c0_61, %c256_62] : memref<1x8x4x8x512xf32, #tpu.memory_space<vmem>>, vector<1x8x1x8x256xf32>
    %75 = vector.shape_cast %74 : vector<1x8x1x8x256xf32> to vector<8x8x256xf32>
    %76 = vector.shape_cast %73 : vector<8x8x256xf32> to vector<1x8x1x8x256xf32>
    tpu.vector_store %arg5[%c0_58, %c0_59, %c1_60, %c0_61, %c256_62], %76 {strides = array<i32>} : memref<1x8x4x8x512xf32, #tpu.memory_space<vmem>>, vector<1x8x1x8x256xf32>,
    %c2_63 = arith.constant 2 : index
    %c0_64 = arith.constant 0 : index
    %c0_65 = arith.constant 0 : index
    %77 = vector.load %arg3[%c2_63, %c0_64, %c0_65] : memref<4x512x512xbf16, #tpu.memory_space<vmem>>, vector<1x512x512xbf16>
    %78 = vector.shape_cast %77 : vector<1x512x512xbf16> to vector<512x512xbf16>
    %c1_i32_66 = arith.constant 1 : i32
    %79 = arith.addi %1, %c1_i32_66 : i32
    %c0_i32_67 = arith.constant 0 : i32
    %80 = arith.addi %79, %c0_i32_67 : i32
    %c0_68 = arith.constant 0 : index
    %81 = arith.index_cast %80 : i32 to index
    %c0_69 = arith.constant 0 : index
    %c0_70 = arith.constant 0 : index
    %82 = vector.load %arg2[%c0_68, %81, %c0_69, %c0_70] : memref<1x10x10x128xbf16, #tpu.memory_space<vmem>>, vector<1x8x8x128xbf16>
    %83 = vector.shape_cast %82 : vector<1x8x8x128xbf16> to vector<8x8x128xbf16>
    %c1_i32_71 = arith.constant 1 : i32
    %84 = arith.addi %1, %c1_i32_71 : i32
    %c0_i32_72 = arith.constant 0 : i32
    %85 = arith.addi %84, %c0_i32_72 : i32
    %c0_73 = arith.constant 0 : index
    %86 = arith.index_cast %85 : i32 to index
    %c1_74 = arith.constant 1 : index
    %c0_75 = arith.constant 0 : index
    %87 = vector.load %arg2[%c0_73, %86, %c1_74, %c0_75] : memref<1x10x10x128xbf16, #tpu.memory_space<vmem>>, vector<1x8x8x128xbf16>
    %88 = vector.shape_cast %87 : vector<1x8x8x128xbf16> to vector<8x8x128xbf16>
    %c1_i32_76 = arith.constant 1 : i32
    %89 = arith.addi %1, %c1_i32_76 : i32
    %c1_i32_77 = arith.constant 1 : i32
    %90 = arith.addi %89, %c1_i32_77 : i32
    %c0_78 = arith.constant 0 : index
    %91 = arith.index_cast %90 : i32 to index
    %c0_79 = arith.constant 0 : index
    %c0_80 = arith.constant 0 : index
    %92 = vector.load %arg2[%c0_78, %91, %c0_79, %c0_80] : memref<1x10x10x128xbf16, #tpu.memory_space<vmem>>, vector<1x8x8x128xbf16>
    %93 = vector.shape_cast %92 : vector<1x8x8x128xbf16> to vector<8x8x128xbf16>
    %c1_i32_81 = arith.constant 1 : i32
    %94 = arith.addi %1, %c1_i32_81 : i32
    %c1_i32_82 = arith.constant 1 : i32
    %95 = arith.addi %94, %c1_i32_82 : i32
    %c0_83 = arith.constant 0 : index
    %96 = arith.index_cast %95 : i32 to index
    %c1_84 = arith.constant 1 : index
    %c0_85 = arith.constant 0 : index
    %97 = vector.load %arg2[%c0_83, %96, %c1_84, %c0_85] : memref<1x10x10x128xbf16, #tpu.memory_space<vmem>>, vector<1x8x8x128xbf16>
    %98 = vector.shape_cast %97 : vector<1x8x8x128xbf16> to vector<8x8x128xbf16>
    %99 = tpu.concatenate %83, %88, %93, %98 in 2 : vector<8x8x128xbf16>, vector<8x8x128xbf16>, vector<8x8x128xbf16>, vector<8x8x128xbf16> -> vector<8x8x512xbf16>
    %100 = vector.shape_cast %99 : vector<8x8x512xbf16> to vector<64x512xbf16>
    %cst_86 = arith.constant dense<0.000000e+00> : vector<64x512xf32>
    %101 = tpu.matmul %100, %78, %cst_86 {dimension_numbers = #tpu.dot_dimension_numbers<[1], [0], [0], [1], [0, 0, 1, 1], [], []>} : vector<64x512xbf16>, vector<512x512xbf16>, vector<64x512xf32> -> vector<64x512xf32>
    %102 = vector.broadcast %2 : vector<1x512xf32> to vector<64x512xf32>
    %103 = arith.addf %101, %102 : vector<64x512xf32>
    %104 = vector.extract_strided_slice %103 {offsets = [0, 0], sizes = [64, 256], strides = [1, 1]} : vector<64x512xf32> to vector<64x256xf32>
    %105 = vector.shape_cast %104 : vector<64x256xf32> to vector<8x8x256xf32>
    %c0_87 = arith.constant 0 : index
    %c0_88 = arith.constant 0 : index
    %c2_89 = arith.constant 2 : index
    %c0_90 = arith.constant 0 : index
    %c0_91 = arith.constant 0 : index
    %106 = vector.load %arg5[%c0_87, %c0_88, %c2_89, %c0_90, %c0_91] : memref<1x8x4x8x512xf32, #tpu.memory_space<vmem>>, vector<1x8x1x8x256xf32>
    %107 = vector.shape_cast %106 : vector<1x8x1x8x256xf32> to vector<8x8x256xf32>
    %108 = vector.shape_cast %105 : vector<8x8x256xf32> to vector<1x8x1x8x256xf32>
    tpu.vector_store %arg5[%c0_87, %c0_88, %c2_89, %c0_90, %c0_91], %108 {strides = array<i32>} : memref<1x8x4x8x512xf32, #tpu.memory_space<vmem>>, vector<1x8x1x8x256xf32>,
    %109 = vector.extract_strided_slice %103 {offsets = [0, 256], sizes = [64, 256], strides = [1, 1]} : vector<64x512xf32> to vector<64x256xf32>
    %110 = vector.shape_cast %109 : vector<64x256xf32> to vector<8x8x256xf32>
    %c0_92 = arith.constant 0 : index
    %c0_93 = arith.constant 0 : index
    %c3 = arith.constant 3 : index
    %c0_94 = arith.constant 0 : index
    %c0_95 = arith.constant 0 : index
    %111 = vector.load %arg5[%c0_92, %c0_93, %c3, %c0_94, %c0_95] : memref<1x8x4x8x512xf32, #tpu.memory_space<vmem>>, vector<1x8x1x8x256xf32>
    %112 = vector.shape_cast %111 : vector<1x8x1x8x256xf32> to vector<8x8x256xf32>
    %113 = vector.shape_cast %110 : vector<8x8x256xf32> to vector<1x8x1x8x256xf32>
    tpu.vector_store %arg5[%c0_92, %c0_93, %c3, %c0_94, %c0_95], %113 {strides = array<i32>} : memref<1x8x4x8x512xf32, #tpu.memory_space<vmem>>, vector<1x8x1x8x256xf32>,
    %c3_96 = arith.constant 3 : index
    %c0_97 = arith.constant 0 : index
    %c0_98 = arith.constant 0 : index
    %114 = vector.load %arg3[%c3_96, %c0_97, %c0_98] : memref<4x512x512xbf16, #tpu.memory_space<vmem>>, vector<1x512x512xbf16>
    %115 = vector.shape_cast %114 : vector<1x512x512xbf16> to vector<512x512xbf16>
    %c1_i32_99 = arith.constant 1 : i32
    %116 = arith.addi %1, %c1_i32_99 : i32
    %c0_i32_100 = arith.constant 0 : i32
    %117 = arith.addi %116, %c0_i32_100 : i32
    %c0_101 = arith.constant 0 : index
    %118 = arith.index_cast %117 : i32 to index
    %c1_102 = arith.constant 1 : index
    %c0_103 = arith.constant 0 : index
    %119 = vector.load %arg2[%c0_101, %118, %c1_102, %c0_103] : memref<1x10x10x128xbf16, #tpu.memory_space<vmem>>, vector<1x8x8x128xbf16>
    %120 = vector.shape_cast %119 : vector<1x8x8x128xbf16> to vector<8x8x128xbf16>
    %c1_i32_104 = arith.constant 1 : i32
    %121 = arith.addi %1, %c1_i32_104 : i32
    %c0_i32_105 = arith.constant 0 : i32
    %122 = arith.addi %121, %c0_i32_105 : i32
    %c0_106 = arith.constant 0 : index
    %123 = arith.index_cast %122 : i32 to index
    %c2_107 = arith.constant 2 : index
    %c0_108 = arith.constant 0 : index
    %124 = vector.load %arg2[%c0_106, %123, %c2_107, %c0_108] : memref<1x10x10x128xbf16, #tpu.memory_space<vmem>>, vector<1x8x8x128xbf16>
    %125 = vector.shape_cast %124 : vector<1x8x8x128xbf16> to vector<8x8x128xbf16>
    %c1_i32_109 = arith.constant 1 : i32
    %126 = arith.addi %1, %c1_i32_109 : i32
    %c1_i32_110 = arith.constant 1 : i32
    %127 = arith.addi %126, %c1_i32_110 : i32
    %c0_111 = arith.constant 0 : index
    %128 = arith.index_cast %127 : i32 to index
    %c1_112 = arith.constant 1 : index
    %c0_113 = arith.constant 0 : index
    %129 = vector.load %arg2[%c0_111, %128, %c1_112, %c0_113] : memref<1x10x10x128xbf16, #tpu.memory_space<vmem>>, vector<1x8x8x128xbf16>
    %130 = vector.shape_cast %129 : vector<1x8x8x128xbf16> to vector<8x8x128xbf16>
    %c1_i32_114 = arith.constant 1 : i32
    %131 = arith.addi %1, %c1_i32_114 : i32
    %c1_i32_115 = arith.constant 1 : i32
    %132 = arith.addi %131, %c1_i32_115 : i32
    %c0_116 = arith.constant 0 : index
    %133 = arith.index_cast %132 : i32 to index
    %c2_117 = arith.constant 2 : index
    %c0_118 = arith.constant 0 : index
    %134 = vector.load %arg2[%c0_116, %133, %c2_117, %c0_118] : memref<1x10x10x128xbf16, #tpu.memory_space<vmem>>, vector<1x8x8x128xbf16>
    %135 = vector.shape_cast %134 : vector<1x8x8x128xbf16> to vector<8x8x128xbf16>
    %136 = tpu.concatenate %120, %125, %130, %135 in 2 : vector<8x8x128xbf16>, vector<8x8x128xbf16>, vector<8x8x128xbf16>, vector<8x8x128xbf16> -> vector<8x8x512xbf16>
    %137 = vector.shape_cast %136 : vector<8x8x512xbf16> to vector<64x512xbf16>
    %cst_119 = arith.constant dense<0.000000e+00> : vector<64x512xf32>
    %138 = tpu.matmul %137, %115, %cst_119 {dimension_numbers = #tpu.dot_dimension_numbers<[1], [0], [0], [1], [0, 0, 1, 1], [], []>} : vector<64x512xbf16>, vector<512x512xbf16>, vector<64x512xf32> -> vector<64x512xf32>
    %139 = vector.broadcast %2 : vector<1x512xf32> to vector<64x512xf32>
    %140 = arith.addf %138, %139 : vector<64x512xf32>
    %141 = vector.extract_strided_slice %140 {offsets = [0, 0], sizes = [64, 256], strides = [1, 1]} : vector<64x512xf32> to vector<64x256xf32>
    %142 = vector.shape_cast %141 : vector<64x256xf32> to vector<8x8x256xf32>
    %c0_120 = arith.constant 0 : index
    %c0_121 = arith.constant 0 : index
    %c2_122 = arith.constant 2 : index
    %c0_123 = arith.constant 0 : index
    %c256_124 = arith.constant 256 : index
    %143 = vector.load %arg5[%c0_120, %c0_121, %c2_122, %c0_123, %c256_124] : memref<1x8x4x8x512xf32, #tpu.memory_space<vmem>>, vector<1x8x1x8x256xf32>
    %144 = vector.shape_cast %143 : vector<1x8x1x8x256xf32> to vector<8x8x256xf32>
    %145 = vector.shape_cast %142 : vector<8x8x256xf32> to vector<1x8x1x8x256xf32>
    tpu.vector_store %arg5[%c0_120, %c0_121, %c2_122, %c0_123, %c256_124], %145 {strides = array<i32>} : memref<1x8x4x8x512xf32, #tpu.memory_space<vmem>>, vector<1x8x1x8x256xf32>,
    %146 = vector.extract_strided_slice %140 {offsets = [0, 256], sizes = [64, 256], strides = [1, 1]} : vector<64x512xf32> to vector<64x256xf32>
    %147 = vector.shape_cast %146 : vector<64x256xf32> to vector<8x8x256xf32>
    %c0_125 = arith.constant 0 : index
    %c0_126 = arith.constant 0 : index
    %c3_127 = arith.constant 3 : index
    %c0_128 = arith.constant 0 : index
    %c256_129 = arith.constant 256 : index
    %148 = vector.load %arg5[%c0_125, %c0_126, %c3_127, %c0_128, %c256_129] : memref<1x8x4x8x512xf32, #tpu.memory_space<vmem>>, vector<1x8x1x8x256xf32>
    %149 = vector.shape_cast %148 : vector<1x8x1x8x256xf32> to vector<8x8x256xf32>
    %150 = vector.shape_cast %147 : vector<8x8x256xf32> to vector<1x8x1x8x256xf32>
    tpu.vector_store %arg5[%c0_125, %c0_126, %c3_127, %c0_128, %c256_129], %150 {strides = array<i32>} : memref<1x8x4x8x512xf32, #tpu.memory_space<vmem>>, vector<1x8x1x8x256xf32>,
    return
  }
  func.func @transform_0(%arg0: i32, %arg1: i32) -> (i32, i32, i32, i32) {
    %c0_i32 = arith.constant 0 : i32
    %c0_i32_0 = arith.constant 0 : i32
    %c0_i32_1 = arith.constant 0 : i32
    %c0_i32_2 = arith.constant 0 : i32
    return %arg0, %c0_i32, %c0_i32_0, %c0_i32_1 : i32, i32, i32, i32
  }
  func.func @transform_1(%arg0: i32, %arg1: i32) -> (i32, i32, i32) {
    %c0_i32 = arith.constant 0 : i32
    %c0_i32_0 = arith.constant 0 : i32
    %c0_i32_1 = arith.constant 0 : i32
    %c0_i32_2 = arith.constant 0 : i32
    return %c0_i32, %c0_i32_0, %c0_i32_1 : i32, i32, i32
  }
  func.func @transform_2(%arg0: i32, %arg1: i32) -> (i32, i32) {
    %c0_i32 = arith.constant 0 : i32
    %c0_i32_0 = arith.constant 0 : i32
    %c0_i32_1 = arith.constant 0 : i32
    return %c0_i32, %c0_i32_0 : i32, i32
  }
  func.func @transform_3(%arg0: i32, %arg1: i32) -> (i32, i32, i32, i32, i32) {
    %c0_i32 = arith.constant 0 : i32
    %c0_i32_0 = arith.constant 0 : i32
    %c0_i32_1 = arith.constant 0 : i32
    %c0_i32_2 = arith.constant 0 : i32
    return %arg0, %arg1, %c0_i32, %c0_i32_0, %c0_i32_1 : i32, i32, i32, i32, i32
  }
}

</mosaic_0001>

<llo_original>
// kernel: tile.8
$region0: #{tile.8}
  #allocation0 [shape = 's32[1]{0}', space=sflag, size = 0x4, scoped, tag = 'scoped memory for tile.8']
  %s0 = inlined_call_operand.vmem [shape: f32[128], index: 0, kind: input, shape index: {}]
  %s1 = inlined_call_operand.vmem [shape: f32[4,128], index: 1, kind: output, shape index: {}]
  // Predicated region
  $region2: #{tile.8} parent=0 // pred_check
    _
  $region3: #{tile.8} parent=0 // pred_check_branch
    %3 = sbr.rel (0) target = $region5
  $region4: #{tile.8} parent=0 // pred_region
    _
  $region5: #{tile.8} parent=0 // pred_fallthru
    _
  %v4 = vld [vmem:[%s0] ss:$0 sm:$0xff]
  %5 = vst [vmem:[%s1] sm:$0xf] %v4

// kernel: model_forward.2
$region0: #{model_forward.2}
  #allocation0 [shape = 'u32[]', space=smem, size = 0x4, offset = 0x4, fixed_abs, tag = 'smem constant byte address 0x4 - core index']
  #allocation1 [shape = 'u32[144,128]{1,0:T(1,128)}', space=vmem, size = 0x12000, scoped, tag = 'internal scratch']
  %s0 = inlined_call_operand.vmem [shape: bf16[128,64], index: 0, kind: input, shape index: {}]
  %s1 = inlined_call_operand.vmem [shape: bf16[64,128], index: 1, kind: input, shape index: {}]
  %s2 = inlined_call_operand.vmem [shape: f32[1,128], index: 2, kind: input, shape index: {}]
  %s3 = inlined_call_operand.vmem [shape: bf16[128,128], index: 3, kind: output, shape index: {}]
  %s4 = sld [smem:[#allocation0]]
  $region22: #{model_forward.2} parent=0
    _
  %s6 = ssub.s32 1, %s4
  %s7 = scalar_select 0, %s6, %s4
  // Predicated region
  $region2: #{model_forward.2} parent=0 // pred_check
    _
  $region3: #{model_forward.2} parent=0 // pred_check_branch
    %9 = sbr.rel (0) target = $region5
  $region4: #{model_forward.2} parent=0 // pred_region
    _
  $region5: #{model_forward.2} parent=0 // pred_fallthru
    _
  // Predicated region
  $region6: #{model_forward.2} parent=0 // pred_check
    _
  $region7: #{model_forward.2} parent=0 // pred_check_branch
    %11 = sbr.rel (0) target = $region9
  $region8: #{model_forward.2} parent=0 // pred_region
    _
  $region9: #{model_forward.2} parent=0 // pred_fallthru
    _
  // Predicated region
  $region10: #{model_forward.2} parent=0 // pred_check
    _
  $region11: #{model_forward.2} parent=0 // pred_check_branch
    %13 = sbr.rel (0) target = $region13
  $region12: #{model_forward.2} parent=0 // pred_region
    _
  $region13: #{model_forward.2} parent=0 // pred_fallthru
    _
  %v15 = vld [vmem:[%s0] sm:$0xf]
  %v16 = vld [vmem:[%s0 + $0x4] sm:$0xf]
  %v17 = vld [vmem:[%s0 + $0x8] sm:$0xf]
  %v18 = vld [vmem:[%s0 + $0xc] sm:$0xf]
  %v19 = vld [vmem:[%s0 + $0x10] sm:$0xf]
  %v20 = vld [vmem:[%s0 + $0x14] sm:$0xf]
  %v21 = vld [vmem:[%s0 + $0x18] sm:$0xf]
  %v22 = vld [vmem:[%s0 + $0x1c] sm:$0xf]
  %v23 = vld [vmem:[%s0 + $0x20] sm:$0xf]
  %v24 = vld [vmem:[%s0 + $0x24] sm:$0xf]
  %v25 = vld [vmem:[%s0 + $0x28] sm:$0xf]
  %v26 = vld [vmem:[%s0 + $0x2c] sm:$0xf]
  %v27 = vld [vmem:[%s0 + $0x30] sm:$0xf]
  %v28 = vld [vmem:[%s0 + $0x34] sm:$0xf]
  %v29 = vld [vmem:[%s0 + $0x38] sm:$0xf]
  %v30 = vld [vmem:[%s0 + $0x3c] sm:$0xf]
  %v31 = vld [vmem:[%s1] sm:$0xf]
  %v32 = vld [vmem:[%s1 + $0x4] sm:$0xf]
  %v33 = vld [vmem:[%s1 + $0x8] sm:$0xf]
  %v34 = vld [vmem:[%s1 + $0xc] sm:$0xf]
  %v35 = vld [vmem:[%s1 + $0x10] sm:$0xf]
  %v36 = vld [vmem:[%s1 + $0x14] sm:$0xf]
  %v37 = vld [vmem:[%s1 + $0x18] sm:$0xf]
  %v38 = vld [vmem:[%s1 + $0x1c] sm:$0xf]
  %v39 = vld [vmem:[%s2] sm:$0x1]
  %v41 = vlaneseq
  %v42 = vshrl.u32 %v41, 7
  %v43 = vsub.s32 0, %v42
  %v44 = vrot.slane %v39, %v43
  %v62 = vunpack.c.l.b16 %v15
  %v63 = vunpack.c.l.b16 %v16
  %v64 = vunpack.c.l.b16 %v17
  %v65 = vunpack.c.l.b16 %v18
  %v66 = vunpack.c.l.b16 %v19
  %v67 = vunpack.c.l.b16 %v20
  %v68 = vunpack.c.l.b16 %v21
  %v69 = vunpack.c.l.b16 %v22
  %v70 = vunpack.c.l.b16 %v23
  %v71 = vunpack.c.l.b16 %v24
  %v72 = vunpack.c.l.b16 %v25
  %v73 = vunpack.c.l.b16 %v26
  %v74 = vunpack.c.l.b16 %v27
  %v75 = vunpack.c.l.b16 %v28
  %v76 = vunpack.c.l.b16 %v29
  %v77 = vunpack.c.l.b16 %v30
  %v78 = vpack.c.b16 %v63, %v62
  %v79 = vpack.c.b16 %v65, %v64
  %v80 = vpack.c.b16 %v67, %v66
  %v81 = vpack.c.b16 %v69, %v68
  %v82 = vpack.c.b16 %v71, %v70
  %v83 = vpack.c.b16 %v73, %v72
  %v84 = vpack.c.b16 %v75, %v74
  %v85 = vpack.c.b16 %v77, %v76
  %v94 = vunpack.c.l.b16 %v31
  %v95 = vunpack.c.l.b16 %v32
  %v96 = vunpack.c.l.b16 %v33
  %v97 = vunpack.c.l.b16 %v34
  %v98 = vunpack.c.l.b16 %v35
  %v99 = vunpack.c.l.b16 %v36
  %v100 = vunpack.c.l.b16 %v37
  %v101 = vunpack.c.l.b16 %v38
  %v102 = vpack.c.b16 %v95, %v94
  %v103 = vpack.c.b16 %v97, %v96
  %v104 = vpack.c.b16 %v99, %v98
  %v105 = vpack.c.b16 %v101, %v100
  %vm110 = vcmask 523264
  %v112 = vsel %vm110, %v78, 0
  %v115 = vsel %vm110, %v79, 0
  %v118 = vsel %vm110, %v80, 0
  %v121 = vsel %vm110, %v81, 0
  %v124 = vsel %vm110, %v82, 0
  %v127 = vsel %vm110, %v83, 0
  %v130 = vsel %vm110, %v84, 0
  %v133 = vsel %vm110, %v85, 0
  %135 = vmatprep.subr.bf16.mxu0 0
  %136 = vmatpush1.bf16.msra.mxu0 %v102
  %137 = vmatprep.subr.bf16.mxu0 0
  %138 = vmatpush1.bf16.msra.mxu0 %v103
  %139 = vmatprep.subr.bf16.mxu0 0
  %140 = vmatpush1.bf16.msra.mxu0 %v104
  %141 = vmatprep.subr.bf16.mxu0 0
  %142 = vmatpush1.bf16.msra.mxu0 %v105
  %143 = vmatprep.subr.bf16.mxu0 0
  %144 = vmatpush1.bf16.msra.mxu0 0
  %145 = vmatprep.subr.bf16.mxu0 0
  %146 = vmatpush1.bf16.msra.mxu0 0
  %147 = vmatprep.subr.bf16.mxu0 0
  %148 = vmatpush1.bf16.msra.mxu0 0
  %149 = vmatprep.subr.bf16.mxu0 0
  %150 = vmatpush1.bf16.msra.mxu0 0
  %151 = vmatprep.subr.bf16.mxu0 0
  %152 = vmatpush1.bf16.msra.mxu0 0
  %153 = vmatprep.subr.bf16.mxu0 0
  %154 = vmatpush1.bf16.msra.mxu0 0
  %155 = vmatprep.subr.bf16.mxu0 0
  %156 = vmatpush1.bf16.msra.mxu0 0
  %157 = vmatprep.subr.bf16.mxu0 0
  %158 = vmatpush1.bf16.msra.mxu0 0
  %159 = vmatprep.subr.bf16.mxu0 0
  %160 = vmatpush1.bf16.msra.mxu0 0
  %161 = vmatprep.subr.bf16.mxu0 0
  %162 = vmatpush1.bf16.msra.mxu0 0
  %163 = vmatprep.subr.bf16.mxu0 0
  %164 = vmatpush1.bf16.msra.mxu0 0
  %165 = vmatprep.subr.bf16.mxu0 0
  %166 = vmatpush1.bf16.msra.mxu0 0
  %167 = vmatprep.mubr.bf16.mxu0 0
  %168 = vmatmul.mubr.bf16.gmra.mrb[0].mxu0 %v112
  %v169 = vpop.f32.mrb[0].mxu0
  %v170 = vadd.f32 %v44, %v169
  %v171 = vpop.f32.mrb[0].mxu0
  %v172 = vpop.f32.mrb[0].mxu0
  %v173 = vadd.f32 %v44, %v172
  %v174 = vpop.f32.mrb[0].mxu0
  %175 = vmatprep.mubr.bf16.mxu0 0
  %176 = vmatmul.mubr.bf16.gmra.mrb[0].mxu0 %v115
  %v177 = vpop.f32.mrb[0].mxu0
  %v178 = vadd.f32 %v44, %v177
  %v179 = vpop.f32.mrb[0].mxu0
  %v180 = vpop.f32.mrb[0].mxu0
  %v181 = vadd.f32 %v44, %v180
  %v182 = vpop.f32.mrb[0].mxu0
  %183 = vmatprep.mubr.bf16.mxu0 0
  %184 = vmatmul.mubr.bf16.gmra.mrb[0].mxu0 %v118
  %v185 = vpop.f32.mrb[0].mxu0
  %v186 = vadd.f32 %v44, %v185
  %v187 = vpop.f32.mrb[0].mxu0
  %v188 = vpop.f32.mrb[0].mxu0
  %v189 = vadd.f32 %v44, %v188
  %v190 = vpop.f32.mrb[0].mxu0
  %191 = vmatprep.mubr.bf16.mxu0 0
  %192 = vmatmul.mubr.bf16.gmra.mrb[0].mxu0 %v121
  %v193 = vpop.f32.mrb[0].mxu0
  %v194 = vadd.f32 %v44, %v193
  %v195 = vpop.f32.mrb[0].mxu0
  %v196 = vpop.f32.mrb[0].mxu0
  %v197 = vadd.f32 %v44, %v196
  %v198 = vpop.f32.mrb[0].mxu0
  %199 = vmatprep.mubr.bf16.mxu0 0
  %200 = vmatmul.mubr.bf16.gmra.mrb[0].mxu0 %v124
  %v201 = vpop.f32.mrb[0].mxu0
  %v202 = vadd.f32 %v44, %v201
  %v203 = vpop.f32.mrb[0].mxu0
  %v204 = vpop.f32.mrb[0].mxu0
  %v205 = vadd.f32 %v44, %v204
  %v206 = vpop.f32.mrb[0].mxu0
  %207 = vmatprep.mubr.bf16.mxu0 0
  %208 = vmatmul.mubr.bf16.gmra.mrb[0].mxu0 %v127
  %v209 = vpop.f32.mrb[0].mxu0
  %v210 = vadd.f32 %v44, %v209
  %v211 = vpop.f32.mrb[0].mxu0
  %v212 = vpop.f32.mrb[0].mxu0
  %v213 = vadd.f32 %v44, %v212
  %v214 = vpop.f32.mrb[0].mxu0
  %215 = vmatprep.mubr.bf16.mxu0 0
  %216 = vmatmul.mubr.bf16.gmra.mrb[0].mxu0 %v130
  %v217 = vpop.f32.mrb[0].mxu0
  %v218 = vadd.f32 %v44, %v217
  %v219 = vpop.f32.mrb[0].mxu0
  %v220 = vpop.f32.mrb[0].mxu0
  %v221 = vadd.f32 %v44, %v220
  %v222 = vpop.f32.mrb[0].mxu0
  %223 = vmatprep.mubr.bf16.mxu0 0
  %224 = vmatmul.mubr.bf16.gmra.mrb[0].mxu0 %v133
  %v225 = vpop.f32.mrb[0].mxu0
  %v226 = vadd.f32 %v44, %v225
  %v227 = vpop.f32.mrb[0].mxu0
  %v228 = vpop.f32.mrb[0].mxu0
  %v229 = vadd.f32 %v44, %v228
  %v230 = vpop.f32.mrb[0].mxu0
  %231 = vdwg.mxu0
  %v232 = vmax.f32 %v170, 0.0
  %v233 = vmax.f32 %v173, 0.0
  %v234 = vmax.f32 %v178, 0.0
  %v235 = vmax.f32 %v181, 0.0
  %v236 = vmax.f32 %v186, 0.0
  %v237 = vmax.f32 %v189, 0.0
  %v238 = vmax.f32 %v194, 0.0
  %v239 = vmax.f32 %v197, 0.0
  %v240 = vmax.f32 %v202, 0.0
  %v241 = vmax.f32 %v205, 0.0
  %v242 = vmax.f32 %v210, 0.0
  %v243 = vmax.f32 %v213, 0.0
  %v244 = vmax.f32 %v218, 0.0
  %v245 = vmax.f32 %v221, 0.0
  %v246 = vmax.f32 %v226, 0.0
  %v247 = vmax.f32 %v229, 0.0
  %v248 = vpack.c.bf16 %v233, %v232
  %v249 = vpack.c.bf16 %v235, %v234
  %v250 = vpack.c.bf16 %v237, %v236
  %v251 = vpack.c.bf16 %v239, %v238
  %v252 = vpack.c.bf16 %v241, %v240
  %v253 = vpack.c.bf16 %v243, %v242
  %v254 = vpack.c.bf16 %v245, %v244
  %v255 = vpack.c.bf16 %v247, %v246
  %v264 = vunpack.c.l.b16 %v248
  %v265 = vunpack.c.h.b16 %v248
  %v266 = vunpack.c.l.b16 %v249
  %v267 = vunpack.c.h.b16 %v249
  %v268 = vunpack.c.l.b16 %v250
  %v269 = vunpack.c.h.b16 %v250
  %v270 = vunpack.c.l.b16 %v251
  %v271 = vunpack.c.h.b16 %v251
  %v272 = vunpack.c.l.b16 %v252
  %v273 = vunpack.c.h.b16 %v252
  %v274 = vunpack.c.l.b16 %v253
  %v275 = vunpack.c.h.b16 %v253
  %v276 = vunpack.c.l.b16 %v254
  %v277 = vunpack.c.h.b16 %v254
  %v278 = vunpack.c.l.b16 %v255
  %v279 = vunpack.c.h.b16 %v255
  %v280 = vpack.c.b16 %v264, %v264
  %v281 = vpack.c.b16 %v265, %v265
  %v282 = vpack.c.b16 %v266, %v266
  %v283 = vpack.c.b16 %v267, %v267
  %v284 = vpack.c.b16 %v268, %v268
  %v285 = vpack.c.b16 %v269, %v269
  %v286 = vpack.c.b16 %v270, %v270
  %v287 = vpack.c.b16 %v271, %v271
  %v288 = vpack.c.b16 %v272, %v272
  %v289 = vpack.c.b16 %v273, %v273
  %v290 = vpack.c.b16 %v274, %v274
  %v291 = vpack.c.b16 %v275, %v275
  %v292 = vpack.c.b16 %v276, %v276
  %v293 = vpack.c.b16 %v277, %v277
  %v294 = vpack.c.b16 %v278, %v278
  %v295 = vpack.c.b16 %v279, %v279
  %312 = vst [vmem:[%s3] sm:$0xf] %v280
  %313 = vst [vmem:[%s3 + $0x4] sm:$0xf] %v281
  %314 = vst [vmem:[%s3 + $0x8] sm:$0xf] %v282
  %315 = vst [vmem:[%s3 + $0xc] sm:$0xf] %v283
  %316 = vst [vmem:[%s3 + $0x10] sm:$0xf] %v284
  %317 = vst [vmem:[%s3 + $0x14] sm:$0xf] %v285
  %318 = vst [vmem:[%s3 + $0x18] sm:$0xf] %v286
  %319 = vst [vmem:[%s3 + $0x1c] sm:$0xf] %v287
  %320 = vst [vmem:[%s3 + $0x20] sm:$0xf] %v288
  %321 = vst [vmem:[%s3 + $0x24] sm:$0xf] %v289
  %322 = vst [vmem:[%s3 + $0x28] sm:$0xf] %v290
  %323 = vst [vmem:[%s3 + $0x2c] sm:$0xf] %v291
  %324 = vst [vmem:[%s3 + $0x30] sm:$0xf] %v292
  %325 = vst [vmem:[%s3 + $0x34] sm:$0xf] %v293
  %326 = vst [vmem:[%s3 + $0x38] sm:$0xf] %v294
  %327 = vst [vmem:[%s3 + $0x3c] sm:$0xf] %v295
  // Predicated region
  $region14: #{model_forward.2} parent=0 // pred_check
    _
  $region15: #{model_forward.2} parent=0 // pred_check_branch
    %329 = sbr.rel (0) target = $region17
  $region16: #{model_forward.2} parent=0 // pred_region
    _
  $region17: #{model_forward.2} parent=0 // pred_fallthru
    _
  // Predicated region
  $region18: #{model_forward.2} parent=0 // pred_check
    _
  $region19: #{model_forward.2} parent=0 // pred_check_branch
    %331 = sbr.rel (0) target = $region21
  $region20: #{model_forward.2} parent=0 // pred_region
    _
  $region21: #{model_forward.2} parent=0 // pred_fallthru
    _

// kernel: model_forward.3
$region0: #{model_forward.3}
  #allocation0 [shape = 'u32[]', space=smem, size = 0x4, offset = 0x4, fixed_abs, tag = 'smem constant byte address 0x4 - core index']
  #allocation1 [shape = 'u32[144,128]{1,0:T(1,128)}', space=vmem, size = 0x12000, scoped, tag = 'internal scratch']
  %s0 = inlined_call_operand.vmem [shape: bf16[2,10,10,128], index: 0, kind: input, shape index: {}]
  %s1 = inlined_call_operand.vmem [shape: bf16[4,512,512], index: 1, kind: input, shape index: {}]
  %s2 = inlined_call_operand.vmem [shape: f32[1,512], index: 2, kind: input, shape index: {}]
  %s3 = inlined_call_operand.vmem [shape: f32[2,8,4,8,512], index: 3, kind: output, shape index: {}]
  %s4 = sld [smem:[#allocation0]]
  $region45: #{model_forward.3} parent=0
    _
  %s6 = ssub.s32 1, %s4
  %s7 = scalar_select 0, %s6, %s4
  loop: start=0, step=1, limit=4
  $region2: #{model_forward.3} parent=0 // loop_pre_header
    _
  $region3: #{model_forward.3} parent=0 // loop_header
    %s9 = sphi 0, %s13
    %p10 = scmp.ge.s32.totalorder %s9, 4
    %s16 = sphi 0, %s28
    %s17 = sphi 0, %s24
    %s18 = sphi 0, %s16
    %s19 = sphi 0, %s17
    %s20 = sphi 0, %s18
    %s21 = sphi 0, %s19
    %s31 = sphi 0, %s33
    %s34 = sphi 0, %s31
    %s35 = sphi 0, %s34
    %s51 = sphi 0, %s35
    %s55 = sphi 0, %s55
    %s57 = sphi 0, %s55
    %s58 = sphi 0, %s57
    %s72 = sphi 0, %s58
    %s76 = sphi 0, %s76
    %s78 = sphi 0, %s76
    %s79 = sphi 0, %s78
    %s93 = sphi 0, %s79
    %s101 = sphi 0, %s103
    %s104 = sphi 0, %s101
    %s105 = sphi 0, %s104
    %s121 = sphi 0, %s105
  $region4: #{model_forward.3} parent=0 // loop_header_branch
    %12 = sbr.rel (%p10) target = $region8
  $region5: #{model_forward.3} parent=0 // loop_body
    %s14 = ssub.s32 %s9, 1
    %s15 = ssub.s32 %s9, 2
    %s22 = sadd.s32 1, %s17
    %p23 = scmp.ge.s32.totalorder %s22, 1
    %s24 = scalar_select %p23, 0, %s22
    %s25 = sadd.s32 1, %s16
    %s26 = scalar_select %p23, %s25, %s16
    %p27 = scmp.ge.s32.totalorder %s26, 2
    %s28 = scalar_select %p27, 0, %s26
    %s29 = ssub.s32 %s16, %s28
    %p30 = scmp.eq.s32.totalorder %s29, 0
    %s32 = sadd.s32 %s31, 1
    %s33 = scalar_select %p30, %s31, %s32
    %p36 = pneg %p30
    %p37 = scmp.eq.s32.totalorder %s9, 1
    %p38 = por %p36, %p37
    %p39 = scmp.ne.s32.totalorder %s31, %s34
    %p40 = scmp.eq.s32.totalorder %s9, 0
    %p41 = por %p39, %p40
    %p42 = scmp.ne.s32.totalorder %s31, %s34
    %p43 = scmp.eq.s32.totalorder %s14, 1
    %p44 = por %p42, %p43
    %p45 = scmp.ne.s32.totalorder %s34, %s35
    %p46 = scmp.eq.s32.totalorder %s14, 0
    %p47 = por %p45, %p46
    %p48 = scmp.ne.s32.totalorder %s34, %s35
    %p49 = scmp.eq.s32.totalorder %s15, 1
    %p50 = por %p48, %p49
    %p52 = scmp.ne.s32.totalorder %s35, %s51
    %p53 = scmp.eq.s32.totalorder %s15, 0
    %p54 = por %p52, %p53
    %s56 = sadd.s32 %s55, 1
    %p59 = scmp.eq.s32.totalorder %s9, 1
    %p60 = scmp.ne.s32.totalorder %s55, %s57
    %p61 = scmp.eq.s32.totalorder %s9, 0
    %p62 = por %p60, %p61
    %p63 = scmp.ne.s32.totalorder %s55, %s57
    %p64 = scmp.eq.s32.totalorder %s14, 1
    %p65 = por %p63, %p64
    %p66 = scmp.ne.s32.totalorder %s57, %s58
    %p67 = scmp.eq.s32.totalorder %s14, 0
    %p68 = por %p66, %p67
    %p69 = scmp.ne.s32.totalorder %s57, %s58
    %p70 = scmp.eq.s32.totalorder %s15, 1
    %p71 = por %p69, %p70
    %p73 = scmp.ne.s32.totalorder %s58, %s72
    %p74 = scmp.eq.s32.totalorder %s15, 0
    %p75 = por %p73, %p74
    %s77 = sadd.s32 %s76, 1
    %p80 = scmp.eq.s32.totalorder %s9, 1
    %p81 = scmp.ne.s32.totalorder %s76, %s78
    %p82 = scmp.eq.s32.totalorder %s9, 0
    %p83 = por %p81, %p82
    %p84 = scmp.ne.s32.totalorder %s76, %s78
    %p85 = scmp.eq.s32.totalorder %s14, 1
    %p86 = por %p84, %p85
    %p87 = scmp.ne.s32.totalorder %s78, %s79
    %p88 = scmp.eq.s32.totalorder %s14, 0
    %p89 = por %p87, %p88
    %p90 = scmp.ne.s32.totalorder %s78, %s79
    %p91 = scmp.eq.s32.totalorder %s15, 1
    %p92 = por %p90, %p91
    %p94 = scmp.ne.s32.totalorder %s79, %s93
    %p95 = scmp.eq.s32.totalorder %s15, 0
    %p96 = por %p94, %p95
    %s97 = ssub.s32 %s16, %s28
    %s98 = ssub.s32 %s17, %s24
    %s99 = sor.u32 %s97, %s98
    %p100 = scmp.eq.s32.totalorder %s99, 0
    %s102 = sadd.s32 %s101, 1
    %s103 = scalar_select %p100, %s101, %s102
    %p106 = pneg %p100
    %p107 = scmp.eq.s32.totalorder %s9, 1
    %p108 = por %p106, %p107
    %p109 = scmp.ne.s32.totalorder %s101, %s104
    %p110 = scmp.eq.s32.totalorder %s9, 0
    %p111 = por %p109, %p110
    %p112 = scmp.ne.s32.totalorder %s101, %s104
    %p113 = scmp.eq.s32.totalorder %s14, 1
    %p114 = por %p112, %p113
    %p115 = scmp.ne.s32.totalorder %s104, %s105
    %p116 = scmp.eq.s32.totalorder %s14, 0
    %p117 = por %p115, %p116
    %p118 = scmp.ne.s32.totalorder %s104, %s105
    %p119 = scmp.eq.s32.totalorder %s15, 1
    %p120 = por %p118, %p119
    %p122 = scmp.ne.s32.totalorder %s105, %s121
    %p123 = scmp.eq.s32.totalorder %s15, 0
    %p124 = por %p122, %p123
    %p125 = scmp.le.s32.totalorder 1, %s9
    %p126 = scmp.lt.s32.totalorder %s9, 3
    %p127 = pnand %p125, %p126
    %p128 = pneg %p127
    // Predicated region
    $region9: #{model_forward.3} parent=5 // pred_check
      _
    $region10: #{model_forward.3} parent=5 // pred_check_branch
      %130 = sbr.rel (%p127) target = $region12
    $region11: #{model_forward.3} parent=5 // pred_region
      %s131 = ssub.s32 %s9, 1
      // Predicated region
      $region13: #{model_forward.3} parent=11 // pred_check
        %p132 = pneg %p68
      $region14: #{model_forward.3} parent=11 // pred_check_branch
        %134 = sbr.rel (%p132) target = $region16
      $region15: #{model_forward.3} parent=11 // pred_region
        _
      $region16: #{model_forward.3} parent=11 // pred_fallthru
        _
      // Predicated region
      $region17: #{model_forward.3} parent=11 // pred_check
        %p135 = pneg %p89
      $region18: #{model_forward.3} parent=11 // pred_check_branch
        %137 = sbr.rel (%p135) target = $region20
      $region19: #{model_forward.3} parent=11 // pred_region
        _
      $region20: #{model_forward.3} parent=11 // pred_fallthru
        _
    $region12: #{model_forward.3} parent=5 // pred_fallthru
      _
    %p138 = scmp.lt.s32.totalorder %s9, 2
    // Predicated region
    $region21: #{model_forward.3} parent=5 // pred_check
      %p139 = pneg %p138
    $region22: #{model_forward.3} parent=5 // pred_check_branch
      %141 = sbr.rel (%p139) target = $region24
    $region23: #{model_forward.3} parent=5 // pred_region
      // Predicated region
      $region25: #{model_forward.3} parent=23 // pred_check
        %p142 = pneg %p41
      $region26: #{model_forward.3} parent=23 // pred_check_branch
        %144 = sbr.rel (%p142) target = $region28
      $region27: #{model_forward.3} parent=23 // pred_region
        %p145 = scmp.lt.s32.totalorder %s16, 1
        %s146 = scalar_select %p145, %s16, 1
        %s147 = smul.addr %s146, 20
        %s148 = smul.addr %s147, 4
        %s149 = scalar_lea.vmem %s0, %s148
      $region28: #{model_forward.3} parent=23 // pred_fallthru
        _
    $region24: #{model_forward.3} parent=5 // pred_fallthru
      _
    %p150 = scmp.le.s32.totalorder 1, %s9
    %p151 = scmp.lt.s32.totalorder %s9, 3
    %p152 = pnand %p150, %p151
    %p153 = pneg %p152
    // Predicated region
    $region29: #{model_forward.3} parent=5 // pred_check
      _
    $region30: #{model_forward.3} parent=5 // pred_check_branch
      %155 = sbr.rel (%p152) target = $region32
    $region31: #{model_forward.3} parent=5 // pred_region
      %s156 = ssub.s32 %s9, 1
      %p157 = scmp.lt.s32.totalorder %s18, 1
      %s158 = scalar_select %p157, %s18, 1
      %s159 = smul.addr %s158, 20
      %s160 = smul.addr %s159, 4
      %s161 = scalar_lea.vmem %s0, %s160
      %p162 = pneg %p47
      %p163 = pneg %p44
      %p164 = pneg %p68
      %p165 = pneg %p65
      %p166 = pneg %p89
      %p167 = pneg %p86
      %p168 = pneg %p117
      %p169 = pneg %p114
      %s170 = smul.u32 8, %s19
      %p171 = scmp.lt.s32.totalorder %s18, 1
      %s172 = scalar_select %p171, %s18, 1
      %p173 = scmp.lt.s32.totalorder %s170, 7
      %s174 = scalar_select %p173, %s170, 7
      %s175 = smul.addr %s174, 16
      %s176 = smul.addr %s172, 128
      %s177 = sadd.s32 %s175, %s176
      %s178 = smul.addr %s177, 8
      %s179 = scalar_lea.vmem %s3, %s178
      %p180 = scmp.lt.s32.totalorder %s18, 1
      %s181 = scalar_select %p180, %s18, 1
      %s182 = smul.addr %s181, 20
      %s183 = smul.addr %s182, 4
      %s184 = scalar_lea.vmem %s0, %s183
      %s185 = smul.u32 8, %s19
      %p186 = scmp.lt.s32.totalorder %s18, 1
      %s187 = scalar_select %p186, %s18, 1
      %p188 = scmp.lt.s32.totalorder %s185, 7
      %s189 = scalar_select %p188, %s185, 7
      %s190 = smul.addr %s189, 16
      %s191 = smul.addr %s187, 128
      %s192 = sadd.s32 %s190, %s191
      %s193 = smul.addr %s192, 8
      %s194 = scalar_lea.vmem %s3, %s193
      %s195 = smul.u32 8, %s19
      %s196 = smul.u32 %s19, 8
      %v197 = vld [vmem:[%s2] sm:$0xf]
      %v198 = vld [vmem:[%s1] sm:$0xff]
      %v199 = vld [vmem:[%s1 + $0x8] sm:$0xff]
      %v200 = vld [vmem:[%s1 + $0x10] sm:$0xff]
      %v201 = vld [vmem:[%s1 + $0x18] sm:$0xff]
      %v202 = vld [vmem:[%s1 + $0x20] sm:$0xff]
      %v203 = vld [vmem:[%s1 + $0x28] sm:$0xff]
      %v204 = vld [vmem:[%s1 + $0x30] sm:$0xff]
      %v205 = vld [vmem:[%s1 + $0x38] sm:$0xff]
      %v206 = vld [vmem:[%s1 + $0x40] sm:$0xff]
      %v207 = vld [vmem:[%s1 + $0x48] sm:$0xff]
      %v208 = vld [vmem:[%s1 + $0x50] sm:$0xff]
      %v209 = vld [vmem:[%s1 + $0x58] sm:$0xff]
      %v210 = vld [vmem:[%s1 + $0x60] sm:$0xff]
      %v211 = vld [vmem:[%s1 + $0x68] sm:$0xff]
      %v212 = vld [vmem:[%s1 + $0x70] sm:$0xff]
      %v213 = vld [vmem:[%s1 + $0x78] sm:$0xff]
      %v214 = vld [vmem:[%s1 + $0x80] sm:$0xff]
      %v215 = vld [vmem:[%s1 + $0x88] sm:$0xff]
      %v216 = vld [vmem:[%s1 + $0x90] sm:$0xff]
      %v217 = vld [vmem:[%s1 + $0x98] sm:$0xff]
      %v218 = vld [vmem:[%s1 + $0xa0] sm:$0xff]
      %v219 = vld [vmem:[%s1 + $0xa8] sm:$0xff]
      %v220 = vld [vmem:[%s1 + $0xb0] sm:$0xff]
      %v221 = vld [vmem:[%s1 + $0xb8] sm:$0xff]
      %v222 = vld [vmem:[%s1 + $0xc0] sm:$0xff]
      %v223 = vld [vmem:[%s1 + $0xc8] sm:$0xff]
      %v224 = vld [vmem:[%s1 + $0xd0] sm:$0xff]
      %v225 = vld [vmem:[%s1 + $0xd8] sm:$0xff]
      %v226 = vld [vmem:[%s1 + $0xe0] sm:$0xff]
      %v227 = vld [vmem:[%s1 + $0xe8] sm:$0xff]
      %v228 = vld [vmem:[%s1 + $0xf0] sm:$0xff]
      %v229 = vld [vmem:[%s1 + $0xf8] sm:$0xff]
      %v230 = vld [vmem:[%s1 + $0x100] sm:$0xff]
      %v231 = vld [vmem:[%s1 + $0x108] sm:$0xff]
      %v232 = vld [vmem:[%s1 + $0x110] sm:$0xff]
      %v233 = vld [vmem:[%s1 + $0x118] sm:$0xff]
      %v234 = vld [vmem:[%s1 + $0x120] sm:$0xff]
      %v235 = vld [vmem:[%s1 + $0x128] sm:$0xff]
      %v236 = vld [vmem:[%s1 + $0x130] sm:$0xff]
      %v237 = vld [vmem:[%s1 + $0x138] sm:$0xff]
      %v238 = vld [vmem:[%s1 + $0x140] sm:$0xff]
      %v239 = vld [vmem:[%s1 + $0x148] sm:$0xff]
      %v240 = vld [vmem:[%s1 + $0x150] sm:$0xff]
      %v241 = vld [vmem:[%s1 + $0x158] sm:$0xff]
      %v242 = vld [vmem:[%s1 + $0x160] sm:$0xff]
      %v243 = vld [vmem:[%s1 + $0x168] sm:$0xff]
      %v244 = vld [vmem:[%s1 + $0x170] sm:$0xff]
      %v245 = vld [vmem:[%s1 + $0x178] sm:$0xff]
      %v246 = vld [vmem:[%s1 + $0x180] sm:$0xff]
      %v247 = vld [vmem:[%s1 + $0x188] sm:$0xff]
      %v248 = vld [vmem:[%s1 + $0x190] sm:$0xff]
      %v249 = vld [vmem:[%s1 + $0x198] sm:$0xff]
      %v250 = vld [vmem:[%s1 + $0x1a0] sm:$0xff]
      %v251 = vld [vmem:[%s1 + $0x1a8] sm:$0xff]
      %v252 = vld [vmem:[%s1 + $0x1b0] sm:$0xff]
      %v253 = vld [vmem:[%s1 + $0x1b8] sm:$0xff]
      %v254 = vld [vmem:[%s1 + $0x1c0] sm:$0xff]
      %v255 = vld [vmem:[%s1 + $0x1c8] sm:$0xff]
      %v256 = vld [vmem:[%s1 + $0x1d0] sm:$0xff]
      %v257 = vld [vmem:[%s1 + $0x1d8] sm:$0xff]
      %v258 = vld [vmem:[%s1 + $0x1e0] sm:$0xff]
      %v259 = vld [vmem:[%s1 + $0x1e8] sm:$0xff]
      %v260 = vld [vmem:[%s1 + $0x1f0] sm:$0xff]
      %v261 = vld [vmem:[%s1 + $0x1f8] sm:$0xff]
      %v262 = vld [vmem:[%s1 + $0x200] sm:$0xff]
      %v263 = vld [vmem:[%s1 + $0x208] sm:$0xff]
      %v264 = vld [vmem:[%s1 + $0x210] sm:$0xff]
      %v265 = vld [vmem:[%s1 + $0x218] sm:$0xff]
      %v266 = vld [vmem:[%s1 + $0x220] sm:$0xff]
      %v267 = vld [vmem:[%s1 + $0x228] sm:$0xff]
      %v268 = vld [vmem:[%s1 + $0x230] sm:$0xff]
      %v269 = vld [vmem:[%s1 + $0x238] sm:$0xff]
      %v270 = vld [vmem:[%s1 + $0x240] sm:$0xff]
      %v271 = vld [vmem:[%s1 + $0x248] sm:$0xff]
      %v272 = vld [vmem:[%s1 + $0x250] sm:$0xff]
      %v273 = vld [vmem:[%s1 + $0x258] sm:$0xff]
      %v274 = vld [vmem:[%s1 + $0x260] sm:$0xff]
      %v275 = vld [vmem:[%s1 + $0x268] sm:$0xff]
      %v276 = vld [vmem:[%s1 + $0x270] sm:$0xff]
      %v277 = vld [vmem:[%s1 + $0x278] sm:$0xff]
      %v278 = vld [vmem:[%s1 + $0x280] sm:$0xff]
      %v279 = vld [vmem:[%s1 + $0x288] sm:$0xff]
      %v280 = vld [vmem:[%s1 + $0x290] sm:$0xff]
      %v281 = vld [vmem:[%s1 + $0x298] sm:$0xff]
      %v282 = vld [vmem:[%s1 + $0x2a0] sm:$0xff]
      %v283 = vld [vmem:[%s1 + $0x2a8] sm:$0xff]
      %v284 = vld [vmem:[%s1 + $0x2b0] sm:$0xff]
      %v285 = vld [vmem:[%s1 + $0x2b8] sm:$0xff]
      %v286 = vld [vmem:[%s1 + $0x2c0] sm:$0xff]
      %v287 = vld [vmem:[%s1 + $0x2c8] sm:$0xff]
      %v288 = vld [vmem:[%s1 + $0x2d0] sm:$0xff]
      %v289 = vld [vmem:[%s1 + $0x2d8] sm:$0xff]
      %v290 = vld [vmem:[%s1 + $0x2e0] sm:$0xff]
      %v291 = vld [vmem:[%s1 + $0x2e8] sm:$0xff]
      %v292 = vld [vmem:[%s1 + $0x2f0] sm:$0xff]
      %v293 = vld [vmem:[%s1 + $0x2f8] sm:$0xff]
      %v294 = vld [vmem:[%s1 + $0x300] sm:$0xff]
      %v295 = vld [vmem:[%s1 + $0x308] sm:$0xff]
      %v296 = vld [vmem:[%s1 + $0x310] sm:$0xff]
      %v297 = vld [vmem:[%s1 + $0x318] sm:$0xff]
      %v298 = vld [vmem:[%s1 + $0x320] sm:$0xff]
      %v299 = vld [vmem:[%s1 + $0x328] sm:$0xff]
      %v300 = vld [vmem:[%s1 + $0x330] sm:$0xff]
      %v301 = vld [vmem:[%s1 + $0x338] sm:$0xff]
      %v302 = vld [vmem:[%s1 + $0x340] sm:$0xff]
      %v303 = vld [vmem:[%s1 + $0x348] sm:$0xff]
      %v304 = vld [vmem:[%s1 + $0x350] sm:$0xff]
      %v305 = vld [vmem:[%s1 + $0x358] sm:$0xff]
      %v306 = vld [vmem:[%s1 + $0x360] sm:$0xff]
      %v307 = vld [vmem:[%s1 + $0x368] sm:$0xff]
      %v308 = vld [vmem:[%s1 + $0x370] sm:$0xff]
      %v309 = vld [vmem:[%s1 + $0x378] sm:$0xff]
      %v310 = vld [vmem:[%s1 + $0x380] sm:$0xff]
      %v311 = vld [vmem:[%s1 + $0x388] sm:$0xff]
      %v312 = vld [vmem:[%s1 + $0x390] sm:$0xff]
      %v313 = vld [vmem:[%s1 + $0x398] sm:$0xff]
      %v314 = vld [vmem:[%s1 + $0x3a0] sm:$0xff]
      %v315 = vld [vmem:[%s1 + $0x3a8] sm:$0xff]
      %v316 = vld [vmem:[%s1 + $0x3b0] sm:$0xff]
      %v317 = vld [vmem:[%s1 + $0x3b8] sm:$0xff]
      %v318 = vld [vmem:[%s1 + $0x3c0] sm:$0xff]
      %v319 = vld [vmem:[%s1 + $0x3c8] sm:$0xff]
      %v320 = vld [vmem:[%s1 + $0x3d0] sm:$0xff]
      %v321 = vld [vmem:[%s1 + $0x3d8] sm:$0xff]
      %v322 = vld [vmem:[%s1 + $0x3e0] sm:$0xff]
      %v323 = vld [vmem:[%s1 + $0x3e8] sm:$0xff]
      %v324 = vld [vmem:[%s1 + $0x3f0] sm:$0xff]
      %v325 = vld [vmem:[%s1 + $0x3f8] sm:$0xff]
      %s326 = smul.u32 %s196, 2
      %s327 = smul.addr %s326, 4
      %s328 = scalar_lea.vmem %s184, %s327
      %v329 = vld [vmem:[%s328] sm:$0xf]
      %v330 = vld [vmem:[%s328 + $0x8] sm:$0xf]
      %v331 = vld [vmem:[%s328 + $0x10] sm:$0xf]
      %v332 = vld [vmem:[%s328 + $0x18] sm:$0xf]
      %v333 = vld [vmem:[%s328 + $0x20] sm:$0xf]
      %v334 = vld [vmem:[%s328 + $0x28] sm:$0xf]
      %v335 = vld [vmem:[%s328 + $0x30] sm:$0xf]
      %v336 = vld [vmem:[%s328 + $0x38] sm:$0xf]
      %v337 = vld [vmem:[%s328 + $0x4] sm:$0x1]
      %v338 = vld [vmem:[%s328 + $0xc] sm:$0x1]
      %v339 = vld [vmem:[%s328 + $0x14] sm:$0x1]
      %v340 = vld [vmem:[%s328 + $0x1c] sm:$0x1]
      %v341 = vld [vmem:[%s328 + $0x24] sm:$0x1]
      %v342 = vld [vmem:[%s328 + $0x2c] sm:$0x1]
      %v343 = vld [vmem:[%s328 + $0x34] sm:$0x1]
      %v344 = vld [vmem:[%s328 + $0x3c] sm:$0x1]
      %s345 = sadd.s32 %s196, 1
      %s346 = smul.u32 %s345, 2
      %s347 = smul.addr %s346, 4
      %s348 = scalar_lea.vmem %s184, %s347
      %v349 = vld [vmem:[%s348] sm:$0xf]
      %v350 = vld [vmem:[%s348 + $0x8] sm:$0xf]
      %v351 = vld [vmem:[%s348 + $0x10] sm:$0xf]
      %v352 = vld [vmem:[%s348 + $0x18] sm:$0xf]
      %v353 = vld [vmem:[%s348 + $0x20] sm:$0xf]
      %v354 = vld [vmem:[%s348 + $0x28] sm:$0xf]
      %v355 = vld [vmem:[%s348 + $0x30] sm:$0xf]
      %v356 = vld [vmem:[%s348 + $0x38] sm:$0xf]
      %v357 = vld [vmem:[%s348 + $0x4] sm:$0x1]
      %v358 = vld [vmem:[%s348 + $0xc] sm:$0x1]
      %v359 = vld [vmem:[%s348 + $0x14] sm:$0x1]
      %v360 = vld [vmem:[%s348 + $0x1c] sm:$0x1]
      %v361 = vld [vmem:[%s348 + $0x24] sm:$0x1]
      %v362 = vld [vmem:[%s348 + $0x2c] sm:$0x1]
      %v363 = vld [vmem:[%s348 + $0x34] sm:$0x1]
      %v364 = vld [vmem:[%s348 + $0x3c] sm:$0x1]
      %v381 = vunpack.c.l.b16 %v329
      %v382 = vunpack.c.l.b16 %v337
      %v383 = vunpack.c.l.b16 %v330
      %v384 = vunpack.c.l.b16 %v338
      %v385 = vunpack.c.l.b16 %v331
      %v386 = vunpack.c.l.b16 %v339
      %v387 = vunpack.c.l.b16 %v332
      %v388 = vunpack.c.l.b16 %v340
      %v389 = vunpack.c.l.b16 %v333
      %v390 = vunpack.c.l.b16 %v341
      %v391 = vunpack.c.l.b16 %v334
      %v392 = vunpack.c.l.b16 %v342
      %v393 = vunpack.c.l.b16 %v335
      %v394 = vunpack.c.l.b16 %v343
      %v395 = vunpack.c.l.b16 %v336
      %v396 = vunpack.c.l.b16 %v344
      %v397 = vpack.c.b16 %v382, %v381
      %v398 = vpack.c.b16 %v384, %v383
      %v399 = vpack.c.b16 %v386, %v385
      %v400 = vpack.c.b16 %v388, %v387
      %v401 = vpack.c.b16 %v390, %v389
      %v402 = vpack.c.b16 %v392, %v391
      %v403 = vpack.c.b16 %v394, %v393
      %v404 = vpack.c.b16 %v396, %v395
      %v406 = vshrl.u32 %v397, 16
      %v408 = vshll.u32 %v397, 16
      %v410 = vrot.slane %v408, 1
      %v411 = vor.u32 %v406, %v410
      %v413 = vshrl.u32 %v398, 16
      %v415 = vshll.u32 %v398, 16
      %v417 = vrot.slane %v415, 1
      %v418 = vor.u32 %v413, %v417
      %v420 = vshrl.u32 %v399, 16
      %v422 = vshll.u32 %v399, 16
      %v424 = vrot.slane %v422, 1
      %v425 = vor.u32 %v420, %v424
      %v427 = vshrl.u32 %v400, 16
      %v429 = vshll.u32 %v400, 16
      %v431 = vrot.slane %v429, 1
      %v432 = vor.u32 %v427, %v431
      %v434 = vshrl.u32 %v401, 16
      %v436 = vshll.u32 %v401, 16
      %v438 = vrot.slane %v436, 1
      %v439 = vor.u32 %v434, %v438
      %v441 = vshrl.u32 %v402, 16
      %v443 = vshll.u32 %v402, 16
      %v445 = vrot.slane %v443, 1
      %v446 = vor.u32 %v441, %v445
      %v448 = vshrl.u32 %v403, 16
      %v450 = vshll.u32 %v403, 16
      %v452 = vrot.slane %v450, 1
      %v453 = vor.u32 %v448, %v452
      %v455 = vshrl.u32 %v404, 16
      %v457 = vshll.u32 %v404, 16
      %v459 = vrot.slane %v457, 1
      %v460 = vor.u32 %v455, %v459
      %v477 = vunpack.c.l.b16 %v349
      %v478 = vunpack.c.l.b16 %v357
      %v479 = vunpack.c.l.b16 %v350
      %v480 = vunpack.c.l.b16 %v358
      %v481 = vunpack.c.l.b16 %v351
      %v482 = vunpack.c.l.b16 %v359
      %v483 = vunpack.c.l.b16 %v352
      %v484 = vunpack.c.l.b16 %v360
      %v485 = vunpack.c.l.b16 %v353
      %v486 = vunpack.c.l.b16 %v361
      %v487 = vunpack.c.l.b16 %v354
      %v488 = vunpack.c.l.b16 %v362
      %v489 = vunpack.c.l.b16 %v355
      %v490 = vunpack.c.l.b16 %v363
      %v491 = vunpack.c.l.b16 %v356
      %v492 = vunpack.c.l.b16 %v364
      %v493 = vpack.c.b16 %v478, %v477
      %v494 = vpack.c.b16 %v480, %v479
      %v495 = vpack.c.b16 %v482, %v481
      %v496 = vpack.c.b16 %v484, %v483
      %v497 = vpack.c.b16 %v486, %v485
      %v498 = vpack.c.b16 %v488, %v487
      %v499 = vpack.c.b16 %v490, %v489
      %v500 = vpack.c.b16 %v492, %v491
      %v502 = vshrl.u32 %v493, 16
      %v504 = vshll.u32 %v493, 16
      %v506 = vrot.slane %v504, 1
      %v507 = vor.u32 %v502, %v506
      %v509 = vshrl.u32 %v494, 16
      %v511 = vshll.u32 %v494, 16
      %v513 = vrot.slane %v511, 1
      %v514 = vor.u32 %v509, %v513
      %v516 = vshrl.u32 %v495, 16
      %v518 = vshll.u32 %v495, 16
      %v520 = vrot.slane %v518, 1
      %v521 = vor.u32 %v516, %v520
      %v523 = vshrl.u32 %v496, 16
      %v525 = vshll.u32 %v496, 16
      %v527 = vrot.slane %v525, 1
      %v528 = vor.u32 %v523, %v527
      %v530 = vshrl.u32 %v497, 16
      %v532 = vshll.u32 %v497, 16
      %v534 = vrot.slane %v532, 1
      %v535 = vor.u32 %v530, %v534
      %v537 = vshrl.u32 %v498, 16
      %v539 = vshll.u32 %v498, 16
      %v541 = vrot.slane %v539, 1
      %v542 = vor.u32 %v537, %v541
      %v544 = vshrl.u32 %v499, 16
      %v546 = vshll.u32 %v499, 16
      %v548 = vrot.slane %v546, 1
      %v549 = vor.u32 %v544, %v548
      %v551 = vshrl.u32 %v500, 16
      %v553 = vshll.u32 %v500, 16
      %v555 = vrot.slane %v553, 1
      %v556 = vor.u32 %v551, %v555
      %v557 = vunpack.c.l.b16 %v411
      %v558 = vunpack.c.l.b16 %v507
      %v559 = vunpack.c.l.b16 %v418
      %v560 = vunpack.c.l.b16 %v514
      %v561 = vunpack.c.l.b16 %v425
      %v562 = vunpack.c.l.b16 %v521
      %v563 = vunpack.c.l.b16 %v432
      %v564 = vunpack.c.l.b16 %v528
      %v565 = vunpack.c.l.b16 %v439
      %v566 = vunpack.c.l.b16 %v535
      %v567 = vunpack.c.l.b16 %v446
      %v568 = vunpack.c.l.b16 %v542
      %v569 = vunpack.c.l.b16 %v453
      %v570 = vunpack.c.l.b16 %v549
      %v571 = vunpack.c.l.b16 %v460
      %v572 = vunpack.c.l.b16 %v556
      %v574 = vlaneseq
      %v575 = vshrl.u32 %v574, 7
      %v576 = vsub.s32 0, %v575
      %v577 = vrot.slane %v197, %v576
      %v578 = vlaneseq
      %v579 = vshrl.u32 %v578, 7
      %v580 = vsub.s32 1, %v579
      %v581 = vrot.slane %v197, %v580
      %v582 = vlaneseq
      %v583 = vshrl.u32 %v582, 7
      %v584 = vsub.s32 2, %v583
      %v585 = vrot.slane %v197, %v584
      %v586 = vlaneseq
      %v587 = vshrl.u32 %v586, 7
      %v588 = vsub.s32 3, %v587
      %v589 = vrot.slane %v197, %v588
      %v594 = vpack.c.b16 %v383, %v381
      %v595 = vpack.c.b16 %v559, %v557
      %v596 = vpack.c.b16 %v479, %v477
      %v597 = vpack.c.b16 %v560, %v558
      %v598 = vpack.c.b16 %v387, %v385
      %v599 = vpack.c.b16 %v563, %v561
      %v600 = vpack.c.b16 %v483, %v481
      %v601 = vpack.c.b16 %v564, %v562
      %v602 = vpack.c.b16 %v391, %v389
      %v603 = vpack.c.b16 %v567, %v565
      %v604 = vpack.c.b16 %v487, %v485
      %v605 = vpack.c.b16 %v568, %v566
      %v606 = vpack.c.b16 %v395, %v393
      %v607 = vpack.c.b16 %v571, %v569
      %v608 = vpack.c.b16 %v491, %v489
      %v609 = vpack.c.b16 %v572, %v570
      %v754 = vunpack.c.l.b16 %v198
      %v755 = vunpack.c.h.b16 %v198
      %v756 = vunpack.c.l.b16 %v199
      %v757 = vunpack.c.h.b16 %v199
      %v758 = vunpack.c.l.b16 %v200
      %v759 = vunpack.c.h.b16 %v200
      %v760 = vunpack.c.l.b16 %v201
      %v761 = vunpack.c.h.b16 %v201
      %v762 = vunpack.c.l.b16 %v202
      %v763 = vunpack.c.h.b16 %v202
      %v764 = vunpack.c.l.b16 %v203
      %v765 = vunpack.c.h.b16 %v203
      %v766 = vunpack.c.l.b16 %v204
      %v767 = vunpack.c.h.b16 %v204
      %v768 = vunpack.c.l.b16 %v205
      %v769 = vunpack.c.h.b16 %v205
      %v770 = vunpack.c.l.b16 %v206
      %v771 = vunpack.c.h.b16 %v206
      %v772 = vunpack.c.l.b16 %v207
      %v773 = vunpack.c.h.b16 %v207
      %v774 = vunpack.c.l.b16 %v208
      %v775 = vunpack.c.h.b16 %v208
      %v776 = vunpack.c.l.b16 %v209
      %v777 = vunpack.c.h.b16 %v209
      %v778 = vunpack.c.l.b16 %v210
      %v779 = vunpack.c.h.b16 %v210
      %v780 = vunpack.c.l.b16 %v211
      %v781 = vunpack.c.h.b16 %v211
      %v782 = vunpack.c.l.b16 %v212
      %v783 = vunpack.c.h.b16 %v212
      %v784 = vunpack.c.l.b16 %v213
      %v785 = vunpack.c.h.b16 %v213
      %v786 = vunpack.c.l.b16 %v214
      %v787 = vunpack.c.h.b16 %v214
      %v788 = vunpack.c.l.b16 %v215
      %v789 = vunpack.c.h.b16 %v215
      %v790 = vunpack.c.l.b16 %v216
      %v791 = vunpack.c.h.b16 %v216
      %v792 = vunpack.c.l.b16 %v217
      %v793 = vunpack.c.h.b16 %v217
      %v794 = vunpack.c.l.b16 %v218
      %v795 = vunpack.c.h.b16 %v218
      %v796 = vunpack.c.l.b16 %v219
      %v797 = vunpack.c.h.b16 %v219
      %v798 = vunpack.c.l.b16 %v220
      %v799 = vunpack.c.h.b16 %v220
      %v800 = vunpack.c.l.b16 %v221
      %v801 = vunpack.c.h.b16 %v221
      %v802 = vunpack.c.l.b16 %v222
      %v803 = vunpack.c.h.b16 %v222
      %v804 = vunpack.c.l.b16 %v223
      %v805 = vunpack.c.h.b16 %v223
      %v806 = vunpack.c.l.b16 %v224
      %v807 = vunpack.c.h.b16 %v224
      %v808 = vunpack.c.l.b16 %v225
      %v809 = vunpack.c.h.b16 %v225
      %v810 = vunpack.c.l.b16 %v226
      %v811 = vunpack.c.h.b16 %v226
      %v812 = vunpack.c.l.b16 %v227
      %v813 = vunpack.c.h.b16 %v227
      %v814 = vunpack.c.l.b16 %v228
      %v815 = vunpack.c.h.b16 %v228
      %v816 = vunpack.c.l.b16 %v229
      %v817 = vunpack.c.h.b16 %v229
      %v818 = vunpack.c.l.b16 %v230
      %v819 = vunpack.c.h.b16 %v230
      %v820 = vunpack.c.l.b16 %v231
      %v821 = vunpack.c.h.b16 %v231
      %v822 = vunpack.c.l.b16 %v232
      %v823 = vunpack.c.h.b16 %v232
      %v824 = vunpack.c.l.b16 %v233
      %v825 = vunpack.c.h.b16 %v233
      %v826 = vunpack.c.l.b16 %v234
      %v827 = vunpack.c.h.b16 %v234
      %v828 = vunpack.c.l.b16 %v235
      %v829 = vunpack.c.h.b16 %v235
      %v830 = vunpack.c.l.b16 %v236
      %v831 = vunpack.c.h.b16 %v236
      %v832 = vunpack.c.l.b16 %v237
      %v833 = vunpack.c.h.b16 %v237
      %v834 = vunpack.c.l.b16 %v238
      %v835 = vunpack.c.h.b16 %v238
      %v836 = vunpack.c.l.b16 %v239
      %v837 = vunpack.c.h.b16 %v239
      %v838 = vunpack.c.l.b16 %v240
      %v839 = vunpack.c.h.b16 %v240
      %v840 = vunpack.c.l.b16 %v241
      %v841 = vunpack.c.h.b16 %v241
      %v842 = vunpack.c.l.b16 %v242
      %v843 = vunpack.c.h.b16 %v242
      %v844 = vunpack.c.l.b16 %v243
      %v845 = vunpack.c.h.b16 %v243
      %v846 = vunpack.c.l.b16 %v244
      %v847 = vunpack.c.h.b16 %v244
      %v848 = vunpack.c.l.b16 %v245
      %v849 = vunpack.c.h.b16 %v245
      %v850 = vunpack.c.l.b16 %v246
      %v851 = vunpack.c.h.b16 %v246
      %v852 = vunpack.c.l.b16 %v247
      %v853 = vunpack.c.h.b16 %v247
      %v854 = vunpack.c.l.b16 %v248
      %v855 = vunpack.c.h.b16 %v248
      %v856 = vunpack.c.l.b16 %v249
      %v857 = vunpack.c.h.b16 %v249
      %v858 = vunpack.c.l.b16 %v250
      %v859 = vunpack.c.h.b16 %v250
      %v860 = vunpack.c.l.b16 %v251
      %v861 = vunpack.c.h.b16 %v251
      %v862 = vunpack.c.l.b16 %v252
      %v863 = vunpack.c.h.b16 %v252
      %v864 = vunpack.c.l.b16 %v253
      %v865 = vunpack.c.h.b16 %v253
      %v866 = vunpack.c.l.b16 %v254
      %v867 = vunpack.c.h.b16 %v254
      %v868 = vunpack.c.l.b16 %v255
      %v869 = vunpack.c.h.b16 %v255
      %v870 = vunpack.c.l.b16 %v256
      %v871 = vunpack.c.h.b16 %v256
      %v872 = vunpack.c.l.b16 %v257
      %v873 = vunpack.c.h.b16 %v257
      %v874 = vunpack.c.l.b16 %v258
      %v875 = vunpack.c.h.b16 %v258
      %v876 = vunpack.c.l.b16 %v259
      %v877 = vunpack.c.h.b16 %v259
      %v878 = vunpack.c.l.b16 %v260
      %v879 = vunpack.c.h.b16 %v260
      %v880 = vunpack.c.l.b16 %v261
      %v881 = vunpack.c.h.b16 %v261
      %v882 = vunpack.c.l.b16 %v262
      %v883 = vunpack.c.h.b16 %v262
      %v884 = vunpack.c.l.b16 %v263
      %v885 = vunpack.c.h.b16 %v263
      %v886 = vunpack.c.l.b16 %v264
      %v887 = vunpack.c.h.b16 %v264
      %v888 = vunpack.c.l.b16 %v265
      %v889 = vunpack.c.h.b16 %v265
      %v890 = vunpack.c.l.b16 %v266
      %v891 = vunpack.c.h.b16 %v266
      %v892 = vunpack.c.l.b16 %v267
      %v893 = vunpack.c.h.b16 %v267
      %v894 = vunpack.c.l.b16 %v268
      %v895 = vunpack.c.h.b16 %v268
      %v896 = vunpack.c.l.b16 %v269
      %v897 = vunpack.c.h.b16 %v269
      %v898 = vunpack.c.l.b16 %v270
      %v899 = vunpack.c.h.b16 %v270
      %v900 = vunpack.c.l.b16 %v271
      %v901 = vunpack.c.h.b16 %v271
      %v902 = vunpack.c.l.b16 %v272
      %v903 = vunpack.c.h.b16 %v272
      %v904 = vunpack.c.l.b16 %v273
      %v905 = vunpack.c.h.b16 %v273
      %v906 = vunpack.c.l.b16 %v274
      %v907 = vunpack.c.h.b16 %v274
      %v908 = vunpack.c.l.b16 %v275
      %v909 = vunpack.c.h.b16 %v275
      %v910 = vunpack.c.l.b16 %v276
      %v911 = vunpack.c.h.b16 %v276
      %v912 = vunpack.c.l.b16 %v277
      %v913 = vunpack.c.h.b16 %v277
      %v914 = vunpack.c.l.b16 %v278
      %v915 = vunpack.c.h.b16 %v278
      %v916 = vunpack.c.l.b16 %v279
      %v917 = vunpack.c.h.b16 %v279
      %v918 = vunpack.c.l.b16 %v280
      %v919 = vunpack.c.h.b16 %v280
      %v920 = vunpack.c.l.b16 %v281
      %v921 = vunpack.c.h.b16 %v281
      %v922 = vunpack.c.l.b16 %v282
      %v923 = vunpack.c.h.b16 %v282
      %v924 = vunpack.c.l.b16 %v283
      %v925 = vunpack.c.h.b16 %v283
      %v926 = vunpack.c.l.b16 %v284
      %v927 = vunpack.c.h.b16 %v284
      %v928 = vunpack.c.l.b16 %v285
      %v929 = vunpack.c.h.b16 %v285
      %v930 = vunpack.c.l.b16 %v286
      %v931 = vunpack.c.h.b16 %v286
      %v932 = vunpack.c.l.b16 %v287
      %v933 = vunpack.c.h.b16 %v287
      %v934 = vunpack.c.l.b16 %v288
      %v935 = vunpack.c.h.b16 %v288
      %v936 = vunpack.c.l.b16 %v289
      %v937 = vunpack.c.h.b16 %v289
      %v938 = vunpack.c.l.b16 %v290
      %v939 = vunpack.c.h.b16 %v290
      %v940 = vunpack.c.l.b16 %v291
      %v941 = vunpack.c.h.b16 %v291
      %v942 = vunpack.c.l.b16 %v292
      %v943 = vunpack.c.h.b16 %v292
      %v944 = vunpack.c.l.b16 %v293
      %v945 = vunpack.c.h.b16 %v293
      %v946 = vunpack.c.l.b16 %v294
      %v947 = vunpack.c.h.b16 %v294
      %v948 = vunpack.c.l.b16 %v295
      %v949 = vunpack.c.h.b16 %v295
      %v950 = vunpack.c.l.b16 %v296
      %v951 = vunpack.c.h.b16 %v296
      %v952 = vunpack.c.l.b16 %v297
      %v953 = vunpack.c.h.b16 %v297
      %v954 = vunpack.c.l.b16 %v298
      %v955 = vunpack.c.h.b16 %v298
      %v956 = vunpack.c.l.b16 %v299
      %v957 = vunpack.c.h.b16 %v299
      %v958 = vunpack.c.l.b16 %v300
      %v959 = vunpack.c.h.b16 %v300
      %v960 = vunpack.c.l.b16 %v301
      %v961 = vunpack.c.h.b16 %v301
      %v962 = vunpack.c.l.b16 %v302
      %v963 = vunpack.c.h.b16 %v302
      %v964 = vunpack.c.l.b16 %v303
      %v965 = vunpack.c.h.b16 %v303
      %v966 = vunpack.c.l.b16 %v304
      %v967 = vunpack.c.h.b16 %v304
      %v968 = vunpack.c.l.b16 %v305
      %v969 = vunpack.c.h.b16 %v305
      %v970 = vunpack.c.l.b16 %v306
      %v971 = vunpack.c.h.b16 %v306
      %v972 = vunpack.c.l.b16 %v307
      %v973 = vunpack.c.h.b16 %v307
      %v974 = vunpack.c.l.b16 %v308
      %v975 = vunpack.c.h.b16 %v308
      %v976 = vunpack.c.l.b16 %v309
      %v977 = vunpack.c.h.b16 %v309
      %v978 = vunpack.c.l.b16 %v310
      %v979 = vunpack.c.h.b16 %v310
      %v980 = vunpack.c.l.b16 %v311
      %v981 = vunpack.c.h.b16 %v311
      %v982 = vunpack.c.l.b16 %v312
      %v983 = vunpack.c.h.b16 %v312
      %v984 = vunpack.c.l.b16 %v313
      %v985 = vunpack.c.h.b16 %v313
      %v986 = vunpack.c.l.b16 %v314
      %v987 = vunpack.c.h.b16 %v314
      %v988 = vunpack.c.l.b16 %v315
      %v989 = vunpack.c.h.b16 %v315
      %v990 = vunpack.c.l.b16 %v316
      %v991 = vunpack.c.h.b16 %v316
      %v992 = vunpack.c.l.b16 %v317
      %v993 = vunpack.c.h.b16 %v317
      %v994 = vunpack.c.l.b16 %v318
      %v995 = vunpack.c.h.b16 %v318
      %v996 = vunpack.c.l.b16 %v319
      %v997 = vunpack.c.h.b16 %v319
      %v998 = vunpack.c.l.b16 %v320
      %v999 = vunpack.c.h.b16 %v320
      %v1000 = vunpack.c.l.b16 %v321
      %v1001 = vunpack.c.h.b16 %v321
      %v1002 = vunpack.c.l.b16 %v322
      %v1003 = vunpack.c.h.b16 %v322
      %v1004 = vunpack.c.l.b16 %v323
      %v1005 = vunpack.c.h.b16 %v323
      %v1006 = vunpack.c.l.b16 %v324
      %v1007 = vunpack.c.h.b16 %v324
      %v1008 = vunpack.c.l.b16 %v325
      %v1009 = vunpack.c.h.b16 %v325
      %v1010 = vpack.c.b16 %v758, %v754
      %v1011 = vpack.c.b16 %v759, %v755
      %v1012 = vpack.c.b16 %v760, %v756
      %v1013 = vpack.c.b16 %v761, %v757
      %v1014 = vpack.c.b16 %v766, %v762
      %v1015 = vpack.c.b16 %v767, %v763
      %v1016 = vpack.c.b16 %v768, %v764
      %v1017 = vpack.c.b16 %v769, %v765
      %v1018 = vpack.c.b16 %v774, %v770
      %v1019 = vpack.c.b16 %v775, %v771
      %v1020 = vpack.c.b16 %v776, %v772
      %v1021 = vpack.c.b16 %v777, %v773
      %v1022 = vpack.c.b16 %v782, %v778
      %v1023 = vpack.c.b16 %v783, %v779
      %v1024 = vpack.c.b16 %v784, %v780
      %v1025 = vpack.c.b16 %v785, %v781
      %v1026 = vpack.c.b16 %v790, %v786
      %v1027 = vpack.c.b16 %v791, %v787
      %v1028 = vpack.c.b16 %v792, %v788
      %v1029 = vpack.c.b16 %v793, %v789
      %v1030 = vpack.c.b16 %v798, %v794
      %v1031 = vpack.c.b16 %v799, %v795
      %v1032 = vpack.c.b16 %v800, %v796
      %v1033 = vpack.c.b16 %v801, %v797
      %v1034 = vpack.c.b16 %v806, %v802
      %v1035 = vpack.c.b16 %v807, %v803
      %v1036 = vpack.c.b16 %v808, %v804
      %v1037 = vpack.c.b16 %v809, %v805
      %v1038 = vpack.c.b16 %v814, %v810
      %v1039 = vpack.c.b16 %v815, %v811
      %v1040 = vpack.c.b16 %v816, %v812
      %v1041 = vpack.c.b16 %v817, %v813
      %v1042 = vpack.c.b16 %v822, %v818
      %v1043 = vpack.c.b16 %v823, %v819
      %v1044 = vpack.c.b16 %v824, %v820
      %v1045 = vpack.c.b16 %v825, %v821
      %v1046 = vpack.c.b16 %v830, %v826
      %v1047 = vpack.c.b16 %v831, %v827
      %v1048 = vpack.c.b16 %v832, %v828
      %v1049 = vpack.c.b16 %v833, %v829
      %v1050 = vpack.c.b16 %v838, %v834
      %v1051 = vpack.c.b16 %v839, %v835
      %v1052 = vpack.c.b16 %v840, %v836
      %v1053 = vpack.c.b16 %v841, %v837
      %v1054 = vpack.c.b16 %v846, %v842
      %v1055 = vpack.c.b16 %v847, %v843
      %v1056 = vpack.c.b16 %v848, %v844
      %v1057 = vpack.c.b16 %v849, %v845
      %v1058 = vpack.c.b16 %v854, %v850
      %v1059 = vpack.c.b16 %v855, %v851
      %v1060 = vpack.c.b16 %v856, %v852
      %v1061 = vpack.c.b16 %v857, %v853
      %v1062 = vpack.c.b16 %v862, %v858
      %v1063 = vpack.c.b16 %v863, %v859
      %v1064 = vpack.c.b16 %v864, %v860
      %v1065 = vpack.c.b16 %v865, %v861
      %v1066 = vpack.c.b16 %v870, %v866
      %v1067 = vpack.c.b16 %v871, %v867
      %v1068 = vpack.c.b16 %v872, %v868
      %v1069 = vpack.c.b16 %v873, %v869
      %v1070 = vpack.c.b16 %v878, %v874
      %v1071 = vpack.c.b16 %v879, %v875
      %v1072 = vpack.c.b16 %v880, %v876
      %v1073 = vpack.c.b16 %v881, %v877
      %v1074 = vpack.c.b16 %v886, %v882
      %v1075 = vpack.c.b16 %v887, %v883
      %v1076 = vpack.c.b16 %v888, %v884
      %v1077 = vpack.c.b16 %v889, %v885
      %v1078 = vpack.c.b16 %v894, %v890
      %v1079 = vpack.c.b16 %v895, %v891
      %v1080 = vpack.c.b16 %v896, %v892
      %v1081 = vpack.c.b16 %v897, %v893
      %v1082 = vpack.c.b16 %v902, %v898
      %v1083 = vpack.c.b16 %v903, %v899
      %v1084 = vpack.c.b16 %v904, %v900
      %v1085 = vpack.c.b16 %v905, %v901
      %v1086 = vpack.c.b16 %v910, %v906
      %v1087 = vpack.c.b16 %v911, %v907
      %v1088 = vpack.c.b16 %v912, %v908
      %v1089 = vpack.c.b16 %v913, %v909
      %v1090 = vpack.c.b16 %v918, %v914
      %v1091 = vpack.c.b16 %v919, %v915
      %v1092 = vpack.c.b16 %v920, %v916
      %v1093 = vpack.c.b16 %v921, %v917
      %v1094 = vpack.c.b16 %v926, %v922
      %v1095 = vpack.c.b16 %v927, %v923
      %v1096 = vpack.c.b16 %v928, %v924
      %v1097 = vpack.c.b16 %v929, %v925
      %v1098 = vpack.c.b16 %v934, %v930
      %v1099 = vpack.c.b16 %v935, %v931
      %v1100 = vpack.c.b16 %v936, %v932
      %v1101 = vpack.c.b16 %v937, %v933
      %v1102 = vpack.c.b16 %v942, %v938
      %v1103 = vpack.c.b16 %v943, %v939
      %v1104 = vpack.c.b16 %v944, %v940
      %v1105 = vpack.c.b16 %v945, %v941
      %v1106 = vpack.c.b16 %v950, %v946
      %v1107 = vpack.c.b16 %v951, %v947
      %v1108 = vpack.c.b16 %v952, %v948
      %v1109 = vpack.c.b16 %v953, %v949
      %v1110 = vpack.c.b16 %v958, %v954
      %v1111 = vpack.c.b16 %v959, %v955
      %v1112 = vpack.c.b16 %v960, %v956
      %v1113 = vpack.c.b16 %v961, %v957
      %v1114 = vpack.c.b16 %v966, %v962
      %v1115 = vpack.c.b16 %v967, %v963
      %v1116 = vpack.c.b16 %v968, %v964
      %v1117 = vpack.c.b16 %v969, %v965
      %v1118 = vpack.c.b16 %v974, %v970
      %v1119 = vpack.c.b16 %v975, %v971
      %v1120 = vpack.c.b16 %v976, %v972
      %v1121 = vpack.c.b16 %v977, %v973
      %v1122 = vpack.c.b16 %v982, %v978
      %v1123 = vpack.c.b16 %v983, %v979
      %v1124 = vpack.c.b16 %v984, %v980
      %v1125 = vpack.c.b16 %v985, %v981
      %v1126 = vpack.c.b16 %v990, %v986
      %v1127 = vpack.c.b16 %v991, %v987
      %v1128 = vpack.c.b16 %v992, %v988
      %v1129 = vpack.c.b16 %v993, %v989
      %v1130 = vpack.c.b16 %v998, %v994
      %v1131 = vpack.c.b16 %v999, %v995
      %v1132 = vpack.c.b16 %v1000, %v996
      %v1133 = vpack.c.b16 %v1001, %v997
      %v1134 = vpack.c.b16 %v1006, %v1002
      %v1135 = vpack.c.b16 %v1007, %v1003
      %v1136 = vpack.c.b16 %v1008, %v1004
      %v1137 = vpack.c.b16 %v1009, %v1005
      %1266 = vmatprep.subr.bf16.mxu0 %v1011
      %1267 = vmatpush1.bf16.msra.mxu0 %v1010
      %1268 = vmatprep.subr.bf16.mxu0 %v1015
      %1269 = vmatpush1.bf16.msra.mxu0 %v1014
      %1270 = vmatprep.subr.bf16.mxu0 %v1019
      %1271 = vmatpush1.bf16.msra.mxu0 %v1018
      %1272 = vmatprep.subr.bf16.mxu0 %v1023
      %1273 = vmatpush1.bf16.msra.mxu0 %v1022
      %1274 = vmatprep.subr.bf16.mxu0 %v1027
      %1275 = vmatpush1.bf16.msra.mxu0 %v1026
      %1276 = vmatprep.subr.bf16.mxu0 %v1031
      %1277 = vmatpush1.bf16.msra.mxu0 %v1030
      %1278 = vmatprep.subr.bf16.mxu0 %v1035
      %1279 = vmatpush1.bf16.msra.mxu0 %v1034
      %1280 = vmatprep.subr.bf16.mxu0 %v1039
      %1281 = vmatpush1.bf16.msra.mxu0 %v1038
      %1282 = vmatprep.subr.bf16.mxu0 %v1043
      %1283 = vmatpush1.bf16.msra.mxu0 %v1042
      %1284 = vmatprep.subr.bf16.mxu0 %v1047
      %1285 = vmatpush1.bf16.msra.mxu0 %v1046
      %1286 = vmatprep.subr.bf16.mxu0 %v1051
      %1287 = vmatpush1.bf16.msra.mxu0 %v1050
      %1288 = vmatprep.subr.bf16.mxu0 %v1055
      %1289 = vmatpush1.bf16.msra.mxu0 %v1054
      %1290 = vmatprep.subr.bf16.mxu0 %v1059
      %1291 = vmatpush1.bf16.msra.mxu0 %v1058
      %1292 = vmatprep.subr.bf16.mxu0 %v1063
      %1293 = vmatpush1.bf16.msra.mxu0 %v1062
      %1294 = vmatprep.subr.bf16.mxu0 %v1067
      %1295 = vmatpush1.bf16.msra.mxu0 %v1066
      %1296 = vmatprep.subr.bf16.mxu0 %v1071
      %1297 = vmatpush1.bf16.msra.mxu0 %v1070
      %1298 = vmatprep.mubr.bf16.mxu0 %v595
      %1299 = vmatmul.mubr.bf16.gmra.mrb[0].mxu0 %v594
      %v1300 = vpop.f32.mrb[0].mxu0
      %v1301 = vadd.f32 %v577, %v1300
      %v1302 = vpop.f32.mrb[0].mxu0
      %v1303 = vadd.f32 %v581, %v1302
      %v1304 = vpop.f32.mrb[0].mxu0
      %v1305 = vadd.f32 %v577, %v1304
      %v1306 = vpop.f32.mrb[0].mxu0
      %v1307 = vadd.f32 %v581, %v1306
      %1308 = vmatprep.mubr.bf16.mxu0 %v599
      %1309 = vmatmul.mubr.bf16.gmra.mrb[0].mxu0 %v598
      %v1310 = vpop.f32.mrb[0].mxu0
      %v1311 = vadd.f32 %v577, %v1310
      %v1312 = vpop.f32.mrb[0].mxu0
      %v1313 = vadd.f32 %v581, %v1312
      %v1314 = vpop.f32.mrb[0].mxu0
      %v1315 = vadd.f32 %v577, %v1314
      %v1316 = vpop.f32.mrb[0].mxu0
      %v1317 = vadd.f32 %v581, %v1316
      %1318 = vmatprep.mubr.bf16.mxu0 %v603
      %1319 = vmatmul.mubr.bf16.gmra.mrb[0].mxu0 %v602
      %v1320 = vpop.f32.mrb[0].mxu0
      %v1321 = vadd.f32 %v577, %v1320
      %v1322 = vpop.f32.mrb[0].mxu0
      %v1323 = vadd.f32 %v581, %v1322
      %v1324 = vpop.f32.mrb[0].mxu0
      %v1325 = vadd.f32 %v577, %v1324
      %v1326 = vpop.f32.mrb[0].mxu0
      %v1327 = vadd.f32 %v581, %v1326
      %1328 = vmatprep.mubr.bf16.mxu0 %v607
      %1329 = vmatmul.mubr.bf16.gmra.mrb[0].mxu0 %v606
      %v1330 = vpop.f32.mrb[0].mxu0
      %v1331 = vadd.f32 %v577, %v1330
      %v1332 = vpop.f32.mrb[0].mxu0
      %v1333 = vadd.f32 %v581, %v1332
      %v1334 = vpop.f32.mrb[0].mxu0
      %v1335 = vadd.f32 %v577, %v1334
      %v1336 = vpop.f32.mrb[0].mxu0
      %v1337 = vadd.f32 %v581, %v1336
      %1338 = vdwg.mxu0
      %1339 = vmatprep.subr.bf16.mxu0 %v1075
      %1340 = vmatpush1.bf16.msra.mxu0 %v1074
      %1341 = vmatprep.subr.bf16.mxu0 %v1079
      %1342 = vmatpush1.bf16.msra.mxu0 %v1078
      %1343 = vmatprep.subr.bf16.mxu0 %v1083
      %1344 = vmatpush1.bf16.msra.mxu0 %v1082
      %1345 = vmatprep.subr.bf16.mxu0 %v1087
      %1346 = vmatpush1.bf16.msra.mxu0 %v1086
      %1347 = vmatprep.subr.bf16.mxu0 %v1091
      %1348 = vmatpush1.bf16.msra.mxu0 %v1090
      %1349 = vmatprep.subr.bf16.mxu0 %v1095
      %1350 = vmatpush1.bf16.msra.mxu0 %v1094
      %1351 = vmatprep.subr.bf16.mxu0 %v1099
      %1352 = vmatpush1.bf16.msra.mxu0 %v1098
      %1353 = vmatprep.subr.bf16.mxu0 %v1103
      %1354 = vmatpush1.bf16.msra.mxu0 %v1102
      %1355 = vmatprep.subr.bf16.mxu0 %v1107
      %1356 = vmatpush1.bf16.msra.mxu0 %v1106
      %1357 = vmatprep.subr.bf16.mxu0 %v1111
      %1358 = vmatpush1.bf16.msra.mxu0 %v1110
      %1359 = vmatprep.subr.bf16.mxu0 %v1115
      %1360 = vmatpush1.bf16.msra.mxu0 %v1114
      %1361 = vmatprep.subr.bf16.mxu0 %v1119
      %1362 = vmatpush1.bf16.msra.mxu0 %v1118
      %1363 = vmatprep.subr.bf16.mxu0 %v1123
      %1364 = vmatpush1.bf16.msra.mxu0 %v1122
      %1365 = vmatprep.subr.bf16.mxu0 %v1127
      %1366 = vmatpush1.bf16.msra.mxu0 %v1126
      %1367 = vmatprep.subr.bf16.mxu0 %v1131
      %1368 = vmatpush1.bf16.msra.mxu0 %v1130
      %1369 = vmatprep.subr.bf16.mxu0 %v1135
      %1370 = vmatpush1.bf16.msra.mxu0 %v1134
      %1371 = vmatprep.mubr.bf16.mxu0 %v597
      %1372 = vmatmul.mubr.bf16.gmra.mrb[0].mxu0 %v596
      %v1373 = vpop.f32.mrb[0].mxu0
      %v1374 = vadd.f32 %v1301, %v1373
      %v1375 = vpop.f32.mrb[0].mxu0
      %v1376 = vadd.f32 %v1303, %v1375
      %v1377 = vpop.f32.mrb[0].mxu0
      %v1378 = vadd.f32 %v1305, %v1377
      %v1379 = vpop.f32.mrb[0].mxu0
      %v1380 = vadd.f32 %v1307, %v1379
      %1381 = vmatprep.mubr.bf16.mxu0 %v601
      %1382 = vmatmul.mubr.bf16.gmra.mrb[0].mxu0 %v600
      %v1383 = vpop.f32.mrb[0].mxu0
      %v1384 = vadd.f32 %v1311, %v1383
      %v1385 = vpop.f32.mrb[0].mxu0
      %v1386 = vadd.f32 %v1313, %v1385
      %v1387 = vpop.f32.mrb[0].mxu0
      %v1388 = vadd.f32 %v1315, %v1387
      %v1389 = vpop.f32.mrb[0].mxu0
      %v1390 = vadd.f32 %v1317, %v1389
      %1391 = vmatprep.mubr.bf16.mxu0 %v605
      %1392 = vmatmul.mubr.bf16.gmra.mrb[0].mxu0 %v604
      %v1393 = vpop.f32.mrb[0].mxu0
      %v1394 = vadd.f32 %v1321, %v1393
      %v1395 = vpop.f32.mrb[0].mxu0
      %v1396 = vadd.f32 %v1323, %v1395
      %v1397 = vpop.f32.mrb[0].mxu0
      %v1398 = vadd.f32 %v1325, %v1397
      %v1399 = vpop.f32.mrb[0].mxu0
      %v1400 = vadd.f32 %v1327, %v1399
      %1401 = vmatprep.mubr.bf16.mxu0 %v609
      %1402 = vmatmul.mubr.bf16.gmra.mrb[0].mxu0 %v608
      %v1403 = vpop.f32.mrb[0].mxu0
      %v1404 = vadd.f32 %v1331, %v1403
      %v1405 = vpop.f32.mrb[0].mxu0
      %v1406 = vadd.f32 %v1333, %v1405
      %v1407 = vpop.f32.mrb[0].mxu0
      %v1408 = vadd.f32 %v1335, %v1407
      %v1409 = vpop.f32.mrb[0].mxu0
      %v1410 = vadd.f32 %v1337, %v1409
      %1411 = vdwg.mxu0
      %1412 = vmatprep.subr.bf16.mxu0 %v1013
      %1413 = vmatpush1.bf16.msra.mxu0 %v1012
      %1414 = vmatprep.subr.bf16.mxu0 %v1017
      %1415 = vmatpush1.bf16.msra.mxu0 %v1016
      %1416 = vmatprep.subr.bf16.mxu0 %v1021
      %1417 = vmatpush1.bf16.msra.mxu0 %v1020
      %1418 = vmatprep.subr.bf16.mxu0 %v1025
      %1419 = vmatpush1.bf16.msra.mxu0 %v1024
      %1420 = vmatprep.subr.bf16.mxu0 %v1029
      %1421 = vmatpush1.bf16.msra.mxu0 %v1028
      %1422 = vmatprep.subr.bf16.mxu0 %v1033
      %1423 = vmatpush1.bf16.msra.mxu0 %v1032
      %1424 = vmatprep.subr.bf16.mxu0 %v1037
      %1425 = vmatpush1.bf16.msra.mxu0 %v1036
      %1426 = vmatprep.subr.bf16.mxu0 %v1041
      %1427 = vmatpush1.bf16.msra.mxu0 %v1040
      %1428 = vmatprep.subr.bf16.mxu0 %v1045
      %1429 = vmatpush1.bf16.msra.mxu0 %v1044
      %1430 = vmatprep.subr.bf16.mxu0 %v1049
      %1431 = vmatpush1.bf16.msra.mxu0 %v1048
      %1432 = vmatprep.subr.bf16.mxu0 %v1053
      %1433 = vmatpush1.bf16.msra.mxu0 %v1052
      %1434 = vmatprep.subr.bf16.mxu0 %v1057
      %1435 = vmatpush1.bf16.msra.mxu0 %v1056
      %1436 = vmatprep.subr.bf16.mxu0 %v1061
      %1437 = vmatpush1.bf16.msra.mxu0 %v1060
      %1438 = vmatprep.subr.bf16.mxu0 %v1065
      %1439 = vmatpush1.bf16.msra.mxu0 %v1064
      %1440 = vmatprep.subr.bf16.mxu0 %v1069
      %1441 = vmatpush1.bf16.msra.mxu0 %v1068
      %1442 = vmatprep.subr.bf16.mxu0 %v1073
      %1443 = vmatpush1.bf16.msra.mxu0 %v1072
      %1444 = vmatprep.mubr.bf16.mxu0 %v595
      %1445 = vmatmul.mubr.bf16.gmra.mrb[0].mxu0 %v594
      %v1446 = vpop.f32.mrb[0].mxu0
      %v1447 = vadd.f32 %v585, %v1446
      %v1448 = vpop.f32.mrb[0].mxu0
      %v1449 = vadd.f32 %v589, %v1448
      %v1450 = vpop.f32.mrb[0].mxu0
      %v1451 = vadd.f32 %v585, %v1450
      %v1452 = vpop.f32.mrb[0].mxu0
      %v1453 = vadd.f32 %v589, %v1452
      %1454 = vmatprep.mubr.bf16.mxu0 %v599
      %1455 = vmatmul.mubr.bf16.gmra.mrb[0].mxu0 %v598
      %v1456 = vpop.f32.mrb[0].mxu0
      %v1457 = vadd.f32 %v585, %v1456
      %v1458 = vpop.f32.mrb[0].mxu0
      %v1459 = vadd.f32 %v589, %v1458
      %v1460 = vpop.f32.mrb[0].mxu0
      %v1461 = vadd.f32 %v585, %v1460
      %v1462 = vpop.f32.mrb[0].mxu0
      %v1463 = vadd.f32 %v589, %v1462
      %1464 = vmatprep.mubr.bf16.mxu0 %v603
      %1465 = vmatmul.mubr.bf16.gmra.mrb[0].mxu0 %v602
      %v1466 = vpop.f32.mrb[0].mxu0
      %v1467 = vadd.f32 %v585, %v1466
      %v1468 = vpop.f32.mrb[0].mxu0
      %v1469 = vadd.f32 %v589, %v1468
      %v1470 = vpop.f32.mrb[0].mxu0
      %v1471 = vadd.f32 %v585, %v1470
      %v1472 = vpop.f32.mrb[0].mxu0
      %v1473 = vadd.f32 %v589, %v1472
      %1474 = vmatprep.mubr.bf16.mxu0 %v607
      %1475 = vmatmul.mubr.bf16.gmra.mrb[0].mxu0 %v606
      %v1476 = vpop.f32.mrb[0].mxu0
      %v1477 = vadd.f32 %v585, %v1476
      %v1478 = vpop.f32.mrb[0].mxu0
      %v1479 = vadd.f32 %v589, %v1478
      %v1480 = vpop.f32.mrb[0].mxu0
      %v1481 = vadd.f32 %v585, %v1480
      %v1482 = vpop.f32.mrb[0].mxu0
      %v1483 = vadd.f32 %v589, %v1482
      %1484 = vdwg.mxu0
      %1485 = vmatprep.subr.bf16.mxu0 %v1077
      %1486 = vmatpush1.bf16.msra.mxu0 %v1076
      %1487 = vmatprep.subr.bf16.mxu0 %v1081
      %1488 = vmatpush1.bf16.msra.mxu0 %v1080
      %1489 = vmatprep.subr.bf16.mxu0 %v1085
      %1490 = vmatpush1.bf16.msra.mxu0 %v1084
      %1491 = vmatprep.subr.bf16.mxu0 %v1089
      %1492 = vmatpush1.bf16.msra.mxu0 %v1088
      %1493 = vmatprep.subr.bf16.mxu0 %v1093
      %1494 = vmatpush1.bf16.msra.mxu0 %v1092
      %1495 = vmatprep.subr.bf16.mxu0 %v1097
      %1496 = vmatpush1.bf16.msra.mxu0 %v1096
      %1497 = vmatprep.subr.bf16.mxu0 %v1101
      %1498 = vmatpush1.bf16.msra.mxu0 %v1100
      %1499 = vmatprep.subr.bf16.mxu0 %v1105
      %1500 = vmatpush1.bf16.msra.mxu0 %v1104
      %1501 = vmatprep.subr.bf16.mxu0 %v1109
      %1502 = vmatpush1.bf16.msra.mxu0 %v1108
      %1503 = vmatprep.subr.bf16.mxu0 %v1113
      %1504 = vmatpush1.bf16.msra.mxu0 %v1112
      %1505 = vmatprep.subr.bf16.mxu0 %v1117
      %1506 = vmatpush1.bf16.msra.mxu0 %v1116
      %1507 = vmatprep.subr.bf16.mxu0 %v1121
      %1508 = vmatpush1.bf16.msra.mxu0 %v1120
      %1509 = vmatprep.subr.bf16.mxu0 %v1125
      %1510 = vmatpush1.bf16.msra.mxu0 %v1124
      %1511 = vmatprep.subr.bf16.mxu0 %v1129
      %1512 = vmatpush1.bf16.msra.mxu0 %v1128
      %1513 = vmatprep.subr.bf16.mxu0 %v1133
      %1514 = vmatpush1.bf16.msra.mxu0 %v1132
      %1515 = vmatprep.subr.bf16.mxu0 %v1137
      %1516 = vmatpush1.bf16.msra.mxu0 %v1136
      %1517 = vmatprep.mubr.bf16.mxu0 %v597
      %1518 = vmatmul.mubr.bf16.gmra.mrb[0].mxu0 %v596
      %v1519 = vpop.f32.mrb[0].mxu0
      %v1520 = vadd.f32 %v1447, %v1519
      %v1521 = vpop.f32.mrb[0].mxu0
      %v1522 = vadd.f32 %v1449, %v1521
      %v1523 = vpop.f32.mrb[0].mxu0
      %v1524 = vadd.f32 %v1451, %v1523
      %v1525 = vpop.f32.mrb[0].mxu0
      %v1526 = vadd.f32 %v1453, %v1525
      %1527 = vmatprep.mubr.bf16.mxu0 %v601
      %1528 = vmatmul.mubr.bf16.gmra.mrb[0].mxu0 %v600
      %v1529 = vpop.f32.mrb[0].mxu0
      %v1530 = vadd.f32 %v1457, %v1529
      %v1531 = vpop.f32.mrb[0].mxu0
      %v1532 = vadd.f32 %v1459, %v1531
      %v1533 = vpop.f32.mrb[0].mxu0
      %v1534 = vadd.f32 %v1461, %v1533
      %v1535 = vpop.f32.mrb[0].mxu0
      %v1536 = vadd.f32 %v1463, %v1535
      %1537 = vmatprep.mubr.bf16.mxu0 %v605
      %1538 = vmatmul.mubr.bf16.gmra.mrb[0].mxu0 %v604
      %v1539 = vpop.f32.mrb[0].mxu0
      %v1540 = vadd.f32 %v1467, %v1539
      %v1541 = vpop.f32.mrb[0].mxu0
      %v1542 = vadd.f32 %v1469, %v1541
      %v1543 = vpop.f32.mrb[0].mxu0
      %v1544 = vadd.f32 %v1471, %v1543
      %v1545 = vpop.f32.mrb[0].mxu0
      %v1546 = vadd.f32 %v1473, %v1545
      %1547 = vmatprep.mubr.bf16.mxu0 %v609
      %1548 = vmatmul.mubr.bf16.gmra.mrb[0].mxu0 %v608
      %v1549 = vpop.f32.mrb[0].mxu0
      %v1550 = vadd.f32 %v1477, %v1549
      %v1551 = vpop.f32.mrb[0].mxu0
      %v1552 = vadd.f32 %v1479, %v1551
      %v1553 = vpop.f32.mrb[0].mxu0
      %v1554 = vadd.f32 %v1481, %v1553
      %v1555 = vpop.f32.mrb[0].mxu0
      %v1556 = vadd.f32 %v1483, %v1555
      %1557 = vdwg.mxu0
      %1558 = vst [vmem:[%s194] sm:$0xff] %v1374
      %1559 = vst [vmem:[%s194 + $0x8] sm:$0xff] %v1376
      %1560 = vst [vmem:[%s194 + $0x80] sm:$0xff] %v1378
      %1561 = vst [vmem:[%s194 + $0x88] sm:$0xff] %v1380
      %1562 = vst [vmem:[%s194 + $0x100] sm:$0xff] %v1384
      %1563 = vst [vmem:[%s194 + $0x108] sm:$0xff] %v1386
      %1564 = vst [vmem:[%s194 + $0x180] sm:$0xff] %v1388
      %1565 = vst [vmem:[%s194 + $0x188] sm:$0xff] %v1390
      %1566 = vst [vmem:[%s194 + $0x200] sm:$0xff] %v1394
      %1567 = vst [vmem:[%s194 + $0x208] sm:$0xff] %v1396
      %1568 = vst [vmem:[%s194 + $0x280] sm:$0xff] %v1398
      %1569 = vst [vmem:[%s194 + $0x288] sm:$0xff] %v1400
      %1570 = vst [vmem:[%s194 + $0x300] sm:$0xff] %v1404
      %1571 = vst [vmem:[%s194 + $0x308] sm:$0xff] %v1406
      %1572 = vst [vmem:[%s194 + $0x380] sm:$0xff] %v1408
      %1573 = vst [vmem:[%s194 + $0x388] sm:$0xff] %v1410
      %s1574 = scalar_lea.vmem %s194, 32
      %1575 = vst [vmem:[%s1574] sm:$0xff] %v1520
      %1576 = vst [vmem:[%s1574 + $0x8] sm:$0xff] %v1522
      %1577 = vst [vmem:[%s1574 + $0x80] sm:$0xff] %v1524
      %1578 = vst [vmem:[%s1574 + $0x88] sm:$0xff] %v1526
      %1579 = vst [vmem:[%s1574 + $0x100] sm:$0xff] %v1530
      %1580 = vst [vmem:[%s1574 + $0x108] sm:$0xff] %v1532
      %1581 = vst [vmem:[%s1574 + $0x180] sm:$0xff] %v1534
      %1582 = vst [vmem:[%s1574 + $0x188] sm:$0xff] %v1536
      %1583 = vst [vmem:[%s1574 + $0x200] sm:$0xff] %v1540
      %1584 = vst [vmem:[%s1574 + $0x208] sm:$0xff] %v1542
      %1585 = vst [vmem:[%s1574 + $0x280] sm:$0xff] %v1544
      %1586 = vst [vmem:[%s1574 + $0x288] sm:$0xff] %v1546
      %1587 = vst [vmem:[%s1574 + $0x300] sm:$0xff] %v1550
      %1588 = vst [vmem:[%s1574 + $0x308] sm:$0xff] %v1552
      %1589 = vst [vmem:[%s1574 + $0x380] sm:$0xff] %v1554
      %1590 = vst [vmem:[%s1574 + $0x388] sm:$0xff] %v1556
      %s1591 = scalar_lea.vmem %s1, 1024
      %v1592 = vld [vmem:[%s1591] sm:$0xff]
      %v1593 = vld [vmem:[%s1591 + $0x8] sm:$0xff]
      %v1594 = vld [vmem:[%s1591 + $0x10] sm:$0xff]
      %v1595 = vld [vmem:[%s1591 + $0x18] sm:$0xff]
      %v1596 = vld [vmem:[%s1591 + $0x20] sm:$0xff]
      %v1597 = vld [vmem:[%s1591 + $0x28] sm:$0xff]
      %v1598 = vld [vmem:[%s1591 + $0x30] sm:$0xff]
      %v1599 = vld [vmem:[%s1591 + $0x38] sm:$0xff]
      %v1600 = vld [vmem:[%s1591 + $0x40] sm:$0xff]
      %v1601 = vld [vmem:[%s1591 + $0x48] sm:$0xff]
      %v1602 = vld [vmem:[%s1591 + $0x50] sm:$0xff]
      %v1603 = vld [vmem:[%s1591 + $0x58] sm:$0xff]
      %v1604 = vld [vmem:[%s1591 + $0x60] sm:$0xff]
      %v1605 = vld [vmem:[%s1591 + $0x68] sm:$0xff]
      %v1606 = vld [vmem:[%s1591 + $0x70] sm:$0xff]
      %v1607 = vld [vmem:[%s1591 + $0x78] sm:$0xff]
      %v1608 = vld [vmem:[%s1591 + $0x80] sm:$0xff]
      %v1609 = vld [vmem:[%s1591 + $0x88] sm:$0xff]
      %v1610 = vld [vmem:[%s1591 + $0x90] sm:$0xff]
      %v1611 = vld [vmem:[%s1591 + $0x98] sm:$0xff]
      %v1612 = vld [vmem:[%s1591 + $0xa0] sm:$0xff]
      %v1613 = vld [vmem:[%s1591 + $0xa8] sm:$0xff]
      %v1614 = vld [vmem:[%s1591 + $0xb0] sm:$0xff]
      %v1615 = vld [vmem:[%s1591 + $0xb8] sm:$0xff]
      %v1616 = vld [vmem:[%s1591 + $0xc0] sm:$0xff]
      %v1617 = vld [vmem:[%s1591 + $0xc8] sm:$0xff]
      %v1618 = vld [vmem:[%s1591 + $0xd0] sm:$0xff]
      %v1619 = vld [vmem:[%s1591 + $0xd8] sm:$0xff]
      %v1620 = vld [vmem:[%s1591 + $0xe0] sm:$0xff]
      %v1621 = vld [vmem:[%s1591 + $0xe8] sm:$0xff]
      %v1622 = vld [vmem:[%s1591 + $0xf0] sm:$0xff]
      %v1623 = vld [vmem:[%s1591 + $0xf8] sm:$0xff]
      %v1624 = vld [vmem:[%s1591 + $0x100] sm:$0xff]
      %v1625 = vld [vmem:[%s1591 + $0x108] sm:$0xff]
      %v1626 = vld [vmem:[%s1591 + $0x110] sm:$0xff]
      %v1627 = vld [vmem:[%s1591 + $0x118] sm:$0xff]
      %v1628 = vld [vmem:[%s1591 + $0x120] sm:$0xff]
      %v1629 = vld [vmem:[%s1591 + $0x128] sm:$0xff]
      %v1630 = vld [vmem:[%s1591 + $0x130] sm:$0xff]
      %v1631 = vld [vmem:[%s1591 + $0x138] sm:$0xff]
      %v1632 = vld [vmem:[%s1591 + $0x140] sm:$0xff]
      %v1633 = vld [vmem:[%s1591 + $0x148] sm:$0xff]
      %v1634 = vld [vmem:[%s1591 + $0x150] sm:$0xff]
      %v1635 = vld [vmem:[%s1591 + $0x158] sm:$0xff]
      %v1636 = vld [vmem:[%s1591 + $0x160] sm:$0xff]
      %v1637 = vld [vmem:[%s1591 + $0x168] sm:$0xff]
      %v1638 = vld [vmem:[%s1591 + $0x170] sm:$0xff]
      %v1639 = vld [vmem:[%s1591 + $0x178] sm:$0xff]
      %v1640 = vld [vmem:[%s1591 + $0x180] sm:$0xff]
      %v1641 = vld [vmem:[%s1591 + $0x188] sm:$0xff]
      %v1642 = vld [vmem:[%s1591 + $0x190] sm:$0xff]
      %v1643 = vld [vmem:[%s1591 + $0x198] sm:$0xff]
      %v1644 = vld [vmem:[%s1591 + $0x1a0] sm:$0xff]
      %v1645 = vld [vmem:[%s1591 + $0x1a8] sm:$0xff]
      %v1646 = vld [vmem:[%s1591 + $0x1b0] sm:$0xff]
      %v1647 = vld [vmem:[%s1591 + $0x1b8] sm:$0xff]
      %v1648 = vld [vmem:[%s1591 + $0x1c0] sm:$0xff]
      %v1649 = vld [vmem:[%s1591 + $0x1c8] sm:$0xff]
      %v1650 = vld [vmem:[%s1591 + $0x1d0] sm:$0xff]
      %v1651 = vld [vmem:[%s1591 + $0x1d8] sm:$0xff]
      %v1652 = vld [vmem:[%s1591 + $0x1e0] sm:$0xff]
      %v1653 = vld [vmem:[%s1591 + $0x1e8] sm:$0xff]
      %v1654 = vld [vmem:[%s1591 + $0x1f0] sm:$0xff]
      %v1655 = vld [vmem:[%s1591 + $0x1f8] sm:$0xff]
      %v1656 = vld [vmem:[%s1591 + $0x200] sm:$0xff]
      %v1657 = vld [vmem:[%s1591 + $0x208] sm:$0xff]
      %v1658 = vld [vmem:[%s1591 + $0x210] sm:$0xff]
      %v1659 = vld [vmem:[%s1591 + $0x218] sm:$0xff]
      %v1660 = vld [vmem:[%s1591 + $0x220] sm:$0xff]
      %v1661 = vld [vmem:[%s1591 + $0x228] sm:$0xff]
      %v1662 = vld [vmem:[%s1591 + $0x230] sm:$0xff]
      %v1663 = vld [vmem:[%s1591 + $0x238] sm:$0xff]
      %v1664 = vld [vmem:[%s1591 + $0x240] sm:$0xff]
      %v1665 = vld [vmem:[%s1591 + $0x248] sm:$0xff]
      %v1666 = vld [vmem:[%s1591 + $0x250] sm:$0xff]
      %v1667 = vld [vmem:[%s1591 + $0x258] sm:$0xff]
      %v1668 = vld [vmem:[%s1591 + $0x260] sm:$0xff]
      %v1669 = vld [vmem:[%s1591 + $0x268] sm:$0xff]
      %v1670 = vld [vmem:[%s1591 + $0x270] sm:$0xff]
      %v1671 = vld [vmem:[%s1591 + $0x278] sm:$0xff]
      %v1672 = vld [vmem:[%s1591 + $0x280] sm:$0xff]
      %v1673 = vld [vmem:[%s1591 + $0x288] sm:$0xff]
      %v1674 = vld [vmem:[%s1591 + $0x290] sm:$0xff]
      %v1675 = vld [vmem:[%s1591 + $0x298] sm:$0xff]
      %v1676 = vld [vmem:[%s1591 + $0x2a0] sm:$0xff]
      %v1677 = vld [vmem:[%s1591 + $0x2a8] sm:$0xff]
      %v1678 = vld [vmem:[%s1591 + $0x2b0] sm:$0xff]
      %v1679 = vld [vmem:[%s1591 + $0x2b8] sm:$0xff]
      %v1680 = vld [vmem:[%s1591 + $0x2c0] sm:$0xff]
      %v1681 = vld [vmem:[%s1591 + $0x2c8] sm:$0xff]
      %v1682 = vld [vmem:[%s1591 + $0x2d0] sm:$0xff]
      %v1683 = vld [vmem:[%s1591 + $0x2d8] sm:$0xff]
      %v1684 = vld [vmem:[%s1591 + $0x2e0] sm:$0xff]
      %v1685 = vld [vmem:[%s1591 + $0x2e8] sm:$0xff]
      %v1686 = vld [vmem:[%s1591 + $0x2f0] sm:$0xff]
      %v1687 = vld [vmem:[%s1591 + $0x2f8] sm:$0xff]
      %v1688 = vld [vmem:[%s1591 + $0x300] sm:$0xff]
      %v1689 = vld [vmem:[%s1591 + $0x308] sm:$0xff]
      %v1690 = vld [vmem:[%s1591 + $0x310] sm:$0xff]
      %v1691 = vld [vmem:[%s1591 + $0x318] sm:$0xff]
      %v1692 = vld [vmem:[%s1591 + $0x320] sm:$0xff]
      %v1693 = vld [vmem:[%s1591 + $0x328] sm:$0xff]
      %v1694 = vld [vmem:[%s1591 + $0x330] sm:$0xff]
      %v1695 = vld [vmem:[%s1591 + $0x338] sm:$0xff]
      %v1696 = vld [vmem:[%s1591 + $0x340] sm:$0xff]
      %v1697 = vld [vmem:[%s1591 + $0x348] sm:$0xff]
      %v1698 = vld [vmem:[%s1591 + $0x350] sm:$0xff]
      %v1699 = vld [vmem:[%s1591 + $0x358] sm:$0xff]
      %v1700 = vld [vmem:[%s1591 + $0x360] sm:$0xff]
      %v1701 = vld [vmem:[%s1591 + $0x368] sm:$0xff]
      %v1702 = vld [vmem:[%s1591 + $0x370] sm:$0xff]
      %v1703 = vld [vmem:[%s1591 + $0x378] sm:$0xff]
      %v1704 = vld [vmem:[%s1591 + $0x380] sm:$0xff]
      %v1705 = vld [vmem:[%s1591 + $0x388] sm:$0xff]
      %v1706 = vld [vmem:[%s1591 + $0x390] sm:$0xff]
      %v1707 = vld [vmem:[%s1591 + $0x398] sm:$0xff]
      %v1708 = vld [vmem:[%s1591 + $0x3a0] sm:$0xff]
      %v1709 = vld [vmem:[%s1591 + $0x3a8] sm:$0xff]
      %v1710 = vld [vmem:[%s1591 + $0x3b0] sm:$0xff]
      %v1711 = vld [vmem:[%s1591 + $0x3b8] sm:$0xff]
      %v1712 = vld [vmem:[%s1591 + $0x3c0] sm:$0xff]
      %v1713 = vld [vmem:[%s1591 + $0x3c8] sm:$0xff]
      %v1714 = vld [vmem:[%s1591 + $0x3d0] sm:$0xff]
      %v1715 = vld [vmem:[%s1591 + $0x3d8] sm:$0xff]
      %v1716 = vld [vmem:[%s1591 + $0x3e0] sm:$0xff]
      %v1717 = vld [vmem:[%s1591 + $0x3e8] sm:$0xff]
      %v1718 = vld [vmem:[%s1591 + $0x3f0] sm:$0xff]
      %v1719 = vld [vmem:[%s1591 + $0x3f8] sm:$0xff]
      %v1720 = vld [vmem:[%s328] sm:$0xf]
      %v1721 = vld [vmem:[%s328 + $0x4] sm:$0x1]
      %v1722 = vld [vmem:[%s328 + $0x8] sm:$0xf]
      %v1723 = vld [vmem:[%s328 + $0xc] sm:$0x1]
      %v1724 = vld [vmem:[%s328 + $0x10] sm:$0xf]
      %v1725 = vld [vmem:[%s328 + $0x14] sm:$0x1]
      %v1726 = vld [vmem:[%s328 + $0x18] sm:$0xf]
      %v1727 = vld [vmem:[%s328 + $0x1c] sm:$0x1]
      %v1728 = vld [vmem:[%s328 + $0x20] sm:$0xf]
      %v1729 = vld [vmem:[%s328 + $0x24] sm:$0x1]
      %v1730 = vld [vmem:[%s328 + $0x28] sm:$0xf]
      %v1731 = vld [vmem:[%s328 + $0x2c] sm:$0x1]
      %v1732 = vld [vmem:[%s328 + $0x30] sm:$0xf]
      %v1733 = vld [vmem:[%s328 + $0x34] sm:$0x1]
      %v1734 = vld [vmem:[%s328 + $0x38] sm:$0xf]
      %v1735 = vld [vmem:[%s328 + $0x3c] sm:$0x1]
      %v1736 = vld [vmem:[%s328] sm:$0xe]
      %v1737 = vld [vmem:[%s328 + $0x8] sm:$0xe]
      %v1738 = vld [vmem:[%s328 + $0x10] sm:$0xe]
      %v1739 = vld [vmem:[%s328 + $0x18] sm:$0xe]
      %v1740 = vld [vmem:[%s328 + $0x20] sm:$0xe]
      %v1741 = vld [vmem:[%s328 + $0x28] sm:$0xe]
      %v1742 = vld [vmem:[%s328 + $0x30] sm:$0xe]
      %v1743 = vld [vmem:[%s328 + $0x38] sm:$0xe]
      %v1744 = vld [vmem:[%s348] sm:$0xf]
      %v1745 = vld [vmem:[%s348 + $0x4] sm:$0x1]
      %v1746 = vld [vmem:[%s348 + $0x8] sm:$0xf]
      %v1747 = vld [vmem:[%s348 + $0xc] sm:$0x1]
      %v1748 = vld [vmem:[%s348 + $0x10] sm:$0xf]
      %v1749 = vld [vmem:[%s348 + $0x14] sm:$0x1]
      %v1750 = vld [vmem:[%s348 + $0x18] sm:$0xf]
      %v1751 = vld [vmem:[%s348 + $0x1c] sm:$0x1]
      %v1752 = vld [vmem:[%s348 + $0x20] sm:$0xf]
      %v1753 = vld [vmem:[%s348 + $0x24] sm:$0x1]
      %v1754 = vld [vmem:[%s348 + $0x28] sm:$0xf]
      %v1755 = vld [vmem:[%s348 + $0x2c] sm:$0x1]
      %v1756 = vld [vmem:[%s348 + $0x30] sm:$0xf]
      %v1757 = vld [vmem:[%s348 + $0x34] sm:$0x1]
      %v1758 = vld [vmem:[%s348 + $0x38] sm:$0xf]
      %v1759 = vld [vmem:[%s348 + $0x3c] sm:$0x1]
      %v1760 = vld [vmem:[%s348] sm:$0xe]
      %v1761 = vld [vmem:[%s348 + $0x8] sm:$0xe]
      %v1762 = vld [vmem:[%s348 + $0x10] sm:$0xe]
      %v1763 = vld [vmem:[%s348 + $0x18] sm:$0xe]
      %v1764 = vld [vmem:[%s348 + $0x20] sm:$0xe]
      %v1765 = vld [vmem:[%s348 + $0x28] sm:$0xe]
      %v1766 = vld [vmem:[%s348 + $0x30] sm:$0xe]
      %v1767 = vld [vmem:[%s348 + $0x38] sm:$0xe]
      %v1784 = vunpack.c.l.b16 %v1720
      %v1785 = vunpack.c.l.b16 %v1721
      %v1786 = vunpack.c.l.b16 %v1722
      %v1787 = vunpack.c.l.b16 %v1723
      %v1788 = vunpack.c.l.b16 %v1724
      %v1789 = vunpack.c.l.b16 %v1725
      %v1790 = vunpack.c.l.b16 %v1726
      %v1791 = vunpack.c.l.b16 %v1727
      %v1792 = vunpack.c.l.b16 %v1728
      %v1793 = vunpack.c.l.b16 %v1729
      %v1794 = vunpack.c.l.b16 %v1730
      %v1795 = vunpack.c.l.b16 %v1731
      %v1796 = vunpack.c.l.b16 %v1732
      %v1797 = vunpack.c.l.b16 %v1733
      %v1798 = vunpack.c.l.b16 %v1734
      %v1799 = vunpack.c.l.b16 %v1735
      %v1808 = vunpack.c.l.b16 %v1736
      %v1809 = vunpack.c.l.b16 %v1737
      %v1810 = vunpack.c.l.b16 %v1738
      %v1811 = vunpack.c.l.b16 %v1739
      %v1812 = vunpack.c.l.b16 %v1740
      %v1813 = vunpack.c.l.b16 %v1741
      %v1814 = vunpack.c.l.b16 %v1742
      %v1815 = vunpack.c.l.b16 %v1743
      %v1816 = vpack.c.b16 %v1785, %v1808
      %v1817 = vpack.c.b16 %v1787, %v1809
      %v1818 = vpack.c.b16 %v1789, %v1810
      %v1819 = vpack.c.b16 %v1791, %v1811
      %v1820 = vpack.c.b16 %v1793, %v1812
      %v1821 = vpack.c.b16 %v1795, %v1813
      %v1822 = vpack.c.b16 %v1797, %v1814
      %v1823 = vpack.c.b16 %v1799, %v1815
      %v1825 = vshrl.u32 %v1816, 16
      %v1827 = vshll.u32 %v1816, 16
      %v1829 = vrot.slane %v1827, 1
      %v1830 = vor.u32 %v1825, %v1829
      %v1832 = vshrl.u32 %v1817, 16
      %v1834 = vshll.u32 %v1817, 16
      %v1836 = vrot.slane %v1834, 1
      %v1837 = vor.u32 %v1832, %v1836
      %v1839 = vshrl.u32 %v1818, 16
      %v1841 = vshll.u32 %v1818, 16
      %v1843 = vrot.slane %v1841, 1
      %v1844 = vor.u32 %v1839, %v1843
      %v1846 = vshrl.u32 %v1819, 16
      %v1848 = vshll.u32 %v1819, 16
      %v1850 = vrot.slane %v1848, 1
      %v1851 = vor.u32 %v1846, %v1850
      %v1853 = vshrl.u32 %v1820, 16
      %v1855 = vshll.u32 %v1820, 16
      %v1857 = vrot.slane %v1855, 1
      %v1858 = vor.u32 %v1853, %v1857
      %v1860 = vshrl.u32 %v1821, 16
      %v1862 = vshll.u32 %v1821, 16
      %v1864 = vrot.slane %v1862, 1
      %v1865 = vor.u32 %v1860, %v1864
      %v1867 = vshrl.u32 %v1822, 16
      %v1869 = vshll.u32 %v1822, 16
      %v1871 = vrot.slane %v1869, 1
      %v1872 = vor.u32 %v1867, %v1871
      %v1874 = vshrl.u32 %v1823, 16
      %v1876 = vshll.u32 %v1823, 16
      %v1878 = vrot.slane %v1876, 1
      %v1879 = vor.u32 %v1874, %v1878
      %v1896 = vunpack.c.l.b16 %v1744
      %v1897 = vunpack.c.l.b16 %v1745
      %v1898 = vunpack.c.l.b16 %v1746
      %v1899 = vunpack.c.l.b16 %v1747
      %v1900 = vunpack.c.l.b16 %v1748
      %v1901 = vunpack.c.l.b16 %v1749
      %v1902 = vunpack.c.l.b16 %v1750
      %v1903 = vunpack.c.l.b16 %v1751
      %v1904 = vunpack.c.l.b16 %v1752
      %v1905 = vunpack.c.l.b16 %v1753
      %v1906 = vunpack.c.l.b16 %v1754
      %v1907 = vunpack.c.l.b16 %v1755
      %v1908 = vunpack.c.l.b16 %v1756
      %v1909 = vunpack.c.l.b16 %v1757
      %v1910 = vunpack.c.l.b16 %v1758
      %v1911 = vunpack.c.l.b16 %v1759
      %v1920 = vunpack.c.l.b16 %v1760
      %v1921 = vunpack.c.l.b16 %v1761
      %v1922 = vunpack.c.l.b16 %v1762
      %v1923 = vunpack.c.l.b16 %v1763
      %v1924 = vunpack.c.l.b16 %v1764
      %v1925 = vunpack.c.l.b16 %v1765
      %v1926 = vunpack.c.l.b16 %v1766
      %v1927 = vunpack.c.l.b16 %v1767
      %v1928 = vpack.c.b16 %v1897, %v1920
      %v1929 = vpack.c.b16 %v1899, %v1921
      %v1930 = vpack.c.b16 %v1901, %v1922
      %v1931 = vpack.c.b16 %v1903, %v1923
      %v1932 = vpack.c.b16 %v1905, %v1924
      %v1933 = vpack.c.b16 %v1907, %v1925
      %v1934 = vpack.c.b16 %v1909, %v1926
      %v1935 = vpack.c.b16 %v1911, %v1927
      %v1937 = vshrl.u32 %v1928, 16
      %v1939 = vshll.u32 %v1928, 16
      %v1941 = vrot.slane %v1939, 1
      %v1942 = vor.u32 %v1937, %v1941
      %v1944 = vshrl.u32 %v1929, 16
      %v1946 = vshll.u32 %v1929, 16
      %v1948 = vrot.slane %v1946, 1
      %v1949 = vor.u32 %v1944, %v1948
      %v1951 = vshrl.u32 %v1930, 16
      %v1953 = vshll.u32 %v1930, 16
      %v1955 = vrot.slane %v1953, 1
      %v1956 = vor.u32 %v1951, %v1955
      %v1958 = vshrl.u32 %v1931, 16
      %v1960 = vshll.u32 %v1931, 16
      %v1962 = vrot.slane %v1960, 1
      %v1963 = vor.u32 %v1958, %v1962
      %v1965 = vshrl.u32 %v1932, 16
      %v1967 = vshll.u32 %v1932, 16
      %v1969 = vrot.slane %v1967, 1
      %v1970 = vor.u32 %v1965, %v1969
      %v1972 = vshrl.u32 %v1933, 16
      %v1974 = vshll.u32 %v1933, 16
      %v1976 = vrot.slane %v1974, 1
      %v1977 = vor.u32 %v1972, %v1976
      %v1979 = vshrl.u32 %v1934, 16
      %v1981 = vshll.u32 %v1934, 16
      %v1983 = vrot.slane %v1981, 1
      %v1984 = vor.u32 %v1979, %v1983
      %v1986 = vshrl.u32 %v1935, 16
      %v1988 = vshll.u32 %v1935, 16
      %v1990 = vrot.slane %v1988, 1
      %v1991 = vor.u32 %v1986, %v1990
      %v1992 = vunpack.c.l.b16 %v1830
      %v1993 = vunpack.c.l.b16 %v1942
      %v1994 = vunpack.c.h.b16 %v1830
      %v1995 = vunpack.c.h.b16 %v1942
      %v1996 = vunpack.c.l.b16 %v1837
      %v1997 = vunpack.c.l.b16 %v1949
      %v1998 = vunpack.c.h.b16 %v1837
      %v1999 = vunpack.c.h.b16 %v1949
      %v2000 = vunpack.c.l.b16 %v1844
      %v2001 = vunpack.c.l.b16 %v1956
      %v2002 = vunpack.c.h.b16 %v1844
      %v2003 = vunpack.c.h.b16 %v1956
      %v2004 = vunpack.c.l.b16 %v1851
      %v2005 = vunpack.c.l.b16 %v1963
      %v2006 = vunpack.c.h.b16 %v1851
      %v2007 = vunpack.c.h.b16 %v1963
      %v2008 = vunpack.c.l.b16 %v1858
      %v2009 = vunpack.c.l.b16 %v1970
      %v2010 = vunpack.c.h.b16 %v1858
      %v2011 = vunpack.c.h.b16 %v1970
      %v2012 = vunpack.c.l.b16 %v1865
      %v2013 = vunpack.c.l.b16 %v1977
      %v2014 = vunpack.c.h.b16 %v1865
      %v2015 = vunpack.c.h.b16 %v1977
      %v2016 = vunpack.c.l.b16 %v1872
      %v2017 = vunpack.c.l.b16 %v1984
      %v2018 = vunpack.c.h.b16 %v1872
      %v2019 = vunpack.c.h.b16 %v1984
      %v2020 = vunpack.c.l.b16 %v1879
      %v2021 = vunpack.c.l.b16 %v1991
      %v2022 = vunpack.c.h.b16 %v1879
      %v2023 = vunpack.c.h.b16 %v1991
      %v2024 = vpack.c.b16 %v1992, %v1784
      %v2025 = vpack.c.b16 %v1993, %v1896
      %v2026 = vpack.c.b16 %v1994, %v1785
      %v2027 = vpack.c.b16 %v1995, %v1897
      %v2028 = vpack.c.b16 %v1996, %v1786
      %v2029 = vpack.c.b16 %v1997, %v1898
      %v2030 = vpack.c.b16 %v1998, %v1787
      %v2031 = vpack.c.b16 %v1999, %v1899
      %v2032 = vpack.c.b16 %v2000, %v1788
      %v2033 = vpack.c.b16 %v2001, %v1900
      %v2034 = vpack.c.b16 %v2002, %v1789
      %v2035 = vpack.c.b16 %v2003, %v1901
      %v2036 = vpack.c.b16 %v2004, %v1790
      %v2037 = vpack.c.b16 %v2005, %v1902
      %v2038 = vpack.c.b16 %v2006, %v1791
      %v2039 = vpack.c.b16 %v2007, %v1903
      %v2040 = vpack.c.b16 %v2008, %v1792
      %v2041 = vpack.c.b16 %v2009, %v1904
      %v2042 = vpack.c.b16 %v2010, %v1793
      %v2043 = vpack.c.b16 %v2011, %v1905
      %v2044 = vpack.c.b16 %v2012, %v1794
      %v2045 = vpack.c.b16 %v2013, %v1906
      %v2046 = vpack.c.b16 %v2014, %v1795
      %v2047 = vpack.c.b16 %v2015, %v1907
      %v2048 = vpack.c.b16 %v2016, %v1796
      %v2049 = vpack.c.b16 %v2017, %v1908
      %v2050 = vpack.c.b16 %v2018, %v1797
      %v2051 = vpack.c.b16 %v2019, %v1909
      %v2052 = vpack.c.b16 %v2020, %v1798
      %v2053 = vpack.c.b16 %v2021, %v1910
      %v2054 = vpack.c.b16 %v2022, %v1799
      %v2055 = vpack.c.b16 %v2023, %v1911
      %vm2056 = vsmask.f32 3328
      %vm2057 = vsmask.f32 7440
      %vm2058 = vmor %vm2056, %vm2057
      %v2060 = vshrl.u32 %v2024, 16
      %v2062 = vrot.slane %v2060, 4
      %v2063 = vshll.u32 %v2024, 16
      %v2065 = vrot.slane %v2063, 5
      %v2066 = vor.u32 %v2062, %v2065
      %v2067 = vrot.slane %v2066, 4
      %v2069 = vshll.u32 %v2026, 16
      %v2071 = vrot.slane %v2069, 5
      %v2072 = vsel %vm2058, %v2067, %v2071
      %v2074 = vshrl.u32 %v2025, 16
      %v2076 = vrot.slane %v2074, 4
      %v2077 = vshll.u32 %v2025, 16
      %v2079 = vrot.slane %v2077, 5
      %v2080 = vor.u32 %v2076, %v2079
      %v2081 = vrot.slane %v2080, 4
      %v2083 = vshll.u32 %v2027, 16
      %v2085 = vrot.slane %v2083, 5
      %v2086 = vsel %vm2058, %v2081, %v2085
      %v2088 = vshrl.u32 %v2028, 16
      %v2090 = vrot.slane %v2088, 4
      %v2091 = vshll.u32 %v2028, 16
      %v2093 = vrot.slane %v2091, 5
      %v2094 = vor.u32 %v2090, %v2093
      %v2095 = vrot.slane %v2094, 4
      %v2097 = vshll.u32 %v2030, 16
      %v2099 = vrot.slane %v2097, 5
      %v2100 = vsel %vm2058, %v2095, %v2099
      %v2102 = vshrl.u32 %v2029, 16
      %v2104 = vrot.slane %v2102, 4
      %v2105 = vshll.u32 %v2029, 16
      %v2107 = vrot.slane %v2105, 5
      %v2108 = vor.u32 %v2104, %v2107
      %v2109 = vrot.slane %v2108, 4
      %v2111 = vshll.u32 %v2031, 16
      %v2113 = vrot.slane %v2111, 5
      %v2114 = vsel %vm2058, %v2109, %v2113
      %v2116 = vshrl.u32 %v2032, 16
      %v2118 = vrot.slane %v2116, 4
      %v2119 = vshll.u32 %v2032, 16
      %v2121 = vrot.slane %v2119, 5
      %v2122 = vor.u32 %v2118, %v2121
      %v2123 = vrot.slane %v2122, 4
      %v2125 = vshll.u32 %v2034, 16
      %v2127 = vrot.slane %v2125, 5
      %v2128 = vsel %vm2058, %v2123, %v2127
      %v2130 = vshrl.u32 %v2033, 16
      %v2132 = vrot.slane %v2130, 4
      %v2133 = vshll.u32 %v2033, 16
      %v2135 = vrot.slane %v2133, 5
      %v2136 = vor.u32 %v2132, %v2135
      %v2137 = vrot.slane %v2136, 4
      %v2139 = vshll.u32 %v2035, 16
      %v2141 = vrot.slane %v2139, 5
      %v2142 = vsel %vm2058, %v2137, %v2141
      %v2144 = vshrl.u32 %v2036, 16
      %v2146 = vrot.slane %v2144, 4
      %v2147 = vshll.u32 %v2036, 16
      %v2149 = vrot.slane %v2147, 5
      %v2150 = vor.u32 %v2146, %v2149
      %v2151 = vrot.slane %v2150, 4
      %v2153 = vshll.u32 %v2038, 16
      %v2155 = vrot.slane %v2153, 5
      %v2156 = vsel %vm2058, %v2151, %v2155
      %v2158 = vshrl.u32 %v2037, 16
      %v2160 = vrot.slane %v2158, 4
      %v2161 = vshll.u32 %v2037, 16
      %v2163 = vrot.slane %v2161, 5
      %v2164 = vor.u32 %v2160, %v2163
      %v2165 = vrot.slane %v2164, 4
      %v2167 = vshll.u32 %v2039, 16
      %v2169 = vrot.slane %v2167, 5
      %v2170 = vsel %vm2058, %v2165, %v2169
      %v2172 = vshrl.u32 %v2040, 16
      %v2174 = vrot.slane %v2172, 4
      %v2175 = vshll.u32 %v2040, 16
      %v2177 = vrot.slane %v2175, 5
      %v2178 = vor.u32 %v2174, %v2177
      %v2179 = vrot.slane %v2178, 4
      %v2181 = vshll.u32 %v2042, 16
      %v2183 = vrot.slane %v2181, 5
      %v2184 = vsel %vm2058, %v2179, %v2183
      %v2186 = vshrl.u32 %v2041, 16
      %v2188 = vrot.slane %v2186, 4
      %v2189 = vshll.u32 %v2041, 16
      %v2191 = vrot.slane %v2189, 5
      %v2192 = vor.u32 %v2188, %v2191
      %v2193 = vrot.slane %v2192, 4
      %v2195 = vshll.u32 %v2043, 16
      %v2197 = vrot.slane %v2195, 5
      %v2198 = vsel %vm2058, %v2193, %v2197
      %v2200 = vshrl.u32 %v2044, 16
      %v2202 = vrot.slane %v2200, 4
      %v2203 = vshll.u32 %v2044, 16
      %v2205 = vrot.slane %v2203, 5
      %v2206 = vor.u32 %v2202, %v2205
      %v2207 = vrot.slane %v2206, 4
      %v2209 = vshll.u32 %v2046, 16
      %v2211 = vrot.slane %v2209, 5
      %v2212 = vsel %vm2058, %v2207, %v2211
      %v2214 = vshrl.u32 %v2045, 16
      %v2216 = vrot.slane %v2214, 4
      %v2217 = vshll.u32 %v2045, 16
      %v2219 = vrot.slane %v2217, 5
      %v2220 = vor.u32 %v2216, %v2219
      %v2221 = vrot.slane %v2220, 4
      %v2223 = vshll.u32 %v2047, 16
      %v2225 = vrot.slane %v2223, 5
      %v2226 = vsel %vm2058, %v2221, %v2225
      %v2228 = vshrl.u32 %v2048, 16
      %v2230 = vrot.slane %v2228, 4
      %v2231 = vshll.u32 %v2048, 16
      %v2233 = vrot.slane %v2231, 5
      %v2234 = vor.u32 %v2230, %v2233
      %v2235 = vrot.slane %v2234, 4
      %v2237 = vshll.u32 %v2050, 16
      %v2239 = vrot.slane %v2237, 5
      %v2240 = vsel %vm2058, %v2235, %v2239
      %v2242 = vshrl.u32 %v2049, 16
      %v2244 = vrot.slane %v2242, 4
      %v2245 = vshll.u32 %v2049, 16
      %v2247 = vrot.slane %v2245, 5
      %v2248 = vor.u32 %v2244, %v2247
      %v2249 = vrot.slane %v2248, 4
      %v2251 = vshll.u32 %v2051, 16
      %v2253 = vrot.slane %v2251, 5
      %v2254 = vsel %vm2058, %v2249, %v2253
      %v2256 = vshrl.u32 %v2052, 16
      %v2258 = vrot.slane %v2256, 4
      %v2259 = vshll.u32 %v2052, 16
      %v2261 = vrot.slane %v2259, 5
      %v2262 = vor.u32 %v2258, %v2261
      %v2263 = vrot.slane %v2262, 4
      %v2265 = vshll.u32 %v2054, 16
      %v2267 = vrot.slane %v2265, 5
      %v2268 = vsel %vm2058, %v2263, %v2267
      %v2270 = vshrl.u32 %v2053, 16
      %v2272 = vrot.slane %v2270, 4
      %v2273 = vshll.u32 %v2053, 16
      %v2275 = vrot.slane %v2273, 5
      %v2276 = vor.u32 %v2272, %v2275
      %v2277 = vrot.slane %v2276, 4
      %v2279 = vshll.u32 %v2055, 16
      %v2281 = vrot.slane %v2279, 5
      %v2282 = vsel %vm2058, %v2277, %v2281
      %v2283 = vunpack.c.l.b16 %v2072
      %v2284 = vunpack.c.h.b16 %v2072
      %v2285 = vunpack.c.l.b16 %v2086
      %v2286 = vunpack.c.h.b16 %v2086
      %v2287 = vunpack.c.l.b16 %v2100
      %v2288 = vunpack.c.h.b16 %v2100
      %v2289 = vunpack.c.l.b16 %v2114
      %v2290 = vunpack.c.h.b16 %v2114
      %v2291 = vunpack.c.l.b16 %v2128
      %v2292 = vunpack.c.h.b16 %v2128
      %v2293 = vunpack.c.l.b16 %v2142
      %v2294 = vunpack.c.h.b16 %v2142
      %v2295 = vunpack.c.l.b16 %v2156
      %v2296 = vunpack.c.h.b16 %v2156
      %v2297 = vunpack.c.l.b16 %v2170
      %v2298 = vunpack.c.h.b16 %v2170
      %v2299 = vunpack.c.l.b16 %v2184
      %v2300 = vunpack.c.h.b16 %v2184
      %v2301 = vunpack.c.l.b16 %v2198
      %v2302 = vunpack.c.h.b16 %v2198
      %v2303 = vunpack.c.l.b16 %v2212
      %v2304 = vunpack.c.h.b16 %v2212
      %v2305 = vunpack.c.l.b16 %v2226
      %v2306 = vunpack.c.h.b16 %v2226
      %v2307 = vunpack.c.l.b16 %v2240
      %v2308 = vunpack.c.h.b16 %v2240
      %v2309 = vunpack.c.l.b16 %v2254
      %v2310 = vunpack.c.h.b16 %v2254
      %v2311 = vunpack.c.l.b16 %v2268
      %v2312 = vunpack.c.h.b16 %v2268
      %v2313 = vunpack.c.l.b16 %v2282
      %v2314 = vunpack.c.h.b16 %v2282
      %v2315 = vpack.c.b16 %v2287, %v2283
      %v2316 = vpack.c.b16 %v2288, %v2284
      %v2317 = vpack.c.b16 %v2289, %v2285
      %v2318 = vpack.c.b16 %v2290, %v2286
      %v2319 = vpack.c.b16 %v2295, %v2291
      %v2320 = vpack.c.b16 %v2296, %v2292
      %v2321 = vpack.c.b16 %v2297, %v2293
      %v2322 = vpack.c.b16 %v2298, %v2294
      %v2323 = vpack.c.b16 %v2303, %v2299
      %v2324 = vpack.c.b16 %v2304, %v2300
      %v2325 = vpack.c.b16 %v2305, %v2301
      %v2326 = vpack.c.b16 %v2306, %v2302
      %v2327 = vpack.c.b16 %v2311, %v2307
      %v2328 = vpack.c.b16 %v2312, %v2308
      %v2329 = vpack.c.b16 %v2313, %v2309
      %v2330 = vpack.c.b16 %v2314, %v2310
      %v2475 = vunpack.c.l.b16 %v1592
      %v2476 = vunpack.c.h.b16 %v1592
      %v2477 = vunpack.c.l.b16 %v1593
      %v2478 = vunpack.c.h.b16 %v1593
      %v2479 = vunpack.c.l.b16 %v1594
      %v2480 = vunpack.c.h.b16 %v1594
      %v2481 = vunpack.c.l.b16 %v1595
      %v2482 = vunpack.c.h.b16 %v1595
      %v2483 = vunpack.c.l.b16 %v1596
      %v2484 = vunpack.c.h.b16 %v1596
      %v2485 = vunpack.c.l.b16 %v1597
      %v2486 = vunpack.c.h.b16 %v1597
      %v2487 = vunpack.c.l.b16 %v1598
      %v2488 = vunpack.c.h.b16 %v1598
      %v2489 = vunpack.c.l.b16 %v1599
      %v2490 = vunpack.c.h.b16 %v1599
      %v2491 = vunpack.c.l.b16 %v1600
      %v2492 = vunpack.c.h.b16 %v1600
      %v2493 = vunpack.c.l.b16 %v1601
      %v2494 = vunpack.c.h.b16 %v1601
      %v2495 = vunpack.c.l.b16 %v1602
      %v2496 = vunpack.c.h.b16 %v1602
      %v2497 = vunpack.c.l.b16 %v1603
      %v2498 = vunpack.c.h.b16 %v1603
      %v2499 = vunpack.c.l.b16 %v1604
      %v2500 = vunpack.c.h.b16 %v1604
      %v2501 = vunpack.c.l.b16 %v1605
      %v2502 = vunpack.c.h.b16 %v1605
      %v2503 = vunpack.c.l.b16 %v1606
      %v2504 = vunpack.c.h.b16 %v1606
      %v2505 = vunpack.c.l.b16 %v1607
      %v2506 = vunpack.c.h.b16 %v1607
      %v2507 = vunpack.c.l.b16 %v1608
      %v2508 = vunpack.c.h.b16 %v1608
      %v2509 = vunpack.c.l.b16 %v1609
      %v2510 = vunpack.c.h.b16 %v1609
      %v2511 = vunpack.c.l.b16 %v1610
      %v2512 = vunpack.c.h.b16 %v1610
      %v2513 = vunpack.c.l.b16 %v1611
      %v2514 = vunpack.c.h.b16 %v1611
      %v2515 = vunpack.c.l.b16 %v1612
      %v2516 = vunpack.c.h.b16 %v1612
      %v2517 = vunpack.c.l.b16 %v1613
      %v2518 = vunpack.c.h.b16 %v1613
      %v2519 = vunpack.c.l.b16 %v1614
      %v2520 = vunpack.c.h.b16 %v1614
      %v2521 = vunpack.c.l.b16 %v1615
      %v2522 = vunpack.c.h.b16 %v1615
      %v2523 = vunpack.c.l.b16 %v1616
      %v2524 = vunpack.c.h.b16 %v1616
      %v2525 = vunpack.c.l.b16 %v1617
      %v2526 = vunpack.c.h.b16 %v1617
      %v2527 = vunpack.c.l.b16 %v1618
      %v2528 = vunpack.c.h.b16 %v1618
      %v2529 = vunpack.c.l.b16 %v1619
      %v2530 = vunpack.c.h.b16 %v1619
      %v2531 = vunpack.c.l.b16 %v1620
      %v2532 = vunpack.c.h.b16 %v1620
      %v2533 = vunpack.c.l.b16 %v1621
      %v2534 = vunpack.c.h.b16 %v1621
      %v2535 = vunpack.c.l.b16 %v1622
      %v2536 = vunpack.c.h.b16 %v1622
      %v2537 = vunpack.c.l.b16 %v1623
      %v2538 = vunpack.c.h.b16 %v1623
      %v2539 = vunpack.c.l.b16 %v1624
      %v2540 = vunpack.c.h.b16 %v1624
      %v2541 = vunpack.c.l.b16 %v1625
      %v2542 = vunpack.c.h.b16 %v1625
      %v2543 = vunpack.c.l.b16 %v1626
      %v2544 = vunpack.c.h.b16 %v1626
      %v2545 = vunpack.c.l.b16 %v1627
      %v2546 = vunpack.c.h.b16 %v1627
      %v2547 = vunpack.c.l.b16 %v1628
      %v2548 = vunpack.c.h.b16 %v1628
      %v2549 = vunpack.c.l.b16 %v1629
      %v2550 = vunpack.c.h.b16 %v1629
      %v2551 = vunpack.c.l.b16 %v1630
      %v2552 = vunpack.c.h.b16 %v1630
      %v2553 = vunpack.c.l.b16 %v1631
      %v2554 = vunpack.c.h.b16 %v1631
      %v2555 = vunpack.c.l.b16 %v1632
      %v2556 = vunpack.c.h.b16 %v1632
      %v2557 = vunpack.c.l.b16 %v1633
      %v2558 = vunpack.c.h.b16 %v1633
      %v2559 = vunpack.c.l.b16 %v1634
      %v2560 = vunpack.c.h.b16 %v1634
      %v2561 = vunpack.c.l.b16 %v1635
      %v2562 = vunpack.c.h.b16 %v1635
      %v2563 = vunpack.c.l.b16 %v1636
      %v2564 = vunpack.c.h.b16 %v1636
      %v2565 = vunpack.c.l.b16 %v1637
      %v2566 = vunpack.c.h.b16 %v1637
      %v2567 = vunpack.c.l.b16 %v1638
      %v2568 = vunpack.c.h.b16 %v1638
      %v2569 = vunpack.c.l.b16 %v1639
      %v2570 = vunpack.c.h.b16 %v1639
      %v2571 = vunpack.c.l.b16 %v1640
      %v2572 = vunpack.c.h.b16 %v1640
      %v2573 = vunpack.c.l.b16 %v1641
      %v2574 = vunpack.c.h.b16 %v1641
      %v2575 = vunpack.c.l.b16 %v1642
      %v2576 = vunpack.c.h.b16 %v1642
      %v2577 = vunpack.c.l.b16 %v1643
      %v2578 = vunpack.c.h.b16 %v1643
      %v2579 = vunpack.c.l.b16 %v1644
      %v2580 = vunpack.c.h.b16 %v1644
      %v2581 = vunpack.c.l.b16 %v1645
      %v2582 = vunpack.c.h.b16 %v1645
      %v2583 = vunpack.c.l.b16 %v1646
      %v2584 = vunpack.c.h.b16 %v1646
      %v2585 = vunpack.c.l.b16 %v1647
      %v2586 = vunpack.c.h.b16 %v1647
      %v2587 = vunpack.c.l.b16 %v1648
      %v2588 = vunpack.c.h.b16 %v1648
      %v2589 = vunpack.c.l.b16 %v1649
      %v2590 = vunpack.c.h.b16 %v1649
      %v2591 = vunpack.c.l.b16 %v1650
      %v2592 = vunpack.c.h.b16 %v1650
      %v2593 = vunpack.c.l.b16 %v1651
      %v2594 = vunpack.c.h.b16 %v1651
      %v2595 = vunpack.c.l.b16 %v1652
      %v2596 = vunpack.c.h.b16 %v1652
      %v2597 = vunpack.c.l.b16 %v1653
      %v2598 = vunpack.c.h.b16 %v1653
      %v2599 = vunpack.c.l.b16 %v1654
      %v2600 = vunpack.c.h.b16 %v1654
      %v2601 = vunpack.c.l.b16 %v1655
      %v2602 = vunpack.c.h.b16 %v1655
      %v2603 = vunpack.c.l.b16 %v1656
      %v2604 = vunpack.c.h.b16 %v1656
      %v2605 = vunpack.c.l.b16 %v1657
      %v2606 = vunpack.c.h.b16 %v1657
      %v2607 = vunpack.c.l.b16 %v1658
      %v2608 = vunpack.c.h.b16 %v1658
      %v2609 = vunpack.c.l.b16 %v1659
      %v2610 = vunpack.c.h.b16 %v1659
      %v2611 = vunpack.c.l.b16 %v1660
      %v2612 = vunpack.c.h.b16 %v1660
      %v2613 = vunpack.c.l.b16 %v1661
      %v2614 = vunpack.c.h.b16 %v1661
      %v2615 = vunpack.c.l.b16 %v1662
      %v2616 = vunpack.c.h.b16 %v1662
      %v2617 = vunpack.c.l.b16 %v1663
      %v2618 = vunpack.c.h.b16 %v1663
      %v2619 = vunpack.c.l.b16 %v1664
      %v2620 = vunpack.c.h.b16 %v1664
      %v2621 = vunpack.c.l.b16 %v1665
      %v2622 = vunpack.c.h.b16 %v1665
      %v2623 = vunpack.c.l.b16 %v1666
      %v2624 = vunpack.c.h.b16 %v1666
      %v2625 = vunpack.c.l.b16 %v1667
      %v2626 = vunpack.c.h.b16 %v1667
      %v2627 = vunpack.c.l.b16 %v1668
      %v2628 = vunpack.c.h.b16 %v1668
      %v2629 = vunpack.c.l.b16 %v1669
      %v2630 = vunpack.c.h.b16 %v1669
      %v2631 = vunpack.c.l.b16 %v1670
      %v2632 = vunpack.c.h.b16 %v1670
      %v2633 = vunpack.c.l.b16 %v1671
      %v2634 = vunpack.c.h.b16 %v1671
      %v2635 = vunpack.c.l.b16 %v1672
      %v2636 = vunpack.c.h.b16 %v1672
      %v2637 = vunpack.c.l.b16 %v1673
      %v2638 = vunpack.c.h.b16 %v1673
      %v2639 = vunpack.c.l.b16 %v1674
      %v2640 = vunpack.c.h.b16 %v1674
      %v2641 = vunpack.c.l.b16 %v1675
      %v2642 = vunpack.c.h.b16 %v1675
      %v2643 = vunpack.c.l.b16 %v1676
      %v2644 = vunpack.c.h.b16 %v1676
      %v2645 = vunpack.c.l.b16 %v1677
      %v2646 = vunpack.c.h.b16 %v1677
      %v2647 = vunpack.c.l.b16 %v1678
      %v2648 = vunpack.c.h.b16 %v1678
      %v2649 = vunpack.c.l.b16 %v1679
      %v2650 = vunpack.c.h.b16 %v1679
      %v2651 = vunpack.c.l.b16 %v1680
      %v2652 = vunpack.c.h.b16 %v1680
      %v2653 = vunpack.c.l.b16 %v1681
      %v2654 = vunpack.c.h.b16 %v1681
      %v2655 = vunpack.c.l.b16 %v1682
      %v2656 = vunpack.c.h.b16 %v1682
      %v2657 = vunpack.c.l.b16 %v1683
      %v2658 = vunpack.c.h.b16 %v1683
      %v2659 = vunpack.c.l.b16 %v1684
      %v2660 = vunpack.c.h.b16 %v1684
      %v2661 = vunpack.c.l.b16 %v1685
      %v2662 = vunpack.c.h.b16 %v1685
      %v2663 = vunpack.c.l.b16 %v1686
      %v2664 = vunpack.c.h.b16 %v1686
      %v2665 = vunpack.c.l.b16 %v1687
      %v2666 = vunpack.c.h.b16 %v1687
      %v2667 = vunpack.c.l.b16 %v1688
      %v2668 = vunpack.c.h.b16 %v1688
      %v2669 = vunpack.c.l.b16 %v1689
      %v2670 = vunpack.c.h.b16 %v1689
      %v2671 = vunpack.c.l.b16 %v1690
      %v2672 = vunpack.c.h.b16 %v1690
      %v2673 = vunpack.c.l.b16 %v1691
      %v2674 = vunpack.c.h.b16 %v1691
      %v2675 = vunpack.c.l.b16 %v1692
      %v2676 = vunpack.c.h.b16 %v1692
      %v2677 = vunpack.c.l.b16 %v1693
      %v2678 = vunpack.c.h.b16 %v1693
      %v2679 = vunpack.c.l.b16 %v1694
      %v2680 = vunpack.c.h.b16 %v1694
      %v2681 = vunpack.c.l.b16 %v1695
      %v2682 = vunpack.c.h.b16 %v1695
      %v2683 = vunpack.c.l.b16 %v1696
      %v2684 = vunpack.c.h.b16 %v1696
      %v2685 = vunpack.c.l.b16 %v1697
      %v2686 = vunpack.c.h.b16 %v1697
      %v2687 = vunpack.c.l.b16 %v1698
      %v2688 = vunpack.c.h.b16 %v1698
      %v2689 = vunpack.c.l.b16 %v1699
      %v2690 = vunpack.c.h.b16 %v1699
      %v2691 = vunpack.c.l.b16 %v1700
      %v2692 = vunpack.c.h.b16 %v1700
      %v2693 = vunpack.c.l.b16 %v1701
      %v2694 = vunpack.c.h.b16 %v1701
      %v2695 = vunpack.c.l.b16 %v1702
      %v2696 = vunpack.c.h.b16 %v1702
      %v2697 = vunpack.c.l.b16 %v1703
      %v2698 = vunpack.c.h.b16 %v1703
      %v2699 = vunpack.c.l.b16 %v1704
      %v2700 = vunpack.c.h.b16 %v1704
      %v2701 = vunpack.c.l.b16 %v1705
      %v2702 = vunpack.c.h.b16 %v1705
      %v2703 = vunpack.c.l.b16 %v1706
      %v2704 = vunpack.c.h.b16 %v1706
      %v2705 = vunpack.c.l.b16 %v1707
      %v2706 = vunpack.c.h.b16 %v1707
      %v2707 = vunpack.c.l.b16 %v1708
      %v2708 = vunpack.c.h.b16 %v1708
      %v2709 = vunpack.c.l.b16 %v1709
      %v2710 = vunpack.c.h.b16 %v1709
      %v2711 = vunpack.c.l.b16 %v1710
      %v2712 = vunpack.c.h.b16 %v1710
      %v2713 = vunpack.c.l.b16 %v1711
      %v2714 = vunpack.c.h.b16 %v1711
      %v2715 = vunpack.c.l.b16 %v1712
      %v2716 = vunpack.c.h.b16 %v1712
      %v2717 = vunpack.c.l.b16 %v1713
      %v2718 = vunpack.c.h.b16 %v1713
      %v2719 = vunpack.c.l.b16 %v1714
      %v2720 = vunpack.c.h.b16 %v1714
      %v2721 = vunpack.c.l.b16 %v1715
      %v2722 = vunpack.c.h.b16 %v1715
      %v2723 = vunpack.c.l.b16 %v1716
      %v2724 = vunpack.c.h.b16 %v1716
      %v2725 = vunpack.c.l.b16 %v1717
      %v2726 = vunpack.c.h.b16 %v1717
      %v2727 = vunpack.c.l.b16 %v1718
      %v2728 = vunpack.c.h.b16 %v1718
      %v2729 = vunpack.c.l.b16 %v1719
      %v2730 = vunpack.c.h.b16 %v1719
      %v2731 = vpack.c.b16 %v2479, %v2475
      %v2732 = vpack.c.b16 %v2480, %v2476
      %v2733 = vpack.c.b16 %v2481, %v2477
      %v2734 = vpack.c.b16 %v2482, %v2478
      %v2735 = vpack.c.b16 %v2487, %v2483
      %v2736 = vpack.c.b16 %v2488, %v2484
      %v2737 = vpack.c.b16 %v2489, %v2485
      %v2738 = vpack.c.b16 %v2490, %v2486
      %v2739 = vpack.c.b16 %v2495, %v2491
      %v2740 = vpack.c.b16 %v2496, %v2492
      %v2741 = vpack.c.b16 %v2497, %v2493
      %v2742 = vpack.c.b16 %v2498, %v2494
      %v2743 = vpack.c.b16 %v2503, %v2499
      %v2744 = vpack.c.b16 %v2504, %v2500
      %v2745 = vpack.c.b16 %v2505, %v2501
      %v2746 = vpack.c.b16 %v2506, %v2502
      %v2747 = vpack.c.b16 %v2511, %v2507
      %v2748 = vpack.c.b16 %v2512, %v2508
      %v2749 = vpack.c.b16 %v2513, %v2509
      %v2750 = vpack.c.b16 %v2514, %v2510
      %v2751 = vpack.c.b16 %v2519, %v2515
      %v2752 = vpack.c.b16 %v2520, %v2516
      %v2753 = vpack.c.b16 %v2521, %v2517
      %v2754 = vpack.c.b16 %v2522, %v2518
      %v2755 = vpack.c.b16 %v2527, %v2523
      %v2756 = vpack.c.b16 %v2528, %v2524
      %v2757 = vpack.c.b16 %v2529, %v2525
      %v2758 = vpack.c.b16 %v2530, %v2526
      %v2759 = vpack.c.b16 %v2535, %v2531
      %v2760 = vpack.c.b16 %v2536, %v2532
      %v2761 = vpack.c.b16 %v2537, %v2533
      %v2762 = vpack.c.b16 %v2538, %v2534
      %v2763 = vpack.c.b16 %v2543, %v2539
      %v2764 = vpack.c.b16 %v2544, %v2540
      %v2765 = vpack.c.b16 %v2545, %v2541
      %v2766 = vpack.c.b16 %v2546, %v2542
      %v2767 = vpack.c.b16 %v2551, %v2547
      %v2768 = vpack.c.b16 %v2552, %v2548
      %v2769 = vpack.c.b16 %v2553, %v2549
      %v2770 = vpack.c.b16 %v2554, %v2550
      %v2771 = vpack.c.b16 %v2559, %v2555
      %v2772 = vpack.c.b16 %v2560, %v2556
      %v2773 = vpack.c.b16 %v2561, %v2557
      %v2774 = vpack.c.b16 %v2562, %v2558
      %v2775 = vpack.c.b16 %v2567, %v2563
      %v2776 = vpack.c.b16 %v2568, %v2564
      %v2777 = vpack.c.b16 %v2569, %v2565
      %v2778 = vpack.c.b16 %v2570, %v2566
      %v2779 = vpack.c.b16 %v2575, %v2571
      %v2780 = vpack.c.b16 %v2576, %v2572
      %v2781 = vpack.c.b16 %v2577, %v2573
      %v2782 = vpack.c.b16 %v2578, %v2574
      %v2783 = vpack.c.b16 %v2583, %v2579
      %v2784 = vpack.c.b16 %v2584, %v2580
      %v2785 = vpack.c.b16 %v2585, %v2581
      %v2786 = vpack.c.b16 %v2586, %v2582
      %v2787 = vpack.c.b16 %v2591, %v2587
      %v2788 = vpack.c.b16 %v2592, %v2588
      %v2789 = vpack.c.b16 %v2593, %v2589
      %v2790 = vpack.c.b16 %v2594, %v2590
      %v2791 = vpack.c.b16 %v2599, %v2595
      %v2792 = vpack.c.b16 %v2600, %v2596
      %v2793 = vpack.c.b16 %v2601, %v2597
      %v2794 = vpack.c.b16 %v2602, %v2598
      %v2795 = vpack.c.b16 %v2607, %v2603
      %v2796 = vpack.c.b16 %v2608, %v2604
      %v2797 = vpack.c.b16 %v2609, %v2605
      %v2798 = vpack.c.b16 %v2610, %v2606
      %v2799 = vpack.c.b16 %v2615, %v2611
      %v2800 = vpack.c.b16 %v2616, %v2612
      %v2801 = vpack.c.b16 %v2617, %v2613
      %v2802 = vpack.c.b16 %v2618, %v2614
      %v2803 = vpack.c.b16 %v2623, %v2619
      %v2804 = vpack.c.b16 %v2624, %v2620
      %v2805 = vpack.c.b16 %v2625, %v2621
      %v2806 = vpack.c.b16 %v2626, %v2622
      %v2807 = vpack.c.b16 %v2631, %v2627
      %v2808 = vpack.c.b16 %v2632, %v2628
      %v2809 = vpack.c.b16 %v2633, %v2629
      %v2810 = vpack.c.b16 %v2634, %v2630
      %v2811 = vpack.c.b16 %v2639, %v2635
      %v2812 = vpack.c.b16 %v2640, %v2636
      %v2813 = vpack.c.b16 %v2641, %v2637
      %v2814 = vpack.c.b16 %v2642, %v2638
      %v2815 = vpack.c.b16 %v2647, %v2643
      %v2816 = vpack.c.b16 %v2648, %v2644
      %v2817 = vpack.c.b16 %v2649, %v2645
      %v2818 = vpack.c.b16 %v2650, %v2646
      %v2819 = vpack.c.b16 %v2655, %v2651
      %v2820 = vpack.c.b16 %v2656, %v2652
      %v2821 = vpack.c.b16 %v2657, %v2653
      %v2822 = vpack.c.b16 %v2658, %v2654
      %v2823 = vpack.c.b16 %v2663, %v2659
      %v2824 = vpack.c.b16 %v2664, %v2660
      %v2825 = vpack.c.b16 %v2665, %v2661
      %v2826 = vpack.c.b16 %v2666, %v2662
      %v2827 = vpack.c.b16 %v2671, %v2667
      %v2828 = vpack.c.b16 %v2672, %v2668
      %v2829 = vpack.c.b16 %v2673, %v2669
      %v2830 = vpack.c.b16 %v2674, %v2670
      %v2831 = vpack.c.b16 %v2679, %v2675
      %v2832 = vpack.c.b16 %v2680, %v2676
      %v2833 = vpack.c.b16 %v2681, %v2677
      %v2834 = vpack.c.b16 %v2682, %v2678
      %v2835 = vpack.c.b16 %v2687, %v2683
      %v2836 = vpack.c.b16 %v2688, %v2684
      %v2837 = vpack.c.b16 %v2689, %v2685
      %v2838 = vpack.c.b16 %v2690, %v2686
      %v2839 = vpack.c.b16 %v2695, %v2691
      %v2840 = vpack.c.b16 %v2696, %v2692
      %v2841 = vpack.c.b16 %v2697, %v2693
      %v2842 = vpack.c.b16 %v2698, %v2694
      %v2843 = vpack.c.b16 %v2703, %v2699
      %v2844 = vpack.c.b16 %v2704, %v2700
      %v2845 = vpack.c.b16 %v2705, %v2701
      %v2846 = vpack.c.b16 %v2706, %v2702
      %v2847 = vpack.c.b16 %v2711, %v2707
      %v2848 = vpack.c.b16 %v2712, %v2708
      %v2849 = vpack.c.b16 %v2713, %v2709
      %v2850 = vpack.c.b16 %v2714, %v2710
      %v2851 = vpack.c.b16 %v2719, %v2715
      %v2852 = vpack.c.b16 %v2720, %v2716
      %v2853 = vpack.c.b16 %v2721, %v2717
      %v2854 = vpack.c.b16 %v2722, %v2718
      %v2855 = vpack.c.b16 %v2727, %v2723
      %v2856 = vpack.c.b16 %v2728, %v2724
      %v2857 = vpack.c.b16 %v2729, %v2725
      %v2858 = vpack.c.b16 %v2730, %v2726
      %2987 = vmatprep.subr.bf16.mxu0 %v2732
      %2988 = vmatpush1.bf16.msra.mxu0 %v2731
      %2989 = vmatprep.subr.bf16.mxu0 %v2736
      %2990 = vmatpush1.bf16.msra.mxu0 %v2735
      %2991 = vmatprep.subr.bf16.mxu0 %v2740
      %2992 = vmatpush1.bf16.msra.mxu0 %v2739
      %2993 = vmatprep.subr.bf16.mxu0 %v2744
      %2994 = vmatpush1.bf16.msra.mxu0 %v2743
      %2995 = vmatprep.subr.bf16.mxu0 %v2748
      %2996 = vmatpush1.bf16.msra.mxu0 %v2747
      %2997 = vmatprep.subr.bf16.mxu0 %v2752
      %2998 = vmatpush1.bf16.msra.mxu0 %v2751
      %2999 = vmatprep.subr.bf16.mxu0 %v2756
      %3000 = vmatpush1.bf16.msra.mxu0 %v2755
      %3001 = vmatprep.subr.bf16.mxu0 %v2760
      %3002 = vmatpush1.bf16.msra.mxu0 %v2759
      %3003 = vmatprep.subr.bf16.mxu0 %v2764
      %3004 = vmatpush1.bf16.msra.mxu0 %v2763
      %3005 = vmatprep.subr.bf16.mxu0 %v2768
      %3006 = vmatpush1.bf16.msra.mxu0 %v2767
      %3007 = vmatprep.subr.bf16.mxu0 %v2772
      %3008 = vmatpush1.bf16.msra.mxu0 %v2771
      %3009 = vmatprep.subr.bf16.mxu0 %v2776
      %3010 = vmatpush1.bf16.msra.mxu0 %v2775
      %3011 = vmatprep.subr.bf16.mxu0 %v2780
      %3012 = vmatpush1.bf16.msra.mxu0 %v2779
      %3013 = vmatprep.subr.bf16.mxu0 %v2784
      %3014 = vmatpush1.bf16.msra.mxu0 %v2783
      %3015 = vmatprep.subr.bf16.mxu0 %v2788
      %3016 = vmatpush1.bf16.msra.mxu0 %v2787
      %3017 = vmatprep.subr.bf16.mxu0 %v2792
      %3018 = vmatpush1.bf16.msra.mxu0 %v2791
      %3019 = vmatprep.mubr.bf16.mxu0 %v2316
      %3020 = vmatmul.mubr.bf16.gmra.mrb[0].mxu0 %v2315
      %v3021 = vpop.f32.mrb[0].mxu0
      %v3022 = vadd.f32 %v577, %v3021
      %v3023 = vpop.f32.mrb[0].mxu0
      %v3024 = vadd.f32 %v581, %v3023
      %v3025 = vpop.f32.mrb[0].mxu0
      %v3026 = vadd.f32 %v577, %v3025
      %v3027 = vpop.f32.mrb[0].mxu0
      %v3028 = vadd.f32 %v581, %v3027
      %3029 = vmatprep.mubr.bf16.mxu0 %v2320
      %3030 = vmatmul.mubr.bf16.gmra.mrb[0].mxu0 %v2319
      %v3031 = vpop.f32.mrb[0].mxu0
      %v3032 = vadd.f32 %v577, %v3031
      %v3033 = vpop.f32.mrb[0].mxu0
      %v3034 = vadd.f32 %v581, %v3033
      %v3035 = vpop.f32.mrb[0].mxu0
      %v3036 = vadd.f32 %v577, %v3035
      %v3037 = vpop.f32.mrb[0].mxu0
      %v3038 = vadd.f32 %v581, %v3037
      %3039 = vmatprep.mubr.bf16.mxu0 %v2324
      %3040 = vmatmul.mubr.bf16.gmra.mrb[0].mxu0 %v2323
      %v3041 = vpop.f32.mrb[0].mxu0
      %v3042 = vadd.f32 %v577, %v3041
      %v3043 = vpop.f32.mrb[0].mxu0
      %v3044 = vadd.f32 %v581, %v3043
      %v3045 = vpop.f32.mrb[0].mxu0
      %v3046 = vadd.f32 %v577, %v3045
      %v3047 = vpop.f32.mrb[0].mxu0
      %v3048 = vadd.f32 %v581, %v3047
      %3049 = vmatprep.mubr.bf16.mxu0 %v2328
      %3050 = vmatmul.mubr.bf16.gmra.mrb[0].mxu0 %v2327
      %v3051 = vpop.f32.mrb[0].mxu0
      %v3052 = vadd.f32 %v577, %v3051
      %v3053 = vpop.f32.mrb[0].mxu0
      %v3054 = vadd.f32 %v581, %v3053
      %v3055 = vpop.f32.mrb[0].mxu0
      %v3056 = vadd.f32 %v577, %v3055
      %v3057 = vpop.f32.mrb[0].mxu0
      %v3058 = vadd.f32 %v581, %v3057
      %3059 = vdwg.mxu0
      %3060 = vmatprep.subr.bf16.mxu0 %v2796
      %3061 = vmatpush1.bf16.msra.mxu0 %v2795
      %3062 = vmatprep.subr.bf16.mxu0 %v2800
      %3063 = vmatpush1.bf16.msra.mxu0 %v2799
      %3064 = vmatprep.subr.bf16.mxu0 %v2804
      %3065 = vmatpush1.bf16.msra.mxu0 %v2803
      %3066 = vmatprep.subr.bf16.mxu0 %v2808
      %3067 = vmatpush1.bf16.msra.mxu0 %v2807
      %3068 = vmatprep.subr.bf16.mxu0 %v2812
      %3069 = vmatpush1.bf16.msra.mxu0 %v2811
      %3070 = vmatprep.subr.bf16.mxu0 %v2816
      %3071 = vmatpush1.bf16.msra.mxu0 %v2815
      %3072 = vmatprep.subr.bf16.mxu0 %v2820
      %3073 = vmatpush1.bf16.msra.mxu0 %v2819
      %3074 = vmatprep.subr.bf16.mxu0 %v2824
      %3075 = vmatpush1.bf16.msra.mxu0 %v2823
      %3076 = vmatprep.subr.bf16.mxu0 %v2828
      %3077 = vmatpush1.bf16.msra.mxu0 %v2827
      %3078 = vmatprep.subr.bf16.mxu0 %v2832
      %3079 = vmatpush1.bf16.msra.mxu0 %v2831
      %3080 = vmatprep.subr.bf16.mxu0 %v2836
      %3081 = vmatpush1.bf16.msra.mxu0 %v2835
      %3082 = vmatprep.subr.bf16.mxu0 %v2840
      %3083 = vmatpush1.bf16.msra.mxu0 %v2839
      %3084 = vmatprep.subr.bf16.mxu0 %v2844
      %3085 = vmatpush1.bf16.msra.mxu0 %v2843
      %3086 = vmatprep.subr.bf16.mxu0 %v2848
      %3087 = vmatpush1.bf16.msra.mxu0 %v2847
      %3088 = vmatprep.subr.bf16.mxu0 %v2852
      %3089 = vmatpush1.bf16.msra.mxu0 %v2851
      %3090 = vmatprep.subr.bf16.mxu0 %v2856
      %3091 = vmatpush1.bf16.msra.mxu0 %v2855
      %3092 = vmatprep.mubr.bf16.mxu0 %v2318
      %3093 = vmatmul.mubr.bf16.gmra.mrb[0].mxu0 %v2317
      %v3094 = vpop.f32.mrb[0].mxu0
      %v3095 = vadd.f32 %v3022, %v3094
      %v3096 = vpop.f32.mrb[0].mxu0
      %v3097 = vadd.f32 %v3024, %v3096
      %v3098 = vpop.f32.mrb[0].mxu0
      %v3099 = vadd.f32 %v3026, %v3098
      %v3100 = vpop.f32.mrb[0].mxu0
      %v3101 = vadd.f32 %v3028, %v3100
      %3102 = vmatprep.mubr.bf16.mxu0 %v2322
      %3103 = vmatmul.mubr.bf16.gmra.mrb[0].mxu0 %v2321
      %v3104 = vpop.f32.mrb[0].mxu0
      %v3105 = vadd.f32 %v3032, %v3104
      %v3106 = vpop.f32.mrb[0].mxu0
      %v3107 = vadd.f32 %v3034, %v3106
      %v3108 = vpop.f32.mrb[0].mxu0
      %v3109 = vadd.f32 %v3036, %v3108
      %v3110 = vpop.f32.mrb[0].mxu0
      %v3111 = vadd.f32 %v3038, %v3110
      %3112 = vmatprep.mubr.bf16.mxu0 %v2326
      %3113 = vmatmul.mubr.bf16.gmra.mrb[0].mxu0 %v2325
      %v3114 = vpop.f32.mrb[0].mxu0
      %v3115 = vadd.f32 %v3042, %v3114
      %v3116 = vpop.f32.mrb[0].mxu0
      %v3117 = vadd.f32 %v3044, %v3116
      %v3118 = vpop.f32.mrb[0].mxu0
      %v3119 = vadd.f32 %v3046, %v3118
      %v3120 = vpop.f32.mrb[0].mxu0
      %v3121 = vadd.f32 %v3048, %v3120
      %3122 = vmatprep.mubr.bf16.mxu0 %v2330
      %3123 = vmatmul.mubr.bf16.gmra.mrb[0].mxu0 %v2329
      %v3124 = vpop.f32.mrb[0].mxu0
      %v3125 = vadd.f32 %v3052, %v3124
      %v3126 = vpop.f32.mrb[0].mxu0
      %v3127 = vadd.f32 %v3054, %v3126
      %v3128 = vpop.f32.mrb[0].mxu0
      %v3129 = vadd.f32 %v3056, %v3128
      %v3130 = vpop.f32.mrb[0].mxu0
      %v3131 = vadd.f32 %v3058, %v3130
      %3132 = vdwg.mxu0
      %3133 = vmatprep.subr.bf16.mxu0 %v2734
      %3134 = vmatpush1.bf16.msra.mxu0 %v2733
      %3135 = vmatprep.subr.bf16.mxu0 %v2738
      %3136 = vmatpush1.bf16.msra.mxu0 %v2737
      %3137 = vmatprep.subr.bf16.mxu0 %v2742
      %3138 = vmatpush1.bf16.msra.mxu0 %v2741
      %3139 = vmatprep.subr.bf16.mxu0 %v2746
      %3140 = vmatpush1.bf16.msra.mxu0 %v2745
      %3141 = vmatprep.subr.bf16.mxu0 %v2750
      %3142 = vmatpush1.bf16.msra.mxu0 %v2749
      %3143 = vmatprep.subr.bf16.mxu0 %v2754
      %3144 = vmatpush1.bf16.msra.mxu0 %v2753
      %3145 = vmatprep.subr.bf16.mxu0 %v2758
      %3146 = vmatpush1.bf16.msra.mxu0 %v2757
      %3147 = vmatprep.subr.bf16.mxu0 %v2762
      %3148 = vmatpush1.bf16.msra.mxu0 %v2761
      %3149 = vmatprep.subr.bf16.mxu0 %v2766
      %3150 = vmatpush1.bf16.msra.mxu0 %v2765
      %3151 = vmatprep.subr.bf16.mxu0 %v2770
      %3152 = vmatpush1.bf16.msra.mxu0 %v2769
      %3153 = vmatprep.subr.bf16.mxu0 %v2774
      %3154 = vmatpush1.bf16.msra.mxu0 %v2773
      %3155 = vmatprep.subr.bf16.mxu0 %v2778
      %3156 = vmatpush1.bf16.msra.mxu0 %v2777
      %3157 = vmatprep.subr.bf16.mxu0 %v2782
      %3158 = vmatpush1.bf16.msra.mxu0 %v2781
      %3159 = vmatprep.subr.bf16.mxu0 %v2786
      %3160 = vmatpush1.bf16.msra.mxu0 %v2785
      %3161 = vmatprep.subr.bf16.mxu0 %v2790
      %3162 = vmatpush1.bf16.msra.mxu0 %v2789
      %3163 = vmatprep.subr.bf16.mxu0 %v2794
      %3164 = vmatpush1.bf16.msra.mxu0 %v2793
      %3165 = vmatprep.mubr.bf16.mxu0 %v2316
      %3166 = vmatmul.mubr.bf16.gmra.mrb[0].mxu0 %v2315
      %v3167 = vpop.f32.mrb[0].mxu0
      %v3168 = vadd.f32 %v585, %v3167
      %v3169 = vpop.f32.mrb[0].mxu0
      %v3170 = vadd.f32 %v589, %v3169
      %v3171 = vpop.f32.mrb[0].mxu0
      %v3172 = vadd.f32 %v585, %v3171
      %v3173 = vpop.f32.mrb[0].mxu0
      %v3174 = vadd.f32 %v589, %v3173
      %3175 = vmatprep.mubr.bf16.mxu0 %v2320
      %3176 = vmatmul.mubr.bf16.gmra.mrb[0].mxu0 %v2319
      %v3177 = vpop.f32.mrb[0].mxu0
      %v3178 = vadd.f32 %v585, %v3177
      %v3179 = vpop.f32.mrb[0].mxu0
      %v3180 = vadd.f32 %v589, %v3179
      %v3181 = vpop.f32.mrb[0].mxu0
      %v3182 = vadd.f32 %v585, %v3181
      %v3183 = vpop.f32.mrb[0].mxu0
      %v3184 = vadd.f32 %v589, %v3183
      %3185 = vmatprep.mubr.bf16.mxu0 %v2324
      %3186 = vmatmul.mubr.bf16.gmra.mrb[0].mxu0 %v2323
      %v3187 = vpop.f32.mrb[0].mxu0
      %v3188 = vadd.f32 %v585, %v3187
      %v3189 = vpop.f32.mrb[0].mxu0
      %v3190 = vadd.f32 %v589, %v3189
      %v3191 = vpop.f32.mrb[0].mxu0
      %v3192 = vadd.f32 %v585, %v3191
      %v3193 = vpop.f32.mrb[0].mxu0
      %v3194 = vadd.f32 %v589, %v3193
      %3195 = vmatprep.mubr.bf16.mxu0 %v2328
      %3196 = vmatmul.mubr.bf16.gmra.mrb[0].mxu0 %v2327
      %v3197 = vpop.f32.mrb[0].mxu0
      %v3198 = vadd.f32 %v585, %v3197
      %v3199 = vpop.f32.mrb[0].mxu0
      %v3200 = vadd.f32 %v589, %v3199
      %v3201 = vpop.f32.mrb[0].mxu0
      %v3202 = vadd.f32 %v585, %v3201
      %v3203 = vpop.f32.mrb[0].mxu0
      %v3204 = vadd.f32 %v589, %v3203
      %3205 = vdwg.mxu0
      %3206 = vmatprep.subr.bf16.mxu0 %v2798
      %3207 = vmatpush1.bf16.msra.mxu0 %v2797
      %3208 = vmatprep.subr.bf16.mxu0 %v2802
      %3209 = vmatpush1.bf16.msra.mxu0 %v2801
      %3210 = vmatprep.subr.bf16.mxu0 %v2806
      %3211 = vmatpush1.bf16.msra.mxu0 %v2805
      %3212 = vmatprep.subr.bf16.mxu0 %v2810
      %3213 = vmatpush1.bf16.msra.mxu0 %v2809
      %3214 = vmatprep.subr.bf16.mxu0 %v2814
      %3215 = vmatpush1.bf16.msra.mxu0 %v2813
      %3216 = vmatprep.subr.bf16.mxu0 %v2818
      %3217 = vmatpush1.bf16.msra.mxu0 %v2817
      %3218 = vmatprep.subr.bf16.mxu0 %v2822
      %3219 = vmatpush1.bf16.msra.mxu0 %v2821
      %3220 = vmatprep.subr.bf16.mxu0 %v2826
      %3221 = vmatpush1.bf16.msra.mxu0 %v2825
      %3222 = vmatprep.subr.bf16.mxu0 %v2830
      %3223 = vmatpush1.bf16.msra.mxu0 %v2829
      %3224 = vmatprep.subr.bf16.mxu0 %v2834
      %3225 = vmatpush1.bf16.msra.mxu0 %v2833
      %3226 = vmatprep.subr.bf16.mxu0 %v2838
      %3227 = vmatpush1.bf16.msra.mxu0 %v2837
      %3228 = vmatprep.subr.bf16.mxu0 %v2842
      %3229 = vmatpush1.bf16.msra.mxu0 %v2841
      %3230 = vmatprep.subr.bf16.mxu0 %v2846
      %3231 = vmatpush1.bf16.msra.mxu0 %v2845
      %3232 = vmatprep.subr.bf16.mxu0 %v2850
      %3233 = vmatpush1.bf16.msra.mxu0 %v2849
      %3234 = vmatprep.subr.bf16.mxu0 %v2854
      %3235 = vmatpush1.bf16.msra.mxu0 %v2853
      %3236 = vmatprep.subr.bf16.mxu0 %v2858
      %3237 = vmatpush1.bf16.msra.mxu0 %v2857
      %3238 = vmatprep.mubr.bf16.mxu0 %v2318
      %3239 = vmatmul.mubr.bf16.gmra.mrb[0].mxu0 %v2317
      %v3240 = vpop.f32.mrb[0].mxu0
      %v3241 = vadd.f32 %v3168, %v3240
      %v3242 = vpop.f32.mrb[0].mxu0
      %v3243 = vadd.f32 %v3170, %v3242
      %v3244 = vpop.f32.mrb[0].mxu0
      %v3245 = vadd.f32 %v3172, %v3244
      %v3246 = vpop.f32.mrb[0].mxu0
      %v3247 = vadd.f32 %v3174, %v3246
      %3248 = vmatprep.mubr.bf16.mxu0 %v2322
      %3249 = vmatmul.mubr.bf16.gmra.mrb[0].mxu0 %v2321
      %v3250 = vpop.f32.mrb[0].mxu0
      %v3251 = vadd.f32 %v3178, %v3250
      %v3252 = vpop.f32.mrb[0].mxu0
      %v3253 = vadd.f32 %v3180, %v3252
      %v3254 = vpop.f32.mrb[0].mxu0
      %v3255 = vadd.f32 %v3182, %v3254
      %v3256 = vpop.f32.mrb[0].mxu0
      %v3257 = vadd.f32 %v3184, %v3256
      %3258 = vmatprep.mubr.bf16.mxu0 %v2326
      %3259 = vmatmul.mubr.bf16.gmra.mrb[0].mxu0 %v2325
      %v3260 = vpop.f32.mrb[0].mxu0
      %v3261 = vadd.f32 %v3188, %v3260
      %v3262 = vpop.f32.mrb[0].mxu0
      %v3263 = vadd.f32 %v3190, %v3262
      %v3264 = vpop.f32.mrb[0].mxu0
      %v3265 = vadd.f32 %v3192, %v3264
      %v3266 = vpop.f32.mrb[0].mxu0
      %v3267 = vadd.f32 %v3194, %v3266
      %3268 = vmatprep.mubr.bf16.mxu0 %v2330
      %3269 = vmatmul.mubr.bf16.gmra.mrb[0].mxu0 %v2329
      %v3270 = vpop.f32.mrb[0].mxu0
      %v3271 = vadd.f32 %v3198, %v3270
      %v3272 = vpop.f32.mrb[0].mxu0
      %v3273 = vadd.f32 %v3200, %v3272
      %v3274 = vpop.f32.mrb[0].mxu0
      %v3275 = vadd.f32 %v3202, %v3274
      %v3276 = vpop.f32.mrb[0].mxu0
      %v3277 = vadd.f32 %v3204, %v3276
      %3278 = vdwg.mxu0
      %3279 = vst [vmem:[%s194 + $0x10] sm:$0xff] %v3095
      %3280 = vst [vmem:[%s194 + $0x18] sm:$0xff] %v3097
      %3281 = vst [vmem:[%s194 + $0x90] sm:$0xff] %v3099
      %3282 = vst [vmem:[%s194 + $0x98] sm:$0xff] %v3101
      %3283 = vst [vmem:[%s194 + $0x110] sm:$0xff] %v3105
      %3284 = vst [vmem:[%s194 + $0x118] sm:$0xff] %v3107
      %3285 = vst [vmem:[%s194 + $0x190] sm:$0xff] %v3109
      %3286 = vst [vmem:[%s194 + $0x198] sm:$0xff] %v3111
      %3287 = vst [vmem:[%s194 + $0x210] sm:$0xff] %v3115
      %3288 = vst [vmem:[%s194 + $0x218] sm:$0xff] %v3117
      %3289 = vst [vmem:[%s194 + $0x290] sm:$0xff] %v3119
      %3290 = vst [vmem:[%s194 + $0x298] sm:$0xff] %v3121
      %3291 = vst [vmem:[%s194 + $0x310] sm:$0xff] %v3125
      %3292 = vst [vmem:[%s194 + $0x318] sm:$0xff] %v3127
      %3293 = vst [vmem:[%s194 + $0x390] sm:$0xff] %v3129
      %3294 = vst [vmem:[%s194 + $0x398] sm:$0xff] %v3131
      %3295 = vst [vmem:[%s1574 + $0x10] sm:$0xff] %v3241
      %3296 = vst [vmem:[%s1574 + $0x18] sm:$0xff] %v3243
      %3297 = vst [vmem:[%s1574 + $0x90] sm:$0xff] %v3245
      %3298 = vst [vmem:[%s1574 + $0x98] sm:$0xff] %v3247
      %3299 = vst [vmem:[%s1574 + $0x110] sm:$0xff] %v3251
      %3300 = vst [vmem:[%s1574 + $0x118] sm:$0xff] %v3253
      %3301 = vst [vmem:[%s1574 + $0x190] sm:$0xff] %v3255
      %3302 = vst [vmem:[%s1574 + $0x198] sm:$0xff] %v3257
      %3303 = vst [vmem:[%s1574 + $0x210] sm:$0xff] %v3261
      %3304 = vst [vmem:[%s1574 + $0x218] sm:$0xff] %v3263
      %3305 = vst [vmem:[%s1574 + $0x290] sm:$0xff] %v3265
      %3306 = vst [vmem:[%s1574 + $0x298] sm:$0xff] %v3267
      %3307 = vst [vmem:[%s1574 + $0x310] sm:$0xff] %v3271
      %3308 = vst [vmem:[%s1574 + $0x318] sm:$0xff] %v3273
      %3309 = vst [vmem:[%s1574 + $0x390] sm:$0xff] %v3275
      %3310 = vst [vmem:[%s1574 + $0x398] sm:$0xff] %v3277
      %s3311 = scalar_lea.vmem %s1, 2048
      %v3312 = vld [vmem:[%s3311] sm:$0xff]
      %v3313 = vld [vmem:[%s3311 + $0x8] sm:$0xff]
      %v3314 = vld [vmem:[%s3311 + $0x10] sm:$0xff]
      %v3315 = vld [vmem:[%s3311 + $0x18] sm:$0xff]
      %v3316 = vld [vmem:[%s3311 + $0x20] sm:$0xff]
      %v3317 = vld [vmem:[%s3311 + $0x28] sm:$0xff]
      %v3318 = vld [vmem:[%s3311 + $0x30] sm:$0xff]
      %v3319 = vld [vmem:[%s3311 + $0x38] sm:$0xff]
      %v3320 = vld [vmem:[%s3311 + $0x40] sm:$0xff]
      %v3321 = vld [vmem:[%s3311 + $0x48] sm:$0xff]
      %v3322 = vld [vmem:[%s3311 + $0x50] sm:$0xff]
      %v3323 = vld [vmem:[%s3311 + $0x58] sm:$0xff]
      %v3324 = vld [vmem:[%s3311 + $0x60] sm:$0xff]
      %v3325 = vld [vmem:[%s3311 + $0x68] sm:$0xff]
      %v3326 = vld [vmem:[%s3311 + $0x70] sm:$0xff]
      %v3327 = vld [vmem:[%s3311 + $0x78] sm:$0xff]
      %v3328 = vld [vmem:[%s3311 + $0x80] sm:$0xff]
      %v3329 = vld [vmem:[%s3311 + $0x88] sm:$0xff]
      %v3330 = vld [vmem:[%s3311 + $0x90] sm:$0xff]
      %v3331 = vld [vmem:[%s3311 + $0x98] sm:$0xff]
      %v3332 = vld [vmem:[%s3311 + $0xa0] sm:$0xff]
      %v3333 = vld [vmem:[%s3311 + $0xa8] sm:$0xff]
      %v3334 = vld [vmem:[%s3311 + $0xb0] sm:$0xff]
      %v3335 = vld [vmem:[%s3311 + $0xb8] sm:$0xff]
      %v3336 = vld [vmem:[%s3311 + $0xc0] sm:$0xff]
      %v3337 = vld [vmem:[%s3311 + $0xc8] sm:$0xff]
      %v3338 = vld [vmem:[%s3311 + $0xd0] sm:$0xff]
      %v3339 = vld [vmem:[%s3311 + $0xd8] sm:$0xff]
      %v3340 = vld [vmem:[%s3311 + $0xe0] sm:$0xff]
      %v3341 = vld [vmem:[%s3311 + $0xe8] sm:$0xff]
      %v3342 = vld [vmem:[%s3311 + $0xf0] sm:$0xff]
      %v3343 = vld [vmem:[%s3311 + $0xf8] sm:$0xff]
      %v3344 = vld [vmem:[%s3311 + $0x100] sm:$0xff]
      %v3345 = vld [vmem:[%s3311 + $0x108] sm:$0xff]
      %v3346 = vld [vmem:[%s3311 + $0x110] sm:$0xff]
      %v3347 = vld [vmem:[%s3311 + $0x118] sm:$0xff]
      %v3348 = vld [vmem:[%s3311 + $0x120] sm:$0xff]
      %v3349 = vld [vmem:[%s3311 + $0x128] sm:$0xff]
      %v3350 = vld [vmem:[%s3311 + $0x130] sm:$0xff]
      %v3351 = vld [vmem:[%s3311 + $0x138] sm:$0xff]
      %v3352 = vld [vmem:[%s3311 + $0x140] sm:$0xff]
      %v3353 = vld [vmem:[%s3311 + $0x148] sm:$0xff]
      %v3354 = vld [vmem:[%s3311 + $0x150] sm:$0xff]
      %v3355 = vld [vmem:[%s3311 + $0x158] sm:$0xff]
      %v3356 = vld [vmem:[%s3311 + $0x160] sm:$0xff]
      %v3357 = vld [vmem:[%s3311 + $0x168] sm:$0xff]
      %v3358 = vld [vmem:[%s3311 + $0x170] sm:$0xff]
      %v3359 = vld [vmem:[%s3311 + $0x178] sm:$0xff]
      %v3360 = vld [vmem:[%s3311 + $0x180] sm:$0xff]
      %v3361 = vld [vmem:[%s3311 + $0x188] sm:$0xff]
      %v3362 = vld [vmem:[%s3311 + $0x190] sm:$0xff]
      %v3363 = vld [vmem:[%s3311 + $0x198] sm:$0xff]
      %v3364 = vld [vmem:[%s3311 + $0x1a0] sm:$0xff]
      %v3365 = vld [vmem:[%s3311 + $0x1a8] sm:$0xff]
      %v3366 = vld [vmem:[%s3311 + $0x1b0] sm:$0xff]
      %v3367 = vld [vmem:[%s3311 + $0x1b8] sm:$0xff]
      %v3368 = vld [vmem:[%s3311 + $0x1c0] sm:$0xff]
      %v3369 = vld [vmem:[%s3311 + $0x1c8] sm:$0xff]
      %v3370 = vld [vmem:[%s3311 + $0x1d0] sm:$0xff]
      %v3371 = vld [vmem:[%s3311 + $0x1d8] sm:$0xff]
      %v3372 = vld [vmem:[%s3311 + $0x1e0] sm:$0xff]
      %v3373 = vld [vmem:[%s3311 + $0x1e8] sm:$0xff]
      %v3374 = vld [vmem:[%s3311 + $0x1f0] sm:$0xff]
      %v3375 = vld [vmem:[%s3311 + $0x1f8] sm:$0xff]
      %v3376 = vld [vmem:[%s3311 + $0x200] sm:$0xff]
      %v3377 = vld [vmem:[%s3311 + $0x208] sm:$0xff]
      %v3378 = vld [vmem:[%s3311 + $0x210] sm:$0xff]
      %v3379 = vld [vmem:[%s3311 + $0x218] sm:$0xff]
      %v3380 = vld [vmem:[%s3311 + $0x220] sm:$0xff]
      %v3381 = vld [vmem:[%s3311 + $0x228] sm:$0xff]
      %v3382 = vld [vmem:[%s3311 + $0x230] sm:$0xff]
      %v3383 = vld [vmem:[%s3311 + $0x238] sm:$0xff]
      %v3384 = vld [vmem:[%s3311 + $0x240] sm:$0xff]
      %v3385 = vld [vmem:[%s3311 + $0x248] sm:$0xff]
      %v3386 = vld [vmem:[%s3311 + $0x250] sm:$0xff]
      %v3387 = vld [vmem:[%s3311 + $0x258] sm:$0xff]
      %v3388 = vld [vmem:[%s3311 + $0x260] sm:$0xff]
      %v3389 = vld [vmem:[%s3311 + $0x268] sm:$0xff]
      %v3390 = vld [vmem:[%s3311 + $0x270] sm:$0xff]
      %v3391 = vld [vmem:[%s3311 + $0x278] sm:$0xff]
      %v3392 = vld [vmem:[%s3311 + $0x280] sm:$0xff]
      %v3393 = vld [vmem:[%s3311 + $0x288] sm:$0xff]
      %v3394 = vld [vmem:[%s3311 + $0x290] sm:$0xff]
      %v3395 = vld [vmem:[%s3311 + $0x298] sm:$0xff]
      %v3396 = vld [vmem:[%s3311 + $0x2a0] sm:$0xff]
      %v3397 = vld [vmem:[%s3311 + $0x2a8] sm:$0xff]
      %v3398 = vld [vmem:[%s3311 + $0x2b0] sm:$0xff]
      %v3399 = vld [vmem:[%s3311 + $0x2b8] sm:$0xff]
      %v3400 = vld [vmem:[%s3311 + $0x2c0] sm:$0xff]
      %v3401 = vld [vmem:[%s3311 + $0x2c8] sm:$0xff]
      %v3402 = vld [vmem:[%s3311 + $0x2d0] sm:$0xff]
      %v3403 = vld [vmem:[%s3311 + $0x2d8] sm:$0xff]
      %v3404 = vld [vmem:[%s3311 + $0x2e0] sm:$0xff]
      %v3405 = vld [vmem:[%s3311 + $0x2e8] sm:$0xff]
      %v3406 = vld [vmem:[%s3311 + $0x2f0] sm:$0xff]
      %v3407 = vld [vmem:[%s3311 + $0x2f8] sm:$0xff]
      %v3408 = vld [vmem:[%s3311 + $0x300] sm:$0xff]
      %v3409 = vld [vmem:[%s3311 + $0x308] sm:$0xff]
      %v3410 = vld [vmem:[%s3311 + $0x310] sm:$0xff]
      %v3411 = vld [vmem:[%s3311 + $0x318] sm:$0xff]
      %v3412 = vld [vmem:[%s3311 + $0x320] sm:$0xff]
      %v3413 = vld [vmem:[%s3311 + $0x328] sm:$0xff]
      %v3414 = vld [vmem:[%s3311 + $0x330] sm:$0xff]
      %v3415 = vld [vmem:[%s3311 + $0x338] sm:$0xff]
      %v3416 = vld [vmem:[%s3311 + $0x340] sm:$0xff]
      %v3417 = vld [vmem:[%s3311 + $0x348] sm:$0xff]
      %v3418 = vld [vmem:[%s3311 + $0x350] sm:$0xff]
      %v3419 = vld [vmem:[%s3311 + $0x358] sm:$0xff]
      %v3420 = vld [vmem:[%s3311 + $0x360] sm:$0xff]
      %v3421 = vld [vmem:[%s3311 + $0x368] sm:$0xff]
      %v3422 = vld [vmem:[%s3311 + $0x370] sm:$0xff]
      %v3423 = vld [vmem:[%s3311 + $0x378] sm:$0xff]
      %v3424 = vld [vmem:[%s3311 + $0x380] sm:$0xff]
      %v3425 = vld [vmem:[%s3311 + $0x388] sm:$0xff]
      %v3426 = vld [vmem:[%s3311 + $0x390] sm:$0xff]
      %v3427 = vld [vmem:[%s3311 + $0x398] sm:$0xff]
      %v3428 = vld [vmem:[%s3311 + $0x3a0] sm:$0xff]
      %v3429 = vld [vmem:[%s3311 + $0x3a8] sm:$0xff]
      %v3430 = vld [vmem:[%s3311 + $0x3b0] sm:$0xff]
      %v3431 = vld [vmem:[%s3311 + $0x3b8] sm:$0xff]
      %v3432 = vld [vmem:[%s3311 + $0x3c0] sm:$0xff]
      %v3433 = vld [vmem:[%s3311 + $0x3c8] sm:$0xff]
      %v3434 = vld [vmem:[%s3311 + $0x3d0] sm:$0xff]
      %v3435 = vld [vmem:[%s3311 + $0x3d8] sm:$0xff]
      %v3436 = vld [vmem:[%s3311 + $0x3e0] sm:$0xff]
      %v3437 = vld [vmem:[%s3311 + $0x3e8] sm:$0xff]
      %v3438 = vld [vmem:[%s3311 + $0x3f0] sm:$0xff]
      %v3439 = vld [vmem:[%s3311 + $0x3f8] sm:$0xff]
      %v3440 = vld [vmem:[%s348] sm:$0xf]
      %v3441 = vld [vmem:[%s348 + $0x8] sm:$0xf]
      %v3442 = vld [vmem:[%s348 + $0x10] sm:$0xf]
      %v3443 = vld [vmem:[%s348 + $0x18] sm:$0xf]
      %v3444 = vld [vmem:[%s348 + $0x20] sm:$0xf]
      %v3445 = vld [vmem:[%s348 + $0x28] sm:$0xf]
      %v3446 = vld [vmem:[%s348 + $0x30] sm:$0xf]
      %v3447 = vld [vmem:[%s348 + $0x38] sm:$0xf]
      %v3448 = vld [vmem:[%s348 + $0x4] sm:$0x1]
      %v3449 = vld [vmem:[%s348 + $0xc] sm:$0x1]
      %v3450 = vld [vmem:[%s348 + $0x14] sm:$0x1]
      %v3451 = vld [vmem:[%s348 + $0x1c] sm:$0x1]
      %v3452 = vld [vmem:[%s348 + $0x24] sm:$0x1]
      %v3453 = vld [vmem:[%s348 + $0x2c] sm:$0x1]
      %v3454 = vld [vmem:[%s348 + $0x34] sm:$0x1]
      %v3455 = vld [vmem:[%s348 + $0x3c] sm:$0x1]
      %s3456 = sadd.s32 %s196, 2
      %s3457 = smul.u32 %s3456, 2
      %s3458 = smul.addr %s3457, 4
      %s3459 = scalar_lea.vmem %s184, %s3458
      %v3460 = vld [vmem:[%s3459] sm:$0xf]
      %v3461 = vld [vmem:[%s3459 + $0x8] sm:$0xf]
      %v3462 = vld [vmem:[%s3459 + $0x10] sm:$0xf]
      %v3463 = vld [vmem:[%s3459 + $0x18] sm:$0xf]
      %v3464 = vld [vmem:[%s3459 + $0x20] sm:$0xf]
      %v3465 = vld [vmem:[%s3459 + $0x28] sm:$0xf]
      %v3466 = vld [vmem:[%s3459 + $0x30] sm:$0xf]
      %v3467 = vld [vmem:[%s3459 + $0x38] sm:$0xf]
      %v3468 = vld [vmem:[%s3459 + $0x4] sm:$0x1]
      %v3469 = vld [vmem:[%s3459 + $0xc] sm:$0x1]
      %v3470 = vld [vmem:[%s3459 + $0x14] sm:$0x1]
      %v3471 = vld [vmem:[%s3459 + $0x1c] sm:$0x1]
      %v3472 = vld [vmem:[%s3459 + $0x24] sm:$0x1]
      %v3473 = vld [vmem:[%s3459 + $0x2c] sm:$0x1]
      %v3474 = vld [vmem:[%s3459 + $0x34] sm:$0x1]
      %v3475 = vld [vmem:[%s3459 + $0x3c] sm:$0x1]
      %v3492 = vunpack.c.l.b16 %v3440
      %v3493 = vunpack.c.l.b16 %v3448
      %v3494 = vunpack.c.l.b16 %v3441
      %v3495 = vunpack.c.l.b16 %v3449
      %v3496 = vunpack.c.l.b16 %v3442
      %v3497 = vunpack.c.l.b16 %v3450
      %v3498 = vunpack.c.l.b16 %v3443
      %v3499 = vunpack.c.l.b16 %v3451
      %v3500 = vunpack.c.l.b16 %v3444
      %v3501 = vunpack.c.l.b16 %v3452
      %v3502 = vunpack.c.l.b16 %v3445
      %v3503 = vunpack.c.l.b16 %v3453
      %v3504 = vunpack.c.l.b16 %v3446
      %v3505 = vunpack.c.l.b16 %v3454
      %v3506 = vunpack.c.l.b16 %v3447
      %v3507 = vunpack.c.l.b16 %v3455
      %v3508 = vpack.c.b16 %v3493, %v3492
      %v3509 = vpack.c.b16 %v3495, %v3494
      %v3510 = vpack.c.b16 %v3497, %v3496
      %v3511 = vpack.c.b16 %v3499, %v3498
      %v3512 = vpack.c.b16 %v3501, %v3500
      %v3513 = vpack.c.b16 %v3503, %v3502
      %v3514 = vpack.c.b16 %v3505, %v3504
      %v3515 = vpack.c.b16 %v3507, %v3506
      %v3517 = vshrl.u32 %v3508, 16
      %v3519 = vshll.u32 %v3508, 16
      %v3521 = vrot.slane %v3519, 1
      %v3522 = vor.u32 %v3517, %v3521
      %v3524 = vshrl.u32 %v3509, 16
      %v3526 = vshll.u32 %v3509, 16
      %v3528 = vrot.slane %v3526, 1
      %v3529 = vor.u32 %v3524, %v3528
      %v3531 = vshrl.u32 %v3510, 16
      %v3533 = vshll.u32 %v3510, 16
      %v3535 = vrot.slane %v3533, 1
      %v3536 = vor.u32 %v3531, %v3535
      %v3538 = vshrl.u32 %v3511, 16
      %v3540 = vshll.u32 %v3511, 16
      %v3542 = vrot.slane %v3540, 1
      %v3543 = vor.u32 %v3538, %v3542
      %v3545 = vshrl.u32 %v3512, 16
      %v3547 = vshll.u32 %v3512, 16
      %v3549 = vrot.slane %v3547, 1
      %v3550 = vor.u32 %v3545, %v3549
      %v3552 = vshrl.u32 %v3513, 16
      %v3554 = vshll.u32 %v3513, 16
      %v3556 = vrot.slane %v3554, 1
      %v3557 = vor.u32 %v3552, %v3556
      %v3559 = vshrl.u32 %v3514, 16
      %v3561 = vshll.u32 %v3514, 16
      %v3563 = vrot.slane %v3561, 1
      %v3564 = vor.u32 %v3559, %v3563
      %v3566 = vshrl.u32 %v3515, 16
      %v3568 = vshll.u32 %v3515, 16
      %v3570 = vrot.slane %v3568, 1
      %v3571 = vor.u32 %v3566, %v3570
      %v3588 = vunpack.c.l.b16 %v3460
      %v3589 = vunpack.c.l.b16 %v3468
      %v3590 = vunpack.c.l.b16 %v3461
      %v3591 = vunpack.c.l.b16 %v3469
      %v3592 = vunpack.c.l.b16 %v3462
      %v3593 = vunpack.c.l.b16 %v3470
      %v3594 = vunpack.c.l.b16 %v3463
      %v3595 = vunpack.c.l.b16 %v3471
      %v3596 = vunpack.c.l.b16 %v3464
      %v3597 = vunpack.c.l.b16 %v3472
      %v3598 = vunpack.c.l.b16 %v3465
      %v3599 = vunpack.c.l.b16 %v3473
      %v3600 = vunpack.c.l.b16 %v3466
      %v3601 = vunpack.c.l.b16 %v3474
      %v3602 = vunpack.c.l.b16 %v3467
      %v3603 = vunpack.c.l.b16 %v3475
      %v3604 = vpack.c.b16 %v3589, %v3588
      %v3605 = vpack.c.b16 %v3591, %v3590
      %v3606 = vpack.c.b16 %v3593, %v3592
      %v3607 = vpack.c.b16 %v3595, %v3594
      %v3608 = vpack.c.b16 %v3597, %v3596
      %v3609 = vpack.c.b16 %v3599, %v3598
      %v3610 = vpack.c.b16 %v3601, %v3600
      %v3611 = vpack.c.b16 %v3603, %v3602
      %v3613 = vshrl.u32 %v3604, 16
      %v3615 = vshll.u32 %v3604, 16
      %v3617 = vrot.slane %v3615, 1
      %v3618 = vor.u32 %v3613, %v3617
      %v3620 = vshrl.u32 %v3605, 16
      %v3622 = vshll.u32 %v3605, 16
      %v3624 = vrot.slane %v3622, 1
      %v3625 = vor.u32 %v3620, %v3624
      %v3627 = vshrl.u32 %v3606, 16
      %v3629 = vshll.u32 %v3606, 16
      %v3631 = vrot.slane %v3629, 1
      %v3632 = vor.u32 %v3627, %v3631
      %v3634 = vshrl.u32 %v3607, 16
      %v3636 = vshll.u32 %v3607, 16
      %v3638 = vrot.slane %v3636, 1
      %v3639 = vor.u32 %v3634, %v3638
      %v3641 = vshrl.u32 %v3608, 16
      %v3643 = vshll.u32 %v3608, 16
      %v3645 = vrot.slane %v3643, 1
      %v3646 = vor.u32 %v3641, %v3645
      %v3648 = vshrl.u32 %v3609, 16
      %v3650 = vshll.u32 %v3609, 16
      %v3652 = vrot.slane %v3650, 1
      %v3653 = vor.u32 %v3648, %v3652
      %v3655 = vshrl.u32 %v3610, 16
      %v3657 = vshll.u32 %v3610, 16
      %v3659 = vrot.slane %v3657, 1
      %v3660 = vor.u32 %v3655, %v3659
      %v3662 = vshrl.u32 %v3611, 16
      %v3664 = vshll.u32 %v3611, 16
      %v3666 = vrot.slane %v3664, 1
      %v3667 = vor.u32 %v3662, %v3666
      %v3668 = vunpack.c.l.b16 %v3522
      %v3669 = vunpack.c.l.b16 %v3618
      %v3670 = vunpack.c.l.b16 %v3529
      %v3671 = vunpack.c.l.b16 %v3625
      %v3672 = vunpack.c.l.b16 %v3536
      %v3673 = vunpack.c.l.b16 %v3632
      %v3674 = vunpack.c.l.b16 %v3543
      %v3675 = vunpack.c.l.b16 %v3639
      %v3676 = vunpack.c.l.b16 %v3550
      %v3677 = vunpack.c.l.b16 %v3646
      %v3678 = vunpack.c.l.b16 %v3557
      %v3679 = vunpack.c.l.b16 %v3653
      %v3680 = vunpack.c.l.b16 %v3564
      %v3681 = vunpack.c.l.b16 %v3660
      %v3682 = vunpack.c.l.b16 %v3571
      %v3683 = vunpack.c.l.b16 %v3667
      %v3684 = vpack.c.b16 %v3494, %v3492
      %v3685 = vpack.c.b16 %v3670, %v3668
      %v3686 = vpack.c.b16 %v3590, %v3588
      %v3687 = vpack.c.b16 %v3671, %v3669
      %v3688 = vpack.c.b16 %v3498, %v3496
      %v3689 = vpack.c.b16 %v3674, %v3672
      %v3690 = vpack.c.b16 %v3594, %v3592
      %v3691 = vpack.c.b16 %v3675, %v3673
      %v3692 = vpack.c.b16 %v3502, %v3500
      %v3693 = vpack.c.b16 %v3678, %v3676
      %v3694 = vpack.c.b16 %v3598, %v3596
      %v3695 = vpack.c.b16 %v3679, %v3677
      %v3696 = vpack.c.b16 %v3506, %v3504
      %v3697 = vpack.c.b16 %v3682, %v3680
      %v3698 = vpack.c.b16 %v3602, %v3600
      %v3699 = vpack.c.b16 %v3683, %v3681
      %v3844 = vunpack.c.l.b16 %v3312
      %v3845 = vunpack.c.h.b16 %v3312
      %v3846 = vunpack.c.l.b16 %v3313
      %v3847 = vunpack.c.h.b16 %v3313
      %v3848 = vunpack.c.l.b16 %v3314
      %v3849 = vunpack.c.h.b16 %v3314
      %v3850 = vunpack.c.l.b16 %v3315
      %v3851 = vunpack.c.h.b16 %v3315
      %v3852 = vunpack.c.l.b16 %v3316
      %v3853 = vunpack.c.h.b16 %v3316
      %v3854 = vunpack.c.l.b16 %v3317
      %v3855 = vunpack.c.h.b16 %v3317
      %v3856 = vunpack.c.l.b16 %v3318
      %v3857 = vunpack.c.h.b16 %v3318
      %v3858 = vunpack.c.l.b16 %v3319
      %v3859 = vunpack.c.h.b16 %v3319
      %v3860 = vunpack.c.l.b16 %v3320
      %v3861 = vunpack.c.h.b16 %v3320
      %v3862 = vunpack.c.l.b16 %v3321
      %v3863 = vunpack.c.h.b16 %v3321
      %v3864 = vunpack.c.l.b16 %v3322
      %v3865 = vunpack.c.h.b16 %v3322
      %v3866 = vunpack.c.l.b16 %v3323
      %v3867 = vunpack.c.h.b16 %v3323
      %v3868 = vunpack.c.l.b16 %v3324
      %v3869 = vunpack.c.h.b16 %v3324
      %v3870 = vunpack.c.l.b16 %v3325
      %v3871 = vunpack.c.h.b16 %v3325
      %v3872 = vunpack.c.l.b16 %v3326
      %v3873 = vunpack.c.h.b16 %v3326
      %v3874 = vunpack.c.l.b16 %v3327
      %v3875 = vunpack.c.h.b16 %v3327
      %v3876 = vunpack.c.l.b16 %v3328
      %v3877 = vunpack.c.h.b16 %v3328
      %v3878 = vunpack.c.l.b16 %v3329
      %v3879 = vunpack.c.h.b16 %v3329
      %v3880 = vunpack.c.l.b16 %v3330
      %v3881 = vunpack.c.h.b16 %v3330
      %v3882 = vunpack.c.l.b16 %v3331
      %v3883 = vunpack.c.h.b16 %v3331
      %v3884 = vunpack.c.l.b16 %v3332
      %v3885 = vunpack.c.h.b16 %v3332
      %v3886 = vunpack.c.l.b16 %v3333
      %v3887 = vunpack.c.h.b16 %v3333
      %v3888 = vunpack.c.l.b16 %v3334
      %v3889 = vunpack.c.h.b16 %v3334
      %v3890 = vunpack.c.l.b16 %v3335
      %v3891 = vunpack.c.h.b16 %v3335
      %v3892 = vunpack.c.l.b16 %v3336
      %v3893 = vunpack.c.h.b16 %v3336
      %v3894 = vunpack.c.l.b16 %v3337
      %v3895 = vunpack.c.h.b16 %v3337
      %v3896 = vunpack.c.l.b16 %v3338
      %v3897 = vunpack.c.h.b16 %v3338
      %v3898 = vunpack.c.l.b16 %v3339
      %v3899 = vunpack.c.h.b16 %v3339
      %v3900 = vunpack.c.l.b16 %v3340
      %v3901 = vunpack.c.h.b16 %v3340
      %v3902 = vunpack.c.l.b16 %v3341
      %v3903 = vunpack.c.h.b16 %v3341
      %v3904 = vunpack.c.l.b16 %v3342
      %v3905 = vunpack.c.h.b16 %v3342
      %v3906 = vunpack.c.l.b16 %v3343
      %v3907 = vunpack.c.h.b16 %v3343
      %v3908 = vunpack.c.l.b16 %v3344
      %v3909 = vunpack.c.h.b16 %v3344
      %v3910 = vunpack.c.l.b16 %v3345
      %v3911 = vunpack.c.h.b16 %v3345
      %v3912 = vunpack.c.l.b16 %v3346
      %v3913 = vunpack.c.h.b16 %v3346
      %v3914 = vunpack.c.l.b16 %v3347
      %v3915 = vunpack.c.h.b16 %v3347
      %v3916 = vunpack.c.l.b16 %v3348
      %v3917 = vunpack.c.h.b16 %v3348
      %v3918 = vunpack.c.l.b16 %v3349
      %v3919 = vunpack.c.h.b16 %v3349
      %v3920 = vunpack.c.l.b16 %v3350
      %v3921 = vunpack.c.h.b16 %v3350
      %v3922 = vunpack.c.l.b16 %v3351
      %v3923 = vunpack.c.h.b16 %v3351
      %v3924 = vunpack.c.l.b16 %v3352
      %v3925 = vunpack.c.h.b16 %v3352
      %v3926 = vunpack.c.l.b16 %v3353
      %v3927 = vunpack.c.h.b16 %v3353
      %v3928 = vunpack.c.l.b16 %v3354
      %v3929 = vunpack.c.h.b16 %v3354
      %v3930 = vunpack.c.l.b16 %v3355
      %v3931 = vunpack.c.h.b16 %v3355
      %v3932 = vunpack.c.l.b16 %v3356
      %v3933 = vunpack.c.h.b16 %v3356
      %v3934 = vunpack.c.l.b16 %v3357
      %v3935 = vunpack.c.h.b16 %v3357
      %v3936 = vunpack.c.l.b16 %v3358
      %v3937 = vunpack.c.h.b16 %v3358
      %v3938 = vunpack.c.l.b16 %v3359
      %v3939 = vunpack.c.h.b16 %v3359
      %v3940 = vunpack.c.l.b16 %v3360
      %v3941 = vunpack.c.h.b16 %v3360
      %v3942 = vunpack.c.l.b16 %v3361
      %v3943 = vunpack.c.h.b16 %v3361
      %v3944 = vunpack.c.l.b16 %v3362
      %v3945 = vunpack.c.h.b16 %v3362
      %v3946 = vunpack.c.l.b16 %v3363
      %v3947 = vunpack.c.h.b16 %v3363
      %v3948 = vunpack.c.l.b16 %v3364
      %v3949 = vunpack.c.h.b16 %v3364
      %v3950 = vunpack.c.l.b16 %v3365
      %v3951 = vunpack.c.h.b16 %v3365
      %v3952 = vunpack.c.l.b16 %v3366
      %v3953 = vunpack.c.h.b16 %v3366
      %v3954 = vunpack.c.l.b16 %v3367
      %v3955 = vunpack.c.h.b16 %v3367
      %v3956 = vunpack.c.l.b16 %v3368
      %v3957 = vunpack.c.h.b16 %v3368
      %v3958 = vunpack.c.l.b16 %v3369
      %v3959 = vunpack.c.h.b16 %v3369
      %v3960 = vunpack.c.l.b16 %v3370
      %v3961 = vunpack.c.h.b16 %v3370
      %v3962 = vunpack.c.l.b16 %v3371
      %v3963 = vunpack.c.h.b16 %v3371
      %v3964 = vunpack.c.l.b16 %v3372
      %v3965 = vunpack.c.h.b16 %v3372
      %v3966 = vunpack.c.l.b16 %v3373
      %v3967 = vunpack.c.h.b16 %v3373
      %v3968 = vunpack.c.l.b16 %v3374
      %v3969 = vunpack.c.h.b16 %v3374
      %v3970 = vunpack.c.l.b16 %v3375
      %v3971 = vunpack.c.h.b16 %v3375
      %v3972 = vunpack.c.l.b16 %v3376
      %v3973 = vunpack.c.h.b16 %v3376
      %v3974 = vunpack.c.l.b16 %v3377
      %v3975 = vunpack.c.h.b16 %v3377
      %v3976 = vunpack.c.l.b16 %v3378
      %v3977 = vunpack.c.h.b16 %v3378
      %v3978 = vunpack.c.l.b16 %v3379
      %v3979 = vunpack.c.h.b16 %v3379
      %v3980 = vunpack.c.l.b16 %v3380
      %v3981 = vunpack.c.h.b16 %v3380
      %v3982 = vunpack.c.l.b16 %v3381
      %v3983 = vunpack.c.h.b16 %v3381
      %v3984 = vunpack.c.l.b16 %v3382
      %v3985 = vunpack.c.h.b16 %v3382
      %v3986 = vunpack.c.l.b16 %v3383
      %v3987 = vunpack.c.h.b16 %v3383
      %v3988 = vunpack.c.l.b16 %v3384
      %v3989 = vunpack.c.h.b16 %v3384
      %v3990 = vunpack.c.l.b16 %v3385
      %v3991 = vunpack.c.h.b16 %v3385
      %v3992 = vunpack.c.l.b16 %v3386
      %v3993 = vunpack.c.h.b16 %v3386
      %v3994 = vunpack.c.l.b16 %v3387
      %v3995 = vunpack.c.h.b16 %v3387
      %v3996 = vunpack.c.l.b16 %v3388
      %v3997 = vunpack.c.h.b16 %v3388
      %v3998 = vunpack.c.l.b16 %v3389
      %v3999 = vunpack.c.h.b16 %v3389
      %v4000 = vunpack.c.l.b16 %v3390
      %v4001 = vunpack.c.h.b16 %v3390
      %v4002 = vunpack.c.l.b16 %v3391
      %v4003 = vunpack.c.h.b16 %v3391
      %v4004 = vunpack.c.l.b16 %v3392
      %v4005 = vunpack.c.h.b16 %v3392
      %v4006 = vunpack.c.l.b16 %v3393
      %v4007 = vunpack.c.h.b16 %v3393
      %v4008 = vunpack.c.l.b16 %v3394
      %v4009 = vunpack.c.h.b16 %v3394
      %v4010 = vunpack.c.l.b16 %v3395
      %v4011 = vunpack.c.h.b16 %v3395
      %v4012 = vunpack.c.l.b16 %v3396
      %v4013 = vunpack.c.h.b16 %v3396
      %v4014 = vunpack.c.l.b16 %v3397
      %v4015 = vunpack.c.h.b16 %v3397
      %v4016 = vunpack.c.l.b16 %v3398
      %v4017 = vunpack.c.h.b16 %v3398
      %v4018 = vunpack.c.l.b16 %v3399
      %v4019 = vunpack.c.h.b16 %v3399
      %v4020 = vunpack.c.l.b16 %v3400
      %v4021 = vunpack.c.h.b16 %v3400
      %v4022 = vunpack.c.l.b16 %v3401
      %v4023 = vunpack.c.h.b16 %v3401
      %v4024 = vunpack.c.l.b16 %v3402
      %v4025 = vunpack.c.h.b16 %v3402
      %v4026 = vunpack.c.l.b16 %v3403
      %v4027 = vunpack.c.h.b16 %v3403
      %v4028 = vunpack.c.l.b16 %v3404
      %v4029 = vunpack.c.h.b16 %v3404
      %v4030 = vunpack.c.l.b16 %v3405
      %v4031 = vunpack.c.h.b16 %v3405
      %v4032 = vunpack.c.l.b16 %v3406
      %v4033 = vunpack.c.h.b16 %v3406
      %v4034 = vunpack.c.l.b16 %v3407
      %v4035 = vunpack.c.h.b16 %v3407
      %v4036 = vunpack.c.l.b16 %v3408
      %v4037 = vunpack.c.h.b16 %v3408
      %v4038 = vunpack.c.l.b16 %v3409
      %v4039 = vunpack.c.h.b16 %v3409
      %v4040 = vunpack.c.l.b16 %v3410
      %v4041 = vunpack.c.h.b16 %v3410
      %v4042 = vunpack.c.l.b16 %v3411
      %v4043 = vunpack.c.h.b16 %v3411
      %v4044 = vunpack.c.l.b16 %v3412
      %v4045 = vunpack.c.h.b16 %v3412
      %v4046 = vunpack.c.l.b16 %v3413
      %v4047 = vunpack.c.h.b16 %v3413
      %v4048 = vunpack.c.l.b16 %v3414
      %v4049 = vunpack.c.h.b16 %v3414
      %v4050 = vunpack.c.l.b16 %v3415
      %v4051 = vunpack.c.h.b16 %v3415
      %v4052 = vunpack.c.l.b16 %v3416
      %v4053 = vunpack.c.h.b16 %v3416
      %v4054 = vunpack.c.l.b16 %v3417
      %v4055 = vunpack.c.h.b16 %v3417
      %v4056 = vunpack.c.l.b16 %v3418
      %v4057 = vunpack.c.h.b16 %v3418
      %v4058 = vunpack.c.l.b16 %v3419
      %v4059 = vunpack.c.h.b16 %v3419
      %v4060 = vunpack.c.l.b16 %v3420
      %v4061 = vunpack.c.h.b16 %v3420
      %v4062 = vunpack.c.l.b16 %v3421
      %v4063 = vunpack.c.h.b16 %v3421
      %v4064 = vunpack.c.l.b16 %v3422
      %v4065 = vunpack.c.h.b16 %v3422
      %v4066 = vunpack.c.l.b16 %v3423
      %v4067 = vunpack.c.h.b16 %v3423
      %v4068 = vunpack.c.l.b16 %v3424
      %v4069 = vunpack.c.h.b16 %v3424
      %v4070 = vunpack.c.l.b16 %v3425
      %v4071 = vunpack.c.h.b16 %v3425
      %v4072 = vunpack.c.l.b16 %v3426
      %v4073 = vunpack.c.h.b16 %v3426
      %v4074 = vunpack.c.l.b16 %v3427
      %v4075 = vunpack.c.h.b16 %v3427
      %v4076 = vunpack.c.l.b16 %v3428
      %v4077 = vunpack.c.h.b16 %v3428
      %v4078 = vunpack.c.l.b16 %v3429
      %v4079 = vunpack.c.h.b16 %v3429
      %v4080 = vunpack.c.l.b16 %v3430
      %v4081 = vunpack.c.h.b16 %v3430
      %v4082 = vunpack.c.l.b16 %v3431
      %v4083 = vunpack.c.h.b16 %v3431
      %v4084 = vunpack.c.l.b16 %v3432
      %v4085 = vunpack.c.h.b16 %v3432
      %v4086 = vunpack.c.l.b16 %v3433
      %v4087 = vunpack.c.h.b16 %v3433
      %v4088 = vunpack.c.l.b16 %v3434
      %v4089 = vunpack.c.h.b16 %v3434
      %v4090 = vunpack.c.l.b16 %v3435
      %v4091 = vunpack.c.h.b16 %v3435
      %v4092 = vunpack.c.l.b16 %v3436
      %v4093 = vunpack.c.h.b16 %v3436
      %v4094 = vunpack.c.l.b16 %v3437
      %v4095 = vunpack.c.h.b16 %v3437
      %v4096 = vunpack.c.l.b16 %v3438
      %v4097 = vunpack.c.h.b16 %v3438
      %v4098 = vunpack.c.l.b16 %v3439
      %v4099 = vunpack.c.h.b16 %v3439
      %v4100 = vpack.c.b16 %v3848, %v3844
      %v4101 = vpack.c.b16 %v3849, %v3845
      %v4102 = vpack.c.b16 %v3850, %v3846
      %v4103 = vpack.c.b16 %v3851, %v3847
      %v4104 = vpack.c.b16 %v3856, %v3852
      %v4105 = vpack.c.b16 %v3857, %v3853
      %v4106 = vpack.c.b16 %v3858, %v3854
      %v4107 = vpack.c.b16 %v3859, %v3855
      %v4108 = vpack.c.b16 %v3864, %v3860
      %v4109 = vpack.c.b16 %v3865, %v3861
      %v4110 = vpack.c.b16 %v3866, %v3862
      %v4111 = vpack.c.b16 %v3867, %v3863
      %v4112 = vpack.c.b16 %v3872, %v3868
      %v4113 = vpack.c.b16 %v3873, %v3869
      %v4114 = vpack.c.b16 %v3874, %v3870
      %v4115 = vpack.c.b16 %v3875, %v3871
      %v4116 = vpack.c.b16 %v3880, %v3876
      %v4117 = vpack.c.b16 %v3881, %v3877
      %v4118 = vpack.c.b16 %v3882, %v3878
      %v4119 = vpack.c.b16 %v3883, %v3879
      %v4120 = vpack.c.b16 %v3888, %v3884
      %v4121 = vpack.c.b16 %v3889, %v3885
      %v4122 = vpack.c.b16 %v3890, %v3886
      %v4123 = vpack.c.b16 %v3891, %v3887
      %v4124 = vpack.c.b16 %v3896, %v3892
      %v4125 = vpack.c.b16 %v3897, %v3893
      %v4126 = vpack.c.b16 %v3898, %v3894
      %v4127 = vpack.c.b16 %v3899, %v3895
      %v4128 = vpack.c.b16 %v3904, %v3900
      %v4129 = vpack.c.b16 %v3905, %v3901
      %v4130 = vpack.c.b16 %v3906, %v3902
      %v4131 = vpack.c.b16 %v3907, %v3903
      %v4132 = vpack.c.b16 %v3912, %v3908
      %v4133 = vpack.c.b16 %v3913, %v3909
      %v4134 = vpack.c.b16 %v3914, %v3910
      %v4135 = vpack.c.b16 %v3915, %v3911
      %v4136 = vpack.c.b16 %v3920, %v3916
      %v4137 = vpack.c.b16 %v3921, %v3917
      %v4138 = vpack.c.b16 %v3922, %v3918
      %v4139 = vpack.c.b16 %v3923, %v3919
      %v4140 = vpack.c.b16 %v3928, %v3924
      %v4141 = vpack.c.b16 %v3929, %v3925
      %v4142 = vpack.c.b16 %v3930, %v3926
      %v4143 = vpack.c.b16 %v3931, %v3927
      %v4144 = vpack.c.b16 %v3936, %v3932
      %v4145 = vpack.c.b16 %v3937, %v3933
      %v4146 = vpack.c.b16 %v3938, %v3934
      %v4147 = vpack.c.b16 %v3939, %v3935
      %v4148 = vpack.c.b16 %v3944, %v3940
      %v4149 = vpack.c.b16 %v3945, %v3941
      %v4150 = vpack.c.b16 %v3946, %v3942
      %v4151 = vpack.c.b16 %v3947, %v3943
      %v4152 = vpack.c.b16 %v3952, %v3948
      %v4153 = vpack.c.b16 %v3953, %v3949
      %v4154 = vpack.c.b16 %v3954, %v3950
      %v4155 = vpack.c.b16 %v3955, %v3951
      %v4156 = vpack.c.b16 %v3960, %v3956
      %v4157 = vpack.c.b16 %v3961, %v3957
      %v4158 = vpack.c.b16 %v3962, %v3958
      %v4159 = vpack.c.b16 %v3963, %v3959
      %v4160 = vpack.c.b16 %v3968, %v3964
      %v4161 = vpack.c.b16 %v3969, %v3965
      %v4162 = vpack.c.b16 %v3970, %v3966
      %v4163 = vpack.c.b16 %v3971, %v3967
      %v4164 = vpack.c.b16 %v3976, %v3972
      %v4165 = vpack.c.b16 %v3977, %v3973
      %v4166 = vpack.c.b16 %v3978, %v3974
      %v4167 = vpack.c.b16 %v3979, %v3975
      %v4168 = vpack.c.b16 %v3984, %v3980
      %v4169 = vpack.c.b16 %v3985, %v3981
      %v4170 = vpack.c.b16 %v3986, %v3982
      %v4171 = vpack.c.b16 %v3987, %v3983
      %v4172 = vpack.c.b16 %v3992, %v3988
      %v4173 = vpack.c.b16 %v3993, %v3989
      %v4174 = vpack.c.b16 %v3994, %v3990
      %v4175 = vpack.c.b16 %v3995, %v3991
      %v4176 = vpack.c.b16 %v4000, %v3996
      %v4177 = vpack.c.b16 %v4001, %v3997
      %v4178 = vpack.c.b16 %v4002, %v3998
      %v4179 = vpack.c.b16 %v4003, %v3999
      %v4180 = vpack.c.b16 %v4008, %v4004
      %v4181 = vpack.c.b16 %v4009, %v4005
      %v4182 = vpack.c.b16 %v4010, %v4006
      %v4183 = vpack.c.b16 %v4011, %v4007
      %v4184 = vpack.c.b16 %v4016, %v4012
      %v4185 = vpack.c.b16 %v4017, %v4013
      %v4186 = vpack.c.b16 %v4018, %v4014
      %v4187 = vpack.c.b16 %v4019, %v4015
      %v4188 = vpack.c.b16 %v4024, %v4020
      %v4189 = vpack.c.b16 %v4025, %v4021
      %v4190 = vpack.c.b16 %v4026, %v4022
      %v4191 = vpack.c.b16 %v4027, %v4023
      %v4192 = vpack.c.b16 %v4032, %v4028
      %v4193 = vpack.c.b16 %v4033, %v4029
      %v4194 = vpack.c.b16 %v4034, %v4030
      %v4195 = vpack.c.b16 %v4035, %v4031
      %v4196 = vpack.c.b16 %v4040, %v4036
      %v4197 = vpack.c.b16 %v4041, %v4037
      %v4198 = vpack.c.b16 %v4042, %v4038
      %v4199 = vpack.c.b16 %v4043, %v4039
      %v4200 = vpack.c.b16 %v4048, %v4044
      %v4201 = vpack.c.b16 %v4049, %v4045
      %v4202 = vpack.c.b16 %v4050, %v4046
      %v4203 = vpack.c.b16 %v4051, %v4047
      %v4204 = vpack.c.b16 %v4056, %v4052
      %v4205 = vpack.c.b16 %v4057, %v4053
      %v4206 = vpack.c.b16 %v4058, %v4054
      %v4207 = vpack.c.b16 %v4059, %v4055
      %v4208 = vpack.c.b16 %v4064, %v4060
      %v4209 = vpack.c.b16 %v4065, %v4061
      %v4210 = vpack.c.b16 %v4066, %v4062
      %v4211 = vpack.c.b16 %v4067, %v4063
      %v4212 = vpack.c.b16 %v4072, %v4068
      %v4213 = vpack.c.b16 %v4073, %v4069
      %v4214 = vpack.c.b16 %v4074, %v4070
      %v4215 = vpack.c.b16 %v4075, %v4071
      %v4216 = vpack.c.b16 %v4080, %v4076
      %v4217 = vpack.c.b16 %v4081, %v4077
      %v4218 = vpack.c.b16 %v4082, %v4078
      %v4219 = vpack.c.b16 %v4083, %v4079
      %v4220 = vpack.c.b16 %v4088, %v4084
      %v4221 = vpack.c.b16 %v4089, %v4085
      %v4222 = vpack.c.b16 %v4090, %v4086
      %v4223 = vpack.c.b16 %v4091, %v4087
      %v4224 = vpack.c.b16 %v4096, %v4092
      %v4225 = vpack.c.b16 %v4097, %v4093
      %v4226 = vpack.c.b16 %v4098, %v4094
      %v4227 = vpack.c.b16 %v4099, %v4095
      %4356 = vmatprep.subr.bf16.mxu0 %v4101
      %4357 = vmatpush1.bf16.msra.mxu0 %v4100
      %4358 = vmatprep.subr.bf16.mxu0 %v4105
      %4359 = vmatpush1.bf16.msra.mxu0 %v4104
      %4360 = vmatprep.subr.bf16.mxu0 %v4109
      %4361 = vmatpush1.bf16.msra.mxu0 %v4108
      %4362 = vmatprep.subr.bf16.mxu0 %v4113
      %4363 = vmatpush1.bf16.msra.mxu0 %v4112
      %4364 = vmatprep.subr.bf16.mxu0 %v4117
      %4365 = vmatpush1.bf16.msra.mxu0 %v4116
      %4366 = vmatprep.subr.bf16.mxu0 %v4121
      %4367 = vmatpush1.bf16.msra.mxu0 %v4120
      %4368 = vmatprep.subr.bf16.mxu0 %v4125
      %4369 = vmatpush1.bf16.msra.mxu0 %v4124
      %4370 = vmatprep.subr.bf16.mxu0 %v4129
      %4371 = vmatpush1.bf16.msra.mxu0 %v4128
      %4372 = vmatprep.subr.bf16.mxu0 %v4133
      %4373 = vmatpush1.bf16.msra.mxu0 %v4132
      %4374 = vmatprep.subr.bf16.mxu0 %v4137
      %4375 = vmatpush1.bf16.msra.mxu0 %v4136
      %4376 = vmatprep.subr.bf16.mxu0 %v4141
      %4377 = vmatpush1.bf16.msra.mxu0 %v4140
      %4378 = vmatprep.subr.bf16.mxu0 %v4145
      %4379 = vmatpush1.bf16.msra.mxu0 %v4144
      %4380 = vmatprep.subr.bf16.mxu0 %v4149
      %4381 = vmatpush1.bf16.msra.mxu0 %v4148
      %4382 = vmatprep.subr.bf16.mxu0 %v4153
      %4383 = vmatpush1.bf16.msra.mxu0 %v4152
      %4384 = vmatprep.subr.bf16.mxu0 %v4157
      %4385 = vmatpush1.bf16.msra.mxu0 %v4156
      %4386 = vmatprep.subr.bf16.mxu0 %v4161
      %4387 = vmatpush1.bf16.msra.mxu0 %v4160
      %4388 = vmatprep.mubr.bf16.mxu0 %v3685
      %4389 = vmatmul.mubr.bf16.gmra.mrb[0].mxu0 %v3684
      %v4390 = vpop.f32.mrb[0].mxu0
      %v4391 = vadd.f32 %v577, %v4390
      %v4392 = vpop.f32.mrb[0].mxu0
      %v4393 = vadd.f32 %v581, %v4392
      %v4394 = vpop.f32.mrb[0].mxu0
      %v4395 = vadd.f32 %v577, %v4394
      %v4396 = vpop.f32.mrb[0].mxu0
      %v4397 = vadd.f32 %v581, %v4396
      %4398 = vmatprep.mubr.bf16.mxu0 %v3689
      %4399 = vmatmul.mubr.bf16.gmra.mrb[0].mxu0 %v3688
      %v4400 = vpop.f32.mrb[0].mxu0
      %v4401 = vadd.f32 %v577, %v4400
      %v4402 = vpop.f32.mrb[0].mxu0
      %v4403 = vadd.f32 %v581, %v4402
      %v4404 = vpop.f32.mrb[0].mxu0
      %v4405 = vadd.f32 %v577, %v4404
      %v4406 = vpop.f32.mrb[0].mxu0
      %v4407 = vadd.f32 %v581, %v4406
      %4408 = vmatprep.mubr.bf16.mxu0 %v3693
      %4409 = vmatmul.mubr.bf16.gmra.mrb[0].mxu0 %v3692
      %v4410 = vpop.f32.mrb[0].mxu0
      %v4411 = vadd.f32 %v577, %v4410
      %v4412 = vpop.f32.mrb[0].mxu0
      %v4413 = vadd.f32 %v581, %v4412
      %v4414 = vpop.f32.mrb[0].mxu0
      %v4415 = vadd.f32 %v577, %v4414
      %v4416 = vpop.f32.mrb[0].mxu0
      %v4417 = vadd.f32 %v581, %v4416
      %4418 = vmatprep.mubr.bf16.mxu0 %v3697
      %4419 = vmatmul.mubr.bf16.gmra.mrb[0].mxu0 %v3696
      %v4420 = vpop.f32.mrb[0].mxu0
      %v4421 = vadd.f32 %v577, %v4420
      %v4422 = vpop.f32.mrb[0].mxu0
      %v4423 = vadd.f32 %v581, %v4422
      %v4424 = vpop.f32.mrb[0].mxu0
      %v4425 = vadd.f32 %v577, %v4424
      %v4426 = vpop.f32.mrb[0].mxu0
      %v4427 = vadd.f32 %v581, %v4426
      %4428 = vdwg.mxu0
      %4429 = vmatprep.subr.bf16.mxu0 %v4165
      %4430 = vmatpush1.bf16.msra.mxu0 %v4164
      %4431 = vmatprep.subr.bf16.mxu0 %v4169
      %4432 = vmatpush1.bf16.msra.mxu0 %v4168
      %4433 = vmatprep.subr.bf16.mxu0 %v4173
      %4434 = vmatpush1.bf16.msra.mxu0 %v4172
      %4435 = vmatprep.subr.bf16.mxu0 %v4177
      %4436 = vmatpush1.bf16.msra.mxu0 %v4176
      %4437 = vmatprep.subr.bf16.mxu0 %v4181
      %4438 = vmatpush1.bf16.msra.mxu0 %v4180
      %4439 = vmatprep.subr.bf16.mxu0 %v4185
      %4440 = vmatpush1.bf16.msra.mxu0 %v4184
      %4441 = vmatprep.subr.bf16.mxu0 %v4189
      %4442 = vmatpush1.bf16.msra.mxu0 %v4188
      %4443 = vmatprep.subr.bf16.mxu0 %v4193
      %4444 = vmatpush1.bf16.msra.mxu0 %v4192
      %4445 = vmatprep.subr.bf16.mxu0 %v4197
      %4446 = vmatpush1.bf16.msra.mxu0 %v4196
      %4447 = vmatprep.subr.bf16.mxu0 %v4201
      %4448 = vmatpush1.bf16.msra.mxu0 %v4200
      %4449 = vmatprep.subr.bf16.mxu0 %v4205
      %4450 = vmatpush1.bf16.msra.mxu0 %v4204
      %4451 = vmatprep.subr.bf16.mxu0 %v4209
      %4452 = vmatpush1.bf16.msra.mxu0 %v4208
      %4453 = vmatprep.subr.bf16.mxu0 %v4213
      %4454 = vmatpush1.bf16.msra.mxu0 %v4212
      %4455 = vmatprep.subr.bf16.mxu0 %v4217
      %4456 = vmatpush1.bf16.msra.mxu0 %v4216
      %4457 = vmatprep.subr.bf16.mxu0 %v4221
      %4458 = vmatpush1.bf16.msra.mxu0 %v4220
      %4459 = vmatprep.subr.bf16.mxu0 %v4225
      %4460 = vmatpush1.bf16.msra.mxu0 %v4224
      %4461 = vmatprep.mubr.bf16.mxu0 %v3687
      %4462 = vmatmul.mubr.bf16.gmra.mrb[0].mxu0 %v3686
      %v4463 = vpop.f32.mrb[0].mxu0
      %v4464 = vadd.f32 %v4391, %v4463
      %v4465 = vpop.f32.mrb[0].mxu0
      %v4466 = vadd.f32 %v4393, %v4465
      %v4467 = vpop.f32.mrb[0].mxu0
      %v4468 = vadd.f32 %v4395, %v4467
      %v4469 = vpop.f32.mrb[0].mxu0
      %v4470 = vadd.f32 %v4397, %v4469
      %4471 = vmatprep.mubr.bf16.mxu0 %v3691
      %4472 = vmatmul.mubr.bf16.gmra.mrb[0].mxu0 %v3690
      %v4473 = vpop.f32.mrb[0].mxu0
      %v4474 = vadd.f32 %v4401, %v4473
      %v4475 = vpop.f32.mrb[0].mxu0
      %v4476 = vadd.f32 %v4403, %v4475
      %v4477 = vpop.f32.mrb[0].mxu0
      %v4478 = vadd.f32 %v4405, %v4477
      %v4479 = vpop.f32.mrb[0].mxu0
      %v4480 = vadd.f32 %v4407, %v4479
      %4481 = vmatprep.mubr.bf16.mxu0 %v3695
      %4482 = vmatmul.mubr.bf16.gmra.mrb[0].mxu0 %v3694
      %v4483 = vpop.f32.mrb[0].mxu0
      %v4484 = vadd.f32 %v4411, %v4483
      %v4485 = vpop.f32.mrb[0].mxu0
      %v4486 = vadd.f32 %v4413, %v4485
      %v4487 = vpop.f32.mrb[0].mxu0
      %v4488 = vadd.f32 %v4415, %v4487
      %v4489 = vpop.f32.mrb[0].mxu0
      %v4490 = vadd.f32 %v4417, %v4489
      %4491 = vmatprep.mubr.bf16.mxu0 %v3699
      %4492 = vmatmul.mubr.bf16.gmra.mrb[0].mxu0 %v3698
      %v4493 = vpop.f32.mrb[0].mxu0
      %v4494 = vadd.f32 %v4421, %v4493
      %v4495 = vpop.f32.mrb[0].mxu0
      %v4496 = vadd.f32 %v4423, %v4495
      %v4497 = vpop.f32.mrb[0].mxu0
      %v4498 = vadd.f32 %v4425, %v4497
      %v4499 = vpop.f32.mrb[0].mxu0
      %v4500 = vadd.f32 %v4427, %v4499
      %4501 = vdwg.mxu0
      %4502 = vmatprep.subr.bf16.mxu0 %v4103
      %4503 = vmatpush1.bf16.msra.mxu0 %v4102
      %4504 = vmatprep.subr.bf16.mxu0 %v4107
      %4505 = vmatpush1.bf16.msra.mxu0 %v4106
      %4506 = vmatprep.subr.bf16.mxu0 %v4111
      %4507 = vmatpush1.bf16.msra.mxu0 %v4110
      %4508 = vmatprep.subr.bf16.mxu0 %v4115
      %4509 = vmatpush1.bf16.msra.mxu0 %v4114
      %4510 = vmatprep.subr.bf16.mxu0 %v4119
      %4511 = vmatpush1.bf16.msra.mxu0 %v4118
      %4512 = vmatprep.subr.bf16.mxu0 %v4123
      %4513 = vmatpush1.bf16.msra.mxu0 %v4122
      %4514 = vmatprep.subr.bf16.mxu0 %v4127
      %4515 = vmatpush1.bf16.msra.mxu0 %v4126
      %4516 = vmatprep.subr.bf16.mxu0 %v4131
      %4517 = vmatpush1.bf16.msra.mxu0 %v4130
      %4518 = vmatprep.subr.bf16.mxu0 %v4135
      %4519 = vmatpush1.bf16.msra.mxu0 %v4134
      %4520 = vmatprep.subr.bf16.mxu0 %v4139
      %4521 = vmatpush1.bf16.msra.mxu0 %v4138
      %4522 = vmatprep.subr.bf16.mxu0 %v4143
      %4523 = vmatpush1.bf16.msra.mxu0 %v4142
      %4524 = vmatprep.subr.bf16.mxu0 %v4147
      %4525 = vmatpush1.bf16.msra.mxu0 %v4146
      %4526 = vmatprep.subr.bf16.mxu0 %v4151
      %4527 = vmatpush1.bf16.msra.mxu0 %v4150
      %4528 = vmatprep.subr.bf16.mxu0 %v4155
      %4529 = vmatpush1.bf16.msra.mxu0 %v4154
      %4530 = vmatprep.subr.bf16.mxu0 %v4159
      %4531 = vmatpush1.bf16.msra.mxu0 %v4158
      %4532 = vmatprep.subr.bf16.mxu0 %v4163
      %4533 = vmatpush1.bf16.msra.mxu0 %v4162
      %4534 = vmatprep.mubr.bf16.mxu0 %v3685
      %4535 = vmatmul.mubr.bf16.gmra.mrb[0].mxu0 %v3684
      %v4536 = vpop.f32.mrb[0].mxu0
      %v4537 = vadd.f32 %v585, %v4536
      %v4538 = vpop.f32.mrb[0].mxu0
      %v4539 = vadd.f32 %v589, %v4538
      %v4540 = vpop.f32.mrb[0].mxu0
      %v4541 = vadd.f32 %v585, %v4540
      %v4542 = vpop.f32.mrb[0].mxu0
      %v4543 = vadd.f32 %v589, %v4542
      %4544 = vmatprep.mubr.bf16.mxu0 %v3689
      %4545 = vmatmul.mubr.bf16.gmra.mrb[0].mxu0 %v3688
      %v4546 = vpop.f32.mrb[0].mxu0
      %v4547 = vadd.f32 %v585, %v4546
      %v4548 = vpop.f32.mrb[0].mxu0
      %v4549 = vadd.f32 %v589, %v4548
      %v4550 = vpop.f32.mrb[0].mxu0
      %v4551 = vadd.f32 %v585, %v4550
      %v4552 = vpop.f32.mrb[0].mxu0
      %v4553 = vadd.f32 %v589, %v4552
      %4554 = vmatprep.mubr.bf16.mxu0 %v3693
      %4555 = vmatmul.mubr.bf16.gmra.mrb[0].mxu0 %v3692
      %v4556 = vpop.f32.mrb[0].mxu0
      %v4557 = vadd.f32 %v585, %v4556
      %v4558 = vpop.f32.mrb[0].mxu0
      %v4559 = vadd.f32 %v589, %v4558
      %v4560 = vpop.f32.mrb[0].mxu0
      %v4561 = vadd.f32 %v585, %v4560
      %v4562 = vpop.f32.mrb[0].mxu0
      %v4563 = vadd.f32 %v589, %v4562
      %4564 = vmatprep.mubr.bf16.mxu0 %v3697
      %4565 = vmatmul.mubr.bf16.gmra.mrb[0].mxu0 %v3696
      %v4566 = vpop.f32.mrb[0].mxu0
      %v4567 = vadd.f32 %v585, %v4566
      %v4568 = vpop.f32.mrb[0].mxu0
      %v4569 = vadd.f32 %v589, %v4568
      %v4570 = vpop.f32.mrb[0].mxu0
      %v4571 = vadd.f32 %v585, %v4570
      %v4572 = vpop.f32.mrb[0].mxu0
      %v4573 = vadd.f32 %v589, %v4572
      %4574 = vdwg.mxu0
      %4575 = vmatprep.subr.bf16.mxu0 %v4167
      %4576 = vmatpush1.bf16.msra.mxu0 %v4166
      %4577 = vmatprep.subr.bf16.mxu0 %v4171
      %4578 = vmatpush1.bf16.msra.mxu0 %v4170
      %4579 = vmatprep.subr.bf16.mxu0 %v4175
      %4580 = vmatpush1.bf16.msra.mxu0 %v4174
      %4581 = vmatprep.subr.bf16.mxu0 %v4179
      %4582 = vmatpush1.bf16.msra.mxu0 %v4178
      %4583 = vmatprep.subr.bf16.mxu0 %v4183
      %4584 = vmatpush1.bf16.msra.mxu0 %v4182
      %4585 = vmatprep.subr.bf16.mxu0 %v4187
      %4586 = vmatpush1.bf16.msra.mxu0 %v4186
      %4587 = vmatprep.subr.bf16.mxu0 %v4191
      %4588 = vmatpush1.bf16.msra.mxu0 %v4190
      %4589 = vmatprep.subr.bf16.mxu0 %v4195
      %4590 = vmatpush1.bf16.msra.mxu0 %v4194
      %4591 = vmatprep.subr.bf16.mxu0 %v4199
      %4592 = vmatpush1.bf16.msra.mxu0 %v4198
      %4593 = vmatprep.subr.bf16.mxu0 %v4203
      %4594 = vmatpush1.bf16.msra.mxu0 %v4202
      %4595 = vmatprep.subr.bf16.mxu0 %v4207
      %4596 = vmatpush1.bf16.msra.mxu0 %v4206
      %4597 = vmatprep.subr.bf16.mxu0 %v4211
      %4598 = vmatpush1.bf16.msra.mxu0 %v4210
      %4599 = vmatprep.subr.bf16.mxu0 %v4215
      %4600 = vmatpush1.bf16.msra.mxu0 %v4214
      %4601 = vmatprep.subr.bf16.mxu0 %v4219
      %4602 = vmatpush1.bf16.msra.mxu0 %v4218
      %4603 = vmatprep.subr.bf16.mxu0 %v4223
      %4604 = vmatpush1.bf16.msra.mxu0 %v4222
      %4605 = vmatprep.subr.bf16.mxu0 %v4227
      %4606 = vmatpush1.bf16.msra.mxu0 %v4226
      %4607 = vmatprep.mubr.bf16.mxu0 %v3687
      %4608 = vmatmul.mubr.bf16.gmra.mrb[0].mxu0 %v3686
      %v4609 = vpop.f32.mrb[0].mxu0
      %v4610 = vadd.f32 %v4537, %v4609
      %v4611 = vpop.f32.mrb[0].mxu0
      %v4612 = vadd.f32 %v4539, %v4611
      %v4613 = vpop.f32.mrb[0].mxu0
      %v4614 = vadd.f32 %v4541, %v4613
      %v4615 = vpop.f32.mrb[0].mxu0
      %v4616 = vadd.f32 %v4543, %v4615
      %4617 = vmatprep.mubr.bf16.mxu0 %v3691
      %4618 = vmatmul.mubr.bf16.gmra.mrb[0].mxu0 %v3690
      %v4619 = vpop.f32.mrb[0].mxu0
      %v4620 = vadd.f32 %v4547, %v4619
      %v4621 = vpop.f32.mrb[0].mxu0
      %v4622 = vadd.f32 %v4549, %v4621
      %v4623 = vpop.f32.mrb[0].mxu0
      %v4624 = vadd.f32 %v4551, %v4623
      %v4625 = vpop.f32.mrb[0].mxu0
      %v4626 = vadd.f32 %v4553, %v4625
      %4627 = vmatprep.mubr.bf16.mxu0 %v3695
      %4628 = vmatmul.mubr.bf16.gmra.mrb[0].mxu0 %v3694
      %v4629 = vpop.f32.mrb[0].mxu0
      %v4630 = vadd.f32 %v4557, %v4629
      %v4631 = vpop.f32.mrb[0].mxu0
      %v4632 = vadd.f32 %v4559, %v4631
      %v4633 = vpop.f32.mrb[0].mxu0
      %v4634 = vadd.f32 %v4561, %v4633
      %v4635 = vpop.f32.mrb[0].mxu0
      %v4636 = vadd.f32 %v4563, %v4635
      %4637 = vmatprep.mubr.bf16.mxu0 %v3699
      %4638 = vmatmul.mubr.bf16.gmra.mrb[0].mxu0 %v3698
      %v4639 = vpop.f32.mrb[0].mxu0
      %v4640 = vadd.f32 %v4567, %v4639
      %v4641 = vpop.f32.mrb[0].mxu0
      %v4642 = vadd.f32 %v4569, %v4641
      %v4643 = vpop.f32.mrb[0].mxu0
      %v4644 = vadd.f32 %v4571, %v4643
      %v4645 = vpop.f32.mrb[0].mxu0
      %v4646 = vadd.f32 %v4573, %v4645
      %4647 = vdwg.mxu0
      %s4648 = scalar_lea.vmem %s194, 64
      %4649 = vst [vmem:[%s4648] sm:$0xff] %v4464
      %4650 = vst [vmem:[%s4648 + $0x8] sm:$0xff] %v4466
      %4651 = vst [vmem:[%s4648 + $0x80] sm:$0xff] %v4468
      %4652 = vst [vmem:[%s4648 + $0x88] sm:$0xff] %v4470
      %4653 = vst [vmem:[%s4648 + $0x100] sm:$0xff] %v4474
      %4654 = vst [vmem:[%s4648 + $0x108] sm:$0xff] %v4476
      %4655 = vst [vmem:[%s4648 + $0x180] sm:$0xff] %v4478
      %4656 = vst [vmem:[%s4648 + $0x188] sm:$0xff] %v4480
      %4657 = vst [vmem:[%s4648 + $0x200] sm:$0xff] %v4484
      %4658 = vst [vmem:[%s4648 + $0x208] sm:$0xff] %v4486
      %4659 = vst [vmem:[%s4648 + $0x280] sm:$0xff] %v4488
      %4660 = vst [vmem:[%s4648 + $0x288] sm:$0xff] %v4490
      %4661 = vst [vmem:[%s4648 + $0x300] sm:$0xff] %v4494
      %4662 = vst [vmem:[%s4648 + $0x308] sm:$0xff] %v4496
      %4663 = vst [vmem:[%s4648 + $0x380] sm:$0xff] %v4498
      %4664 = vst [vmem:[%s4648 + $0x388] sm:$0xff] %v4500
      %s4665 = scalar_lea.vmem %s194, 96
      %4666 = vst [vmem:[%s4665] sm:$0xff] %v4610
      %4667 = vst [vmem:[%s4665 + $0x8] sm:$0xff] %v4612
      %4668 = vst [vmem:[%s4665 + $0x80] sm:$0xff] %v4614
      %4669 = vst [vmem:[%s4665 + $0x88] sm:$0xff] %v4616
      %4670 = vst [vmem:[%s4665 + $0x100] sm:$0xff] %v4620
      %4671 = vst [vmem:[%s4665 + $0x108] sm:$0xff] %v4622
      %4672 = vst [vmem:[%s4665 + $0x180] sm:$0xff] %v4624
      %4673 = vst [vmem:[%s4665 + $0x188] sm:$0xff] %v4626
      %4674 = vst [vmem:[%s4665 + $0x200] sm:$0xff] %v4630
      %4675 = vst [vmem:[%s4665 + $0x208] sm:$0xff] %v4632
      %4676 = vst [vmem:[%s4665 + $0x280] sm:$0xff] %v4634
      %4677 = vst [vmem:[%s4665 + $0x288] sm:$0xff] %v4636
      %4678 = vst [vmem:[%s4665 + $0x300] sm:$0xff] %v4640
      %4679 = vst [vmem:[%s4665 + $0x308] sm:$0xff] %v4642
      %4680 = vst [vmem:[%s4665 + $0x380] sm:$0xff] %v4644
      %4681 = vst [vmem:[%s4665 + $0x388] sm:$0xff] %v4646
      %s4682 = scalar_lea.vmem %s1, 3072
      %v4683 = vld [vmem:[%s4682] sm:$0xff]
      %v4684 = vld [vmem:[%s4682 + $0x8] sm:$0xff]
      %v4685 = vld [vmem:[%s4682 + $0x10] sm:$0xff]
      %v4686 = vld [vmem:[%s4682 + $0x18] sm:$0xff]
      %v4687 = vld [vmem:[%s4682 + $0x20] sm:$0xff]
      %v4688 = vld [vmem:[%s4682 + $0x28] sm:$0xff]
      %v4689 = vld [vmem:[%s4682 + $0x30] sm:$0xff]
      %v4690 = vld [vmem:[%s4682 + $0x38] sm:$0xff]
      %v4691 = vld [vmem:[%s4682 + $0x40] sm:$0xff]
      %v4692 = vld [vmem:[%s4682 + $0x48] sm:$0xff]
      %v4693 = vld [vmem:[%s4682 + $0x50] sm:$0xff]
      %v4694 = vld [vmem:[%s4682 + $0x58] sm:$0xff]
      %v4695 = vld [vmem:[%s4682 + $0x60] sm:$0xff]
      %v4696 = vld [vmem:[%s4682 + $0x68] sm:$0xff]
      %v4697 = vld [vmem:[%s4682 + $0x70] sm:$0xff]
      %v4698 = vld [vmem:[%s4682 + $0x78] sm:$0xff]
      %v4699 = vld [vmem:[%s4682 + $0x80] sm:$0xff]
      %v4700 = vld [vmem:[%s4682 + $0x88] sm:$0xff]
      %v4701 = vld [vmem:[%s4682 + $0x90] sm:$0xff]
      %v4702 = vld [vmem:[%s4682 + $0x98] sm:$0xff]
      %v4703 = vld [vmem:[%s4682 + $0xa0] sm:$0xff]
      %v4704 = vld [vmem:[%s4682 + $0xa8] sm:$0xff]
      %v4705 = vld [vmem:[%s4682 + $0xb0] sm:$0xff]
      %v4706 = vld [vmem:[%s4682 + $0xb8] sm:$0xff]
      %v4707 = vld [vmem:[%s4682 + $0xc0] sm:$0xff]
      %v4708 = vld [vmem:[%s4682 + $0xc8] sm:$0xff]
      %v4709 = vld [vmem:[%s4682 + $0xd0] sm:$0xff]
      %v4710 = vld [vmem:[%s4682 + $0xd8] sm:$0xff]
      %v4711 = vld [vmem:[%s4682 + $0xe0] sm:$0xff]
      %v4712 = vld [vmem:[%s4682 + $0xe8] sm:$0xff]
      %v4713 = vld [vmem:[%s4682 + $0xf0] sm:$0xff]
      %v4714 = vld [vmem:[%s4682 + $0xf8] sm:$0xff]
      %v4715 = vld [vmem:[%s4682 + $0x100] sm:$0xff]
      %v4716 = vld [vmem:[%s4682 + $0x108] sm:$0xff]
      %v4717 = vld [vmem:[%s4682 + $0x110] sm:$0xff]
      %v4718 = vld [vmem:[%s4682 + $0x118] sm:$0xff]
      %v4719 = vld [vmem:[%s4682 + $0x120] sm:$0xff]
      %v4720 = vld [vmem:[%s4682 + $0x128] sm:$0xff]
      %v4721 = vld [vmem:[%s4682 + $0x130] sm:$0xff]
      %v4722 = vld [vmem:[%s4682 + $0x138] sm:$0xff]
      %v4723 = vld [vmem:[%s4682 + $0x140] sm:$0xff]
      %v4724 = vld [vmem:[%s4682 + $0x148] sm:$0xff]
      %v4725 = vld [vmem:[%s4682 + $0x150] sm:$0xff]
      %v4726 = vld [vmem:[%s4682 + $0x158] sm:$0xff]
      %v4727 = vld [vmem:[%s4682 + $0x160] sm:$0xff]
      %v4728 = vld [vmem:[%s4682 + $0x168] sm:$0xff]
      %v4729 = vld [vmem:[%s4682 + $0x170] sm:$0xff]
      %v4730 = vld [vmem:[%s4682 + $0x178] sm:$0xff]
      %v4731 = vld [vmem:[%s4682 + $0x180] sm:$0xff]
      %v4732 = vld [vmem:[%s4682 + $0x188] sm:$0xff]
      %v4733 = vld [vmem:[%s4682 + $0x190] sm:$0xff]
      %v4734 = vld [vmem:[%s4682 + $0x198] sm:$0xff]
      %v4735 = vld [vmem:[%s4682 + $0x1a0] sm:$0xff]
      %v4736 = vld [vmem:[%s4682 + $0x1a8] sm:$0xff]
      %v4737 = vld [vmem:[%s4682 + $0x1b0] sm:$0xff]
      %v4738 = vld [vmem:[%s4682 + $0x1b8] sm:$0xff]
      %v4739 = vld [vmem:[%s4682 + $0x1c0] sm:$0xff]
      %v4740 = vld [vmem:[%s4682 + $0x1c8] sm:$0xff]
      %v4741 = vld [vmem:[%s4682 + $0x1d0] sm:$0xff]
      %v4742 = vld [vmem:[%s4682 + $0x1d8] sm:$0xff]
      %v4743 = vld [vmem:[%s4682 + $0x1e0] sm:$0xff]
      %v4744 = vld [vmem:[%s4682 + $0x1e8] sm:$0xff]
      %v4745 = vld [vmem:[%s4682 + $0x1f0] sm:$0xff]
      %v4746 = vld [vmem:[%s4682 + $0x1f8] sm:$0xff]
      %v4747 = vld [vmem:[%s4682 + $0x200] sm:$0xff]
      %v4748 = vld [vmem:[%s4682 + $0x208] sm:$0xff]
      %v4749 = vld [vmem:[%s4682 + $0x210] sm:$0xff]
      %v4750 = vld [vmem:[%s4682 + $0x218] sm:$0xff]
      %v4751 = vld [vmem:[%s4682 + $0x220] sm:$0xff]
      %v4752 = vld [vmem:[%s4682 + $0x228] sm:$0xff]
      %v4753 = vld [vmem:[%s4682 + $0x230] sm:$0xff]
      %v4754 = vld [vmem:[%s4682 + $0x238] sm:$0xff]
      %v4755 = vld [vmem:[%s4682 + $0x240] sm:$0xff]
      %v4756 = vld [vmem:[%s4682 + $0x248] sm:$0xff]
      %v4757 = vld [vmem:[%s4682 + $0x250] sm:$0xff]
      %v4758 = vld [vmem:[%s4682 + $0x258] sm:$0xff]
      %v4759 = vld [vmem:[%s4682 + $0x260] sm:$0xff]
      %v4760 = vld [vmem:[%s4682 + $0x268] sm:$0xff]
      %v4761 = vld [vmem:[%s4682 + $0x270] sm:$0xff]
      %v4762 = vld [vmem:[%s4682 + $0x278] sm:$0xff]
      %v4763 = vld [vmem:[%s4682 + $0x280] sm:$0xff]
      %v4764 = vld [vmem:[%s4682 + $0x288] sm:$0xff]
      %v4765 = vld [vmem:[%s4682 + $0x290] sm:$0xff]
      %v4766 = vld [vmem:[%s4682 + $0x298] sm:$0xff]
      %v4767 = vld [vmem:[%s4682 + $0x2a0] sm:$0xff]
      %v4768 = vld [vmem:[%s4682 + $0x2a8] sm:$0xff]
      %v4769 = vld [vmem:[%s4682 + $0x2b0] sm:$0xff]
      %v4770 = vld [vmem:[%s4682 + $0x2b8] sm:$0xff]
      %v4771 = vld [vmem:[%s4682 + $0x2c0] sm:$0xff]
      %v4772 = vld [vmem:[%s4682 + $0x2c8] sm:$0xff]
      %v4773 = vld [vmem:[%s4682 + $0x2d0] sm:$0xff]
      %v4774 = vld [vmem:[%s4682 + $0x2d8] sm:$0xff]
      %v4775 = vld [vmem:[%s4682 + $0x2e0] sm:$0xff]
      %v4776 = vld [vmem:[%s4682 + $0x2e8] sm:$0xff]
      %v4777 = vld [vmem:[%s4682 + $0x2f0] sm:$0xff]
      %v4778 = vld [vmem:[%s4682 + $0x2f8] sm:$0xff]
      %v4779 = vld [vmem:[%s4682 + $0x300] sm:$0xff]
      %v4780 = vld [vmem:[%s4682 + $0x308] sm:$0xff]
      %v4781 = vld [vmem:[%s4682 + $0x310] sm:$0xff]
      %v4782 = vld [vmem:[%s4682 + $0x318] sm:$0xff]
      %v4783 = vld [vmem:[%s4682 + $0x320] sm:$0xff]
      %v4784 = vld [vmem:[%s4682 + $0x328] sm:$0xff]
      %v4785 = vld [vmem:[%s4682 + $0x330] sm:$0xff]
      %v4786 = vld [vmem:[%s4682 + $0x338] sm:$0xff]
      %v4787 = vld [vmem:[%s4682 + $0x340] sm:$0xff]
      %v4788 = vld [vmem:[%s4682 + $0x348] sm:$0xff]
      %v4789 = vld [vmem:[%s4682 + $0x350] sm:$0xff]
      %v4790 = vld [vmem:[%s4682 + $0x358] sm:$0xff]
      %v4791 = vld [vmem:[%s4682 + $0x360] sm:$0xff]
      %v4792 = vld [vmem:[%s4682 + $0x368] sm:$0xff]
      %v4793 = vld [vmem:[%s4682 + $0x370] sm:$0xff]
      %v4794 = vld [vmem:[%s4682 + $0x378] sm:$0xff]
      %v4795 = vld [vmem:[%s4682 + $0x380] sm:$0xff]
      %v4796 = vld [vmem:[%s4682 + $0x388] sm:$0xff]
      %v4797 = vld [vmem:[%s4682 + $0x390] sm:$0xff]
      %v4798 = vld [vmem:[%s4682 + $0x398] sm:$0xff]
      %v4799 = vld [vmem:[%s4682 + $0x3a0] sm:$0xff]
      %v4800 = vld [vmem:[%s4682 + $0x3a8] sm:$0xff]
      %v4801 = vld [vmem:[%s4682 + $0x3b0] sm:$0xff]
      %v4802 = vld [vmem:[%s4682 + $0x3b8] sm:$0xff]
      %v4803 = vld [vmem:[%s4682 + $0x3c0] sm:$0xff]
      %v4804 = vld [vmem:[%s4682 + $0x3c8] sm:$0xff]
      %v4805 = vld [vmem:[%s4682 + $0x3d0] sm:$0xff]
      %v4806 = vld [vmem:[%s4682 + $0x3d8] sm:$0xff]
      %v4807 = vld [vmem:[%s4682 + $0x3e0] sm:$0xff]
      %v4808 = vld [vmem:[%s4682 + $0x3e8] sm:$0xff]
      %v4809 = vld [vmem:[%s4682 + $0x3f0] sm:$0xff]
      %v4810 = vld [vmem:[%s4682 + $0x3f8] sm:$0xff]
      %v4811 = vld [vmem:[%s348] sm:$0xf]
      %v4812 = vld [vmem:[%s348 + $0x4] sm:$0x1]
      %v4813 = vld [vmem:[%s348 + $0x8] sm:$0xf]
      %v4814 = vld [vmem:[%s348 + $0xc] sm:$0x1]
      %v4815 = vld [vmem:[%s348 + $0x10] sm:$0xf]
      %v4816 = vld [vmem:[%s348 + $0x14] sm:$0x1]
      %v4817 = vld [vmem:[%s348 + $0x18] sm:$0xf]
      %v4818 = vld [vmem:[%s348 + $0x1c] sm:$0x1]
      %v4819 = vld [vmem:[%s348 + $0x20] sm:$0xf]
      %v4820 = vld [vmem:[%s348 + $0x24] sm:$0x1]
      %v4821 = vld [vmem:[%s348 + $0x28] sm:$0xf]
      %v4822 = vld [vmem:[%s348 + $0x2c] sm:$0x1]
      %v4823 = vld [vmem:[%s348 + $0x30] sm:$0xf]
      %v4824 = vld [vmem:[%s348 + $0x34] sm:$0x1]
      %v4825 = vld [vmem:[%s348 + $0x38] sm:$0xf]
      %v4826 = vld [vmem:[%s348 + $0x3c] sm:$0x1]
      %v4827 = vld [vmem:[%s348] sm:$0xe]
      %v4828 = vld [vmem:[%s348 + $0x8] sm:$0xe]
      %v4829 = vld [vmem:[%s348 + $0x10] sm:$0xe]
      %v4830 = vld [vmem:[%s348 + $0x18] sm:$0xe]
      %v4831 = vld [vmem:[%s348 + $0x20] sm:$0xe]
      %v4832 = vld [vmem:[%s348 + $0x28] sm:$0xe]
      %v4833 = vld [vmem:[%s348 + $0x30] sm:$0xe]
      %v4834 = vld [vmem:[%s348 + $0x38] sm:$0xe]
      %v4835 = vld [vmem:[%s3459] sm:$0xf]
      %v4836 = vld [vmem:[%s3459 + $0x4] sm:$0x1]
      %v4837 = vld [vmem:[%s3459 + $0x8] sm:$0xf]
      %v4838 = vld [vmem:[%s3459 + $0xc] sm:$0x1]
      %v4839 = vld [vmem:[%s3459 + $0x10] sm:$0xf]
      %v4840 = vld [vmem:[%s3459 + $0x14] sm:$0x1]
      %v4841 = vld [vmem:[%s3459 + $0x18] sm:$0xf]
      %v4842 = vld [vmem:[%s3459 + $0x1c] sm:$0x1]
      %v4843 = vld [vmem:[%s3459 + $0x20] sm:$0xf]
      %v4844 = vld [vmem:[%s3459 + $0x24] sm:$0x1]
      %v4845 = vld [vmem:[%s3459 + $0x28] sm:$0xf]
      %v4846 = vld [vmem:[%s3459 + $0x2c] sm:$0x1]
      %v4847 = vld [vmem:[%s3459 + $0x30] sm:$0xf]
      %v4848 = vld [vmem:[%s3459 + $0x34] sm:$0x1]
      %v4849 = vld [vmem:[%s3459 + $0x38] sm:$0xf]
      %v4850 = vld [vmem:[%s3459 + $0x3c] sm:$0x1]
      %v4851 = vld [vmem:[%s3459] sm:$0xe]
      %v4852 = vld [vmem:[%s3459 + $0x8] sm:$0xe]
      %v4853 = vld [vmem:[%s3459 + $0x10] sm:$0xe]
      %v4854 = vld [vmem:[%s3459 + $0x18] sm:$0xe]
      %v4855 = vld [vmem:[%s3459 + $0x20] sm:$0xe]
      %v4856 = vld [vmem:[%s3459 + $0x28] sm:$0xe]
      %v4857 = vld [vmem:[%s3459 + $0x30] sm:$0xe]
      %v4858 = vld [vmem:[%s3459 + $0x38] sm:$0xe]
      %v4875 = vunpack.c.l.b16 %v4811
      %v4876 = vunpack.c.l.b16 %v4812
      %v4877 = vunpack.c.l.b16 %v4813
      %v4878 = vunpack.c.l.b16 %v4814
      %v4879 = vunpack.c.l.b16 %v4815
      %v4880 = vunpack.c.l.b16 %v4816
      %v4881 = vunpack.c.l.b16 %v4817
      %v4882 = vunpack.c.l.b16 %v4818
      %v4883 = vunpack.c.l.b16 %v4819
      %v4884 = vunpack.c.l.b16 %v4820
      %v4885 = vunpack.c.l.b16 %v4821
      %v4886 = vunpack.c.l.b16 %v4822
      %v4887 = vunpack.c.l.b16 %v4823
      %v4888 = vunpack.c.l.b16 %v4824
      %v4889 = vunpack.c.l.b16 %v4825
      %v4890 = vunpack.c.l.b16 %v4826
      %v4899 = vunpack.c.l.b16 %v4827
      %v4900 = vunpack.c.l.b16 %v4828
      %v4901 = vunpack.c.l.b16 %v4829
      %v4902 = vunpack.c.l.b16 %v4830
      %v4903 = vunpack.c.l.b16 %v4831
      %v4904 = vunpack.c.l.b16 %v4832
      %v4905 = vunpack.c.l.b16 %v4833
      %v4906 = vunpack.c.l.b16 %v4834
      %v4907 = vpack.c.b16 %v4876, %v4899
      %v4908 = vpack.c.b16 %v4878, %v4900
      %v4909 = vpack.c.b16 %v4880, %v4901
      %v4910 = vpack.c.b16 %v4882, %v4902
      %v4911 = vpack.c.b16 %v4884, %v4903
      %v4912 = vpack.c.b16 %v4886, %v4904
      %v4913 = vpack.c.b16 %v4888, %v4905
      %v4914 = vpack.c.b16 %v4890, %v4906
      %v4916 = vshrl.u32 %v4907, 16
      %v4918 = vshll.u32 %v4907, 16
      %v4920 = vrot.slane %v4918, 1
      %v4921 = vor.u32 %v4916, %v4920
      %v4923 = vshrl.u32 %v4908, 16
      %v4925 = vshll.u32 %v4908, 16
      %v4927 = vrot.slane %v4925, 1
      %v4928 = vor.u32 %v4923, %v4927
      %v4930 = vshrl.u32 %v4909, 16
      %v4932 = vshll.u32 %v4909, 16
      %v4934 = vrot.slane %v4932, 1
      %v4935 = vor.u32 %v4930, %v4934
      %v4937 = vshrl.u32 %v4910, 16
      %v4939 = vshll.u32 %v4910, 16
      %v4941 = vrot.slane %v4939, 1
      %v4942 = vor.u32 %v4937, %v4941
      %v4944 = vshrl.u32 %v4911, 16
      %v4946 = vshll.u32 %v4911, 16
      %v4948 = vrot.slane %v4946, 1
      %v4949 = vor.u32 %v4944, %v4948
      %v4951 = vshrl.u32 %v4912, 16
      %v4953 = vshll.u32 %v4912, 16
      %v4955 = vrot.slane %v4953, 1
      %v4956 = vor.u32 %v4951, %v4955
      %v4958 = vshrl.u32 %v4913, 16
      %v4960 = vshll.u32 %v4913, 16
      %v4962 = vrot.slane %v4960, 1
      %v4963 = vor.u32 %v4958, %v4962
      %v4965 = vshrl.u32 %v4914, 16
      %v4967 = vshll.u32 %v4914, 16
      %v4969 = vrot.slane %v4967, 1
      %v4970 = vor.u32 %v4965, %v4969
      %v4987 = vunpack.c.l.b16 %v4835
      %v4988 = vunpack.c.l.b16 %v4836
      %v4989 = vunpack.c.l.b16 %v4837
      %v4990 = vunpack.c.l.b16 %v4838
      %v4991 = vunpack.c.l.b16 %v4839
      %v4992 = vunpack.c.l.b16 %v4840
      %v4993 = vunpack.c.l.b16 %v4841
      %v4994 = vunpack.c.l.b16 %v4842
      %v4995 = vunpack.c.l.b16 %v4843
      %v4996 = vunpack.c.l.b16 %v4844
      %v4997 = vunpack.c.l.b16 %v4845
      %v4998 = vunpack.c.l.b16 %v4846
      %v4999 = vunpack.c.l.b16 %v4847
      %v5000 = vunpack.c.l.b16 %v4848
      %v5001 = vunpack.c.l.b16 %v4849
      %v5002 = vunpack.c.l.b16 %v4850
      %v5011 = vunpack.c.l.b16 %v4851
      %v5012 = vunpack.c.l.b16 %v4852
      %v5013 = vunpack.c.l.b16 %v4853
      %v5014 = vunpack.c.l.b16 %v4854
      %v5015 = vunpack.c.l.b16 %v4855
      %v5016 = vunpack.c.l.b16 %v4856
      %v5017 = vunpack.c.l.b16 %v4857
      %v5018 = vunpack.c.l.b16 %v4858
      %v5019 = vpack.c.b16 %v4988, %v5011
      %v5020 = vpack.c.b16 %v4990, %v5012
      %v5021 = vpack.c.b16 %v4992, %v5013
      %v5022 = vpack.c.b16 %v4994, %v5014
      %v5023 = vpack.c.b16 %v4996, %v5015
      %v5024 = vpack.c.b16 %v4998, %v5016
      %v5025 = vpack.c.b16 %v5000, %v5017
      %v5026 = vpack.c.b16 %v5002, %v5018
      %v5028 = vshrl.u32 %v5019, 16
      %v5030 = vshll.u32 %v5019, 16
      %v5032 = vrot.slane %v5030, 1
      %v5033 = vor.u32 %v5028, %v5032
      %v5035 = vshrl.u32 %v5020, 16
      %v5037 = vshll.u32 %v5020, 16
      %v5039 = vrot.slane %v5037, 1
      %v5040 = vor.u32 %v5035, %v5039
      %v5042 = vshrl.u32 %v5021, 16
      %v5044 = vshll.u32 %v5021, 16
      %v5046 = vrot.slane %v5044, 1
      %v5047 = vor.u32 %v5042, %v5046
      %v5049 = vshrl.u32 %v5022, 16
      %v5051 = vshll.u32 %v5022, 16
      %v5053 = vrot.slane %v5051, 1
      %v5054 = vor.u32 %v5049, %v5053
      %v5056 = vshrl.u32 %v5023, 16
      %v5058 = vshll.u32 %v5023, 16
      %v5060 = vrot.slane %v5058, 1
      %v5061 = vor.u32 %v5056, %v5060
      %v5063 = vshrl.u32 %v5024, 16
      %v5065 = vshll.u32 %v5024, 16
      %v5067 = vrot.slane %v5065, 1
      %v5068 = vor.u32 %v5063, %v5067
      %v5070 = vshrl.u32 %v5025, 16
      %v5072 = vshll.u32 %v5025, 16
      %v5074 = vrot.slane %v5072, 1
      %v5075 = vor.u32 %v5070, %v5074
      %v5077 = vshrl.u32 %v5026, 16
      %v5079 = vshll.u32 %v5026, 16
      %v5081 = vrot.slane %v5079, 1
      %v5082 = vor.u32 %v5077, %v5081
      %v5083 = vunpack.c.l.b16 %v4921
      %v5084 = vunpack.c.l.b16 %v5033
      %v5085 = vunpack.c.h.b16 %v4921
      %v5086 = vunpack.c.h.b16 %v5033
      %v5087 = vunpack.c.l.b16 %v4928
      %v5088 = vunpack.c.l.b16 %v5040
      %v5089 = vunpack.c.h.b16 %v4928
      %v5090 = vunpack.c.h.b16 %v5040
      %v5091 = vunpack.c.l.b16 %v4935
      %v5092 = vunpack.c.l.b16 %v5047
      %v5093 = vunpack.c.h.b16 %v4935
      %v5094 = vunpack.c.h.b16 %v5047
      %v5095 = vunpack.c.l.b16 %v4942
      %v5096 = vunpack.c.l.b16 %v5054
      %v5097 = vunpack.c.h.b16 %v4942
      %v5098 = vunpack.c.h.b16 %v5054
      %v5099 = vunpack.c.l.b16 %v4949
      %v5100 = vunpack.c.l.b16 %v5061
      %v5101 = vunpack.c.h.b16 %v4949
      %v5102 = vunpack.c.h.b16 %v5061
      %v5103 = vunpack.c.l.b16 %v4956
      %v5104 = vunpack.c.l.b16 %v5068
      %v5105 = vunpack.c.h.b16 %v4956
      %v5106 = vunpack.c.h.b16 %v5068
      %v5107 = vunpack.c.l.b16 %v4963
      %v5108 = vunpack.c.l.b16 %v5075
      %v5109 = vunpack.c.h.b16 %v4963
      %v5110 = vunpack.c.h.b16 %v5075
      %v5111 = vunpack.c.l.b16 %v4970
      %v5112 = vunpack.c.l.b16 %v5082
      %v5113 = vunpack.c.h.b16 %v4970
      %v5114 = vunpack.c.h.b16 %v5082
      %v5115 = vpack.c.b16 %v5083, %v4875
      %v5116 = vpack.c.b16 %v5084, %v4987
      %v5117 = vpack.c.b16 %v5085, %v4876
      %v5118 = vpack.c.b16 %v5086, %v4988
      %v5119 = vpack.c.b16 %v5087, %v4877
      %v5120 = vpack.c.b16 %v5088, %v4989
      %v5121 = vpack.c.b16 %v5089, %v4878
      %v5122 = vpack.c.b16 %v5090, %v4990
      %v5123 = vpack.c.b16 %v5091, %v4879
      %v5124 = vpack.c.b16 %v5092, %v4991
      %v5125 = vpack.c.b16 %v5093, %v4880
      %v5126 = vpack.c.b16 %v5094, %v4992
      %v5127 = vpack.c.b16 %v5095, %v4881
      %v5128 = vpack.c.b16 %v5096, %v4993
      %v5129 = vpack.c.b16 %v5097, %v4882
      %v5130 = vpack.c.b16 %v5098, %v4994
      %v5131 = vpack.c.b16 %v5099, %v4883
      %v5132 = vpack.c.b16 %v5100, %v4995
      %v5133 = vpack.c.b16 %v5101, %v4884
      %v5134 = vpack.c.b16 %v5102, %v4996
      %v5135 = vpack.c.b16 %v5103, %v4885
      %v5136 = vpack.c.b16 %v5104, %v4997
      %v5137 = vpack.c.b16 %v5105, %v4886
      %v5138 = vpack.c.b16 %v5106, %v4998
      %v5139 = vpack.c.b16 %v5107, %v4887
      %v5140 = vpack.c.b16 %v5108, %v4999
      %v5141 = vpack.c.b16 %v5109, %v4888
      %v5142 = vpack.c.b16 %v5110, %v5000
      %v5143 = vpack.c.b16 %v5111, %v4889
      %v5144 = vpack.c.b16 %v5112, %v5001
      %v5145 = vpack.c.b16 %v5113, %v4890
      %v5146 = vpack.c.b16 %v5114, %v5002
      %v5148 = vshrl.u32 %v5115, 16
      %v5150 = vrot.slane %v5148, 4
      %v5151 = vshll.u32 %v5115, 16
      %v5153 = vrot.slane %v5151, 5
      %v5154 = vor.u32 %v5150, %v5153
      %v5155 = vrot.slane %v5154, 4
      %v5157 = vshll.u32 %v5117, 16
      %v5159 = vrot.slane %v5157, 5
      %v5160 = vsel %vm2058, %v5155, %v5159
      %v5162 = vshrl.u32 %v5116, 16
      %v5164 = vrot.slane %v5162, 4
      %v5165 = vshll.u32 %v5116, 16
      %v5167 = vrot.slane %v5165, 5
      %v5168 = vor.u32 %v5164, %v5167
      %v5169 = vrot.slane %v5168, 4
      %v5171 = vshll.u32 %v5118, 16
      %v5173 = vrot.slane %v5171, 5
      %v5174 = vsel %vm2058, %v5169, %v5173
      %v5176 = vshrl.u32 %v5119, 16
      %v5178 = vrot.slane %v5176, 4
      %v5179 = vshll.u32 %v5119, 16
      %v5181 = vrot.slane %v5179, 5
      %v5182 = vor.u32 %v5178, %v5181
      %v5183 = vrot.slane %v5182, 4
      %v5185 = vshll.u32 %v5121, 16
      %v5187 = vrot.slane %v5185, 5
      %v5188 = vsel %vm2058, %v5183, %v5187
      %v5190 = vshrl.u32 %v5120, 16
      %v5192 = vrot.slane %v5190, 4
      %v5193 = vshll.u32 %v5120, 16
      %v5195 = vrot.slane %v5193, 5
      %v5196 = vor.u32 %v5192, %v5195
      %v5197 = vrot.slane %v5196, 4
      %v5199 = vshll.u32 %v5122, 16
      %v5201 = vrot.slane %v5199, 5
      %v5202 = vsel %vm2058, %v5197, %v5201
      %v5204 = vshrl.u32 %v5123, 16
      %v5206 = vrot.slane %v5204, 4
      %v5207 = vshll.u32 %v5123, 16
      %v5209 = vrot.slane %v5207, 5
      %v5210 = vor.u32 %v5206, %v5209
      %v5211 = vrot.slane %v5210, 4
      %v5213 = vshll.u32 %v5125, 16
      %v5215 = vrot.slane %v5213, 5
      %v5216 = vsel %vm2058, %v5211, %v5215
      %v5218 = vshrl.u32 %v5124, 16
      %v5220 = vrot.slane %v5218, 4
      %v5221 = vshll.u32 %v5124, 16
      %v5223 = vrot.slane %v5221, 5
      %v5224 = vor.u32 %v5220, %v5223
      %v5225 = vrot.slane %v5224, 4
      %v5227 = vshll.u32 %v5126, 16
      %v5229 = vrot.slane %v5227, 5
      %v5230 = vsel %vm2058, %v5225, %v5229
      %v5232 = vshrl.u32 %v5127, 16
      %v5234 = vrot.slane %v5232, 4
      %v5235 = vshll.u32 %v5127, 16
      %v5237 = vrot.slane %v5235, 5
      %v5238 = vor.u32 %v5234, %v5237
      %v5239 = vrot.slane %v5238, 4
      %v5241 = vshll.u32 %v5129, 16
      %v5243 = vrot.slane %v5241, 5
      %v5244 = vsel %vm2058, %v5239, %v5243
      %v5246 = vshrl.u32 %v5128, 16
      %v5248 = vrot.slane %v5246, 4
      %v5249 = vshll.u32 %v5128, 16
      %v5251 = vrot.slane %v5249, 5
      %v5252 = vor.u32 %v5248, %v5251
      %v5253 = vrot.slane %v5252, 4
      %v5255 = vshll.u32 %v5130, 16
      %v5257 = vrot.slane %v5255, 5
      %v5258 = vsel %vm2058, %v5253, %v5257
      %v5260 = vshrl.u32 %v5131, 16
      %v5262 = vrot.slane %v5260, 4
      %v5263 = vshll.u32 %v5131, 16
      %v5265 = vrot.slane %v5263, 5
      %v5266 = vor.u32 %v5262, %v5265
      %v5267 = vrot.slane %v5266, 4
      %v5269 = vshll.u32 %v5133, 16
      %v5271 = vrot.slane %v5269, 5
      %v5272 = vsel %vm2058, %v5267, %v5271
      %v5274 = vshrl.u32 %v5132, 16
      %v5276 = vrot.slane %v5274, 4
      %v5277 = vshll.u32 %v5132, 16
      %v5279 = vrot.slane %v5277, 5
      %v5280 = vor.u32 %v5276, %v5279
      %v5281 = vrot.slane %v5280, 4
      %v5283 = vshll.u32 %v5134, 16
      %v5285 = vrot.slane %v5283, 5
      %v5286 = vsel %vm2058, %v5281, %v5285
      %v5288 = vshrl.u32 %v5135, 16
      %v5290 = vrot.slane %v5288, 4
      %v5291 = vshll.u32 %v5135, 16
      %v5293 = vrot.slane %v5291, 5
      %v5294 = vor.u32 %v5290, %v5293
      %v5295 = vrot.slane %v5294, 4
      %v5297 = vshll.u32 %v5137, 16
      %v5299 = vrot.slane %v5297, 5
      %v5300 = vsel %vm2058, %v5295, %v5299
      %v5302 = vshrl.u32 %v5136, 16
      %v5304 = vrot.slane %v5302, 4
      %v5305 = vshll.u32 %v5136, 16
      %v5307 = vrot.slane %v5305, 5
      %v5308 = vor.u32 %v5304, %v5307
      %v5309 = vrot.slane %v5308, 4
      %v5311 = vshll.u32 %v5138, 16
      %v5313 = vrot.slane %v5311, 5
      %v5314 = vsel %vm2058, %v5309, %v5313
      %v5316 = vshrl.u32 %v5139, 16
      %v5318 = vrot.slane %v5316, 4
      %v5319 = vshll.u32 %v5139, 16
      %v5321 = vrot.slane %v5319, 5
      %v5322 = vor.u32 %v5318, %v5321
      %v5323 = vrot.slane %v5322, 4
      %v5325 = vshll.u32 %v5141, 16
      %v5327 = vrot.slane %v5325, 5
      %v5328 = vsel %vm2058, %v5323, %v5327
      %v5330 = vshrl.u32 %v5140, 16
      %v5332 = vrot.slane %v5330, 4
      %v5333 = vshll.u32 %v5140, 16
      %v5335 = vrot.slane %v5333, 5
      %v5336 = vor.u32 %v5332, %v5335
      %v5337 = vrot.slane %v5336, 4
      %v5339 = vshll.u32 %v5142, 16
      %v5341 = vrot.slane %v5339, 5
      %v5342 = vsel %vm2058, %v5337, %v5341
      %v5344 = vshrl.u32 %v5143, 16
      %v5346 = vrot.slane %v5344, 4
      %v5347 = vshll.u32 %v5143, 16
      %v5349 = vrot.slane %v5347, 5
      %v5350 = vor.u32 %v5346, %v5349
      %v5351 = vrot.slane %v5350, 4
      %v5353 = vshll.u32 %v5145, 16
      %v5355 = vrot.slane %v5353, 5
      %v5356 = vsel %vm2058, %v5351, %v5355
      %v5358 = vshrl.u32 %v5144, 16
      %v5360 = vrot.slane %v5358, 4
      %v5361 = vshll.u32 %v5144, 16
      %v5363 = vrot.slane %v5361, 5
      %v5364 = vor.u32 %v5360, %v5363
      %v5365 = vrot.slane %v5364, 4
      %v5367 = vshll.u32 %v5146, 16
      %v5369 = vrot.slane %v5367, 5
      %v5370 = vsel %vm2058, %v5365, %v5369
      %v5371 = vunpack.c.l.b16 %v5160
      %v5372 = vunpack.c.h.b16 %v5160
      %v5373 = vunpack.c.l.b16 %v5174
      %v5374 = vunpack.c.h.b16 %v5174
      %v5375 = vunpack.c.l.b16 %v5188
      %v5376 = vunpack.c.h.b16 %v5188
      %v5377 = vunpack.c.l.b16 %v5202
      %v5378 = vunpack.c.h.b16 %v5202
      %v5379 = vunpack.c.l.b16 %v5216
      %v5380 = vunpack.c.h.b16 %v5216
      %v5381 = vunpack.c.l.b16 %v5230
      %v5382 = vunpack.c.h.b16 %v5230
      %v5383 = vunpack.c.l.b16 %v5244
      %v5384 = vunpack.c.h.b16 %v5244
      %v5385 = vunpack.c.l.b16 %v5258
      %v5386 = vunpack.c.h.b16 %v5258
      %v5387 = vunpack.c.l.b16 %v5272
      %v5388 = vunpack.c.h.b16 %v5272
      %v5389 = vunpack.c.l.b16 %v5286
      %v5390 = vunpack.c.h.b16 %v5286
      %v5391 = vunpack.c.l.b16 %v5300
      %v5392 = vunpack.c.h.b16 %v5300
      %v5393 = vunpack.c.l.b16 %v5314
      %v5394 = vunpack.c.h.b16 %v5314
      %v5395 = vunpack.c.l.b16 %v5328
      %v5396 = vunpack.c.h.b16 %v5328
      %v5397 = vunpack.c.l.b16 %v5342
      %v5398 = vunpack.c.h.b16 %v5342
      %v5399 = vunpack.c.l.b16 %v5356
      %v5400 = vunpack.c.h.b16 %v5356
      %v5401 = vunpack.c.l.b16 %v5370
      %v5402 = vunpack.c.h.b16 %v5370
      %v5403 = vpack.c.b16 %v5375, %v5371
      %v5404 = vpack.c.b16 %v5376, %v5372
      %v5405 = vpack.c.b16 %v5377, %v5373
      %v5406 = vpack.c.b16 %v5378, %v5374
      %v5407 = vpack.c.b16 %v5383, %v5379
      %v5408 = vpack.c.b16 %v5384, %v5380
      %v5409 = vpack.c.b16 %v5385, %v5381
      %v5410 = vpack.c.b16 %v5386, %v5382
      %v5411 = vpack.c.b16 %v5391, %v5387
      %v5412 = vpack.c.b16 %v5392, %v5388
      %v5413 = vpack.c.b16 %v5393, %v5389
      %v5414 = vpack.c.b16 %v5394, %v5390
      %v5415 = vpack.c.b16 %v5399, %v5395
      %v5416 = vpack.c.b16 %v5400, %v5396
      %v5417 = vpack.c.b16 %v5401, %v5397
      %v5418 = vpack.c.b16 %v5402, %v5398
      %v5563 = vunpack.c.l.b16 %v4683
      %v5564 = vunpack.c.h.b16 %v4683
      %v5565 = vunpack.c.l.b16 %v4684
      %v5566 = vunpack.c.h.b16 %v4684
      %v5567 = vunpack.c.l.b16 %v4685
      %v5568 = vunpack.c.h.b16 %v4685
      %v5569 = vunpack.c.l.b16 %v4686
      %v5570 = vunpack.c.h.b16 %v4686
      %v5571 = vunpack.c.l.b16 %v4687
      %v5572 = vunpack.c.h.b16 %v4687
      %v5573 = vunpack.c.l.b16 %v4688
      %v5574 = vunpack.c.h.b16 %v4688
      %v5575 = vunpack.c.l.b16 %v4689
      %v5576 = vunpack.c.h.b16 %v4689
      %v5577 = vunpack.c.l.b16 %v4690
      %v5578 = vunpack.c.h.b16 %v4690
      %v5579 = vunpack.c.l.b16 %v4691
      %v5580 = vunpack.c.h.b16 %v4691
      %v5581 = vunpack.c.l.b16 %v4692
      %v5582 = vunpack.c.h.b16 %v4692
      %v5583 = vunpack.c.l.b16 %v4693
      %v5584 = vunpack.c.h.b16 %v4693
      %v5585 = vunpack.c.l.b16 %v4694
      %v5586 = vunpack.c.h.b16 %v4694
      %v5587 = vunpack.c.l.b16 %v4695
      %v5588 = vunpack.c.h.b16 %v4695
      %v5589 = vunpack.c.l.b16 %v4696
      %v5590 = vunpack.c.h.b16 %v4696
      %v5591 = vunpack.c.l.b16 %v4697
      %v5592 = vunpack.c.h.b16 %v4697
      %v5593 = vunpack.c.l.b16 %v4698
      %v5594 = vunpack.c.h.b16 %v4698
      %v5595 = vunpack.c.l.b16 %v4699
      %v5596 = vunpack.c.h.b16 %v4699
      %v5597 = vunpack.c.l.b16 %v4700
      %v5598 = vunpack.c.h.b16 %v4700
      %v5599 = vunpack.c.l.b16 %v4701
      %v5600 = vunpack.c.h.b16 %v4701
      %v5601 = vunpack.c.l.b16 %v4702
      %v5602 = vunpack.c.h.b16 %v4702
      %v5603 = vunpack.c.l.b16 %v4703
      %v5604 = vunpack.c.h.b16 %v4703
      %v5605 = vunpack.c.l.b16 %v4704
      %v5606 = vunpack.c.h.b16 %v4704
      %v5607 = vunpack.c.l.b16 %v4705
      %v5608 = vunpack.c.h.b16 %v4705
      %v5609 = vunpack.c.l.b16 %v4706
      %v5610 = vunpack.c.h.b16 %v4706
      %v5611 = vunpack.c.l.b16 %v4707
      %v5612 = vunpack.c.h.b16 %v4707
      %v5613 = vunpack.c.l.b16 %v4708
      %v5614 = vunpack.c.h.b16 %v4708
      %v5615 = vunpack.c.l.b16 %v4709
      %v5616 = vunpack.c.h.b16 %v4709
      %v5617 = vunpack.c.l.b16 %v4710
      %v5618 = vunpack.c.h.b16 %v4710
      %v5619 = vunpack.c.l.b16 %v4711
      %v5620 = vunpack.c.h.b16 %v4711
      %v5621 = vunpack.c.l.b16 %v4712
      %v5622 = vunpack.c.h.b16 %v4712
      %v5623 = vunpack.c.l.b16 %v4713
      %v5624 = vunpack.c.h.b16 %v4713
      %v5625 = vunpack.c.l.b16 %v4714
      %v5626 = vunpack.c.h.b16 %v4714
      %v5627 = vunpack.c.l.b16 %v4715
      %v5628 = vunpack.c.h.b16 %v4715
      %v5629 = vunpack.c.l.b16 %v4716
      %v5630 = vunpack.c.h.b16 %v4716
      %v5631 = vunpack.c.l.b16 %v4717
      %v5632 = vunpack.c.h.b16 %v4717
      %v5633 = vunpack.c.l.b16 %v4718
      %v5634 = vunpack.c.h.b16 %v4718
      %v5635 = vunpack.c.l.b16 %v4719
      %v5636 = vunpack.c.h.b16 %v4719
      %v5637 = vunpack.c.l.b16 %v4720
      %v5638 = vunpack.c.h.b16 %v4720
      %v5639 = vunpack.c.l.b16 %v4721
      %v5640 = vunpack.c.h.b16 %v4721
      %v5641 = vunpack.c.l.b16 %v4722
      %v5642 = vunpack.c.h.b16 %v4722
      %v5643 = vunpack.c.l.b16 %v4723
      %v5644 = vunpack.c.h.b16 %v4723
      %v5645 = vunpack.c.l.b16 %v4724
      %v5646 = vunpack.c.h.b16 %v4724
      %v5647 = vunpack.c.l.b16 %v4725
      %v5648 = vunpack.c.h.b16 %v4725
      %v5649 = vunpack.c.l.b16 %v4726
      %v5650 = vunpack.c.h.b16 %v4726
      %v5651 = vunpack.c.l.b16 %v4727
      %v5652 = vunpack.c.h.b16 %v4727
      %v5653 = vunpack.c.l.b16 %v4728
      %v5654 = vunpack.c.h.b16 %v4728
      %v5655 = vunpack.c.l.b16 %v4729
      %v5656 = vunpack.c.h.b16 %v4729
      %v5657 = vunpack.c.l.b16 %v4730
      %v5658 = vunpack.c.h.b16 %v4730
      %v5659 = vunpack.c.l.b16 %v4731
      %v5660 = vunpack.c.h.b16 %v4731
      %v5661 = vunpack.c.l.b16 %v4732
      %v5662 = vunpack.c.h.b16 %v4732
      %v5663 = vunpack.c.l.b16 %v4733
      %v5664 = vunpack.c.h.b16 %v4733
      %v5665 = vunpack.c.l.b16 %v4734
      %v5666 = vunpack.c.h.b16 %v4734
      %v5667 = vunpack.c.l.b16 %v4735
      %v5668 = vunpack.c.h.b16 %v4735
      %v5669 = vunpack.c.l.b16 %v4736
      %v5670 = vunpack.c.h.b16 %v4736
      %v5671 = vunpack.c.l.b16 %v4737
      %v5672 = vunpack.c.h.b16 %v4737
      %v5673 = vunpack.c.l.b16 %v4738
      %v5674 = vunpack.c.h.b16 %v4738
      %v5675 = vunpack.c.l.b16 %v4739
      %v5676 = vunpack.c.h.b16 %v4739
      %v5677 = vunpack.c.l.b16 %v4740
      %v5678 = vunpack.c.h.b16 %v4740
      %v5679 = vunpack.c.l.b16 %v4741
      %v5680 = vunpack.c.h.b16 %v4741
      %v5681 = vunpack.c.l.b16 %v4742
      %v5682 = vunpack.c.h.b16 %v4742
      %v5683 = vunpack.c.l.b16 %v4743
      %v5684 = vunpack.c.h.b16 %v4743
      %v5685 = vunpack.c.l.b16 %v4744
      %v5686 = vunpack.c.h.b16 %v4744
      %v5687 = vunpack.c.l.b16 %v4745
      %v5688 = vunpack.c.h.b16 %v4745
      %v5689 = vunpack.c.l.b16 %v4746
      %v5690 = vunpack.c.h.b16 %v4746
      %v5691 = vunpack.c.l.b16 %v4747
      %v5692 = vunpack.c.h.b16 %v4747
      %v5693 = vunpack.c.l.b16 %v4748
      %v5694 = vunpack.c.h.b16 %v4748
      %v5695 = vunpack.c.l.b16 %v4749
      %v5696 = vunpack.c.h.b16 %v4749
      %v5697 = vunpack.c.l.b16 %v4750
      %v5698 = vunpack.c.h.b16 %v4750
      %v5699 = vunpack.c.l.b16 %v4751
      %v5700 = vunpack.c.h.b16 %v4751
      %v5701 = vunpack.c.l.b16 %v4752
      %v5702 = vunpack.c.h.b16 %v4752
      %v5703 = vunpack.c.l.b16 %v4753
      %v5704 = vunpack.c.h.b16 %v4753
      %v5705 = vunpack.c.l.b16 %v4754
      %v5706 = vunpack.c.h.b16 %v4754
      %v5707 = vunpack.c.l.b16 %v4755
      %v5708 = vunpack.c.h.b16 %v4755
      %v5709 = vunpack.c.l.b16 %v4756
      %v5710 = vunpack.c.h.b16 %v4756
      %v5711 = vunpack.c.l.b16 %v4757
      %v5712 = vunpack.c.h.b16 %v4757
      %v5713 = vunpack.c.l.b16 %v4758
      %v5714 = vunpack.c.h.b16 %v4758
      %v5715 = vunpack.c.l.b16 %v4759
      %v5716 = vunpack.c.h.b16 %v4759
      %v5717 = vunpack.c.l.b16 %v4760
      %v5718 = vunpack.c.h.b16 %v4760
      %v5719 = vunpack.c.l.b16 %v4761
      %v5720 = vunpack.c.h.b16 %v4761
      %v5721 = vunpack.c.l.b16 %v4762
      %v5722 = vunpack.c.h.b16 %v4762
      %v5723 = vunpack.c.l.b16 %v4763
      %v5724 = vunpack.c.h.b16 %v4763
      %v5725 = vunpack.c.l.b16 %v4764
      %v5726 = vunpack.c.h.b16 %v4764
      %v5727 = vunpack.c.l.b16 %v4765
      %v5728 = vunpack.c.h.b16 %v4765
      %v5729 = vunpack.c.l.b16 %v4766
      %v5730 = vunpack.c.h.b16 %v4766
      %v5731 = vunpack.c.l.b16 %v4767
      %v5732 = vunpack.c.h.b16 %v4767
      %v5733 = vunpack.c.l.b16 %v4768
      %v5734 = vunpack.c.h.b16 %v4768
      %v5735 = vunpack.c.l.b16 %v4769
      %v5736 = vunpack.c.h.b16 %v4769
      %v5737 = vunpack.c.l.b16 %v4770
      %v5738 = vunpack.c.h.b16 %v4770
      %v5739 = vunpack.c.l.b16 %v4771
      %v5740 = vunpack.c.h.b16 %v4771
      %v5741 = vunpack.c.l.b16 %v4772
      %v5742 = vunpack.c.h.b16 %v4772
      %v5743 = vunpack.c.l.b16 %v4773
      %v5744 = vunpack.c.h.b16 %v4773
      %v5745 = vunpack.c.l.b16 %v4774
      %v5746 = vunpack.c.h.b16 %v4774
      %v5747 = vunpack.c.l.b16 %v4775
      %v5748 = vunpack.c.h.b16 %v4775
      %v5749 = vunpack.c.l.b16 %v4776
      %v5750 = vunpack.c.h.b16 %v4776
      %v5751 = vunpack.c.l.b16 %v4777
      %v5752 = vunpack.c.h.b16 %v4777
      %v5753 = vunpack.c.l.b16 %v4778
      %v5754 = vunpack.c.h.b16 %v4778
      %v5755 = vunpack.c.l.b16 %v4779
      %v5756 = vunpack.c.h.b16 %v4779
      %v5757 = vunpack.c.l.b16 %v4780
      %v5758 = vunpack.c.h.b16 %v4780
      %v5759 = vunpack.c.l.b16 %v4781
      %v5760 = vunpack.c.h.b16 %v4781
      %v5761 = vunpack.c.l.b16 %v4782
      %v5762 = vunpack.c.h.b16 %v4782
      %v5763 = vunpack.c.l.b16 %v4783
      %v5764 = vunpack.c.h.b16 %v4783
      %v5765 = vunpack.c.l.b16 %v4784
      %v5766 = vunpack.c.h.b16 %v4784
      %v5767 = vunpack.c.l.b16 %v4785
      %v5768 = vunpack.c.h.b16 %v4785
      %v5769 = vunpack.c.l.b16 %v4786
      %v5770 = vunpack.c.h.b16 %v4786
      %v5771 = vunpack.c.l.b16 %v4787
      %v5772 = vunpack.c.h.b16 %v4787
      %v5773 = vunpack.c.l.b16 %v4788
      %v5774 = vunpack.c.h.b16 %v4788
      %v5775 = vunpack.c.l.b16 %v4789
      %v5776 = vunpack.c.h.b16 %v4789
      %v5777 = vunpack.c.l.b16 %v4790
      %v5778 = vunpack.c.h.b16 %v4790
      %v5779 = vunpack.c.l.b16 %v4791
      %v5780 = vunpack.c.h.b16 %v4791
      %v5781 = vunpack.c.l.b16 %v4792
      %v5782 = vunpack.c.h.b16 %v4792
      %v5783 = vunpack.c.l.b16 %v4793
      %v5784 = vunpack.c.h.b16 %v4793
      %v5785 = vunpack.c.l.b16 %v4794
      %v5786 = vunpack.c.h.b16 %v4794
      %v5787 = vunpack.c.l.b16 %v4795
      %v5788 = vunpack.c.h.b16 %v4795
      %v5789 = vunpack.c.l.b16 %v4796
      %v5790 = vunpack.c.h.b16 %v4796
      %v5791 = vunpack.c.l.b16 %v4797
      %v5792 = vunpack.c.h.b16 %v4797
      %v5793 = vunpack.c.l.b16 %v4798
      %v5794 = vunpack.c.h.b16 %v4798
      %v5795 = vunpack.c.l.b16 %v4799
      %v5796 = vunpack.c.h.b16 %v4799
      %v5797 = vunpack.c.l.b16 %v4800
      %v5798 = vunpack.c.h.b16 %v4800
      %v5799 = vunpack.c.l.b16 %v4801
      %v5800 = vunpack.c.h.b16 %v4801
      %v5801 = vunpack.c.l.b16 %v4802
      %v5802 = vunpack.c.h.b16 %v4802
      %v5803 = vunpack.c.l.b16 %v4803
      %v5804 = vunpack.c.h.b16 %v4803
      %v5805 = vunpack.c.l.b16 %v4804
      %v5806 = vunpack.c.h.b16 %v4804
      %v5807 = vunpack.c.l.b16 %v4805
      %v5808 = vunpack.c.h.b16 %v4805
      %v5809 = vunpack.c.l.b16 %v4806
      %v5810 = vunpack.c.h.b16 %v4806
      %v5811 = vunpack.c.l.b16 %v4807
      %v5812 = vunpack.c.h.b16 %v4807
      %v5813 = vunpack.c.l.b16 %v4808
      %v5814 = vunpack.c.h.b16 %v4808
      %v5815 = vunpack.c.l.b16 %v4809
      %v5816 = vunpack.c.h.b16 %v4809
      %v5817 = vunpack.c.l.b16 %v4810
      %v5818 = vunpack.c.h.b16 %v4810
      %v5819 = vpack.c.b16 %v5567, %v5563
      %v5820 = vpack.c.b16 %v5568, %v5564
      %v5821 = vpack.c.b16 %v5569, %v5565
      %v5822 = vpack.c.b16 %v5570, %v5566
      %v5823 = vpack.c.b16 %v5575, %v5571
      %v5824 = vpack.c.b16 %v5576, %v5572
      %v5825 = vpack.c.b16 %v5577, %v5573
      %v5826 = vpack.c.b16 %v5578, %v5574
      %v5827 = vpack.c.b16 %v5583, %v5579
      %v5828 = vpack.c.b16 %v5584, %v5580
      %v5829 = vpack.c.b16 %v5585, %v5581
      %v5830 = vpack.c.b16 %v5586, %v5582
      %v5831 = vpack.c.b16 %v5591, %v5587
      %v5832 = vpack.c.b16 %v5592, %v5588
      %v5833 = vpack.c.b16 %v5593, %v5589
      %v5834 = vpack.c.b16 %v5594, %v5590
      %v5835 = vpack.c.b16 %v5599, %v5595
      %v5836 = vpack.c.b16 %v5600, %v5596
      %v5837 = vpack.c.b16 %v5601, %v5597
      %v5838 = vpack.c.b16 %v5602, %v5598
      %v5839 = vpack.c.b16 %v5607, %v5603
      %v5840 = vpack.c.b16 %v5608, %v5604
      %v5841 = vpack.c.b16 %v5609, %v5605
      %v5842 = vpack.c.b16 %v5610, %v5606
      %v5843 = vpack.c.b16 %v5615, %v5611
      %v5844 = vpack.c.b16 %v5616, %v5612
      %v5845 = vpack.c.b16 %v5617, %v5613
      %v5846 = vpack.c.b16 %v5618, %v5614
      %v5847 = vpack.c.b16 %v5623, %v5619
      %v5848 = vpack.c.b16 %v5624, %v5620
      %v5849 = vpack.c.b16 %v5625, %v5621
      %v5850 = vpack.c.b16 %v5626, %v5622
      %v5851 = vpack.c.b16 %v5631, %v5627
      %v5852 = vpack.c.b16 %v5632, %v5628
      %v5853 = vpack.c.b16 %v5633, %v5629
      %v5854 = vpack.c.b16 %v5634, %v5630
      %v5855 = vpack.c.b16 %v5639, %v5635
      %v5856 = vpack.c.b16 %v5640, %v5636
      %v5857 = vpack.c.b16 %v5641, %v5637
      %v5858 = vpack.c.b16 %v5642, %v5638
      %v5859 = vpack.c.b16 %v5647, %v5643
      %v5860 = vpack.c.b16 %v5648, %v5644
      %v5861 = vpack.c.b16 %v5649, %v5645
      %v5862 = vpack.c.b16 %v5650, %v5646
      %v5863 = vpack.c.b16 %v5655, %v5651
      %v5864 = vpack.c.b16 %v5656, %v5652
      %v5865 = vpack.c.b16 %v5657, %v5653
      %v5866 = vpack.c.b16 %v5658, %v5654
      %v5867 = vpack.c.b16 %v5663, %v5659
      %v5868 = vpack.c.b16 %v5664, %v5660
      %v5869 = vpack.c.b16 %v5665, %v5661
      %v5870 = vpack.c.b16 %v5666, %v5662
      %v5871 = vpack.c.b16 %v5671, %v5667
      %v5872 = vpack.c.b16 %v5672, %v5668
      %v5873 = vpack.c.b16 %v5673, %v5669
      %v5874 = vpack.c.b16 %v5674, %v5670
      %v5875 = vpack.c.b16 %v5679, %v5675
      %v5876 = vpack.c.b16 %v5680, %v5676
      %v5877 = vpack.c.b16 %v5681, %v5677
      %v5878 = vpack.c.b16 %v5682, %v5678
      %v5879 = vpack.c.b16 %v5687, %v5683
      %v5880 = vpack.c.b16 %v5688, %v5684
      %v5881 = vpack.c.b16 %v5689, %v5685
      %v5882 = vpack.c.b16 %v5690, %v5686
      %v5883 = vpack.c.b16 %v5695, %v5691
      %v5884 = vpack.c.b16 %v5696, %v5692
      %v5885 = vpack.c.b16 %v5697, %v5693
      %v5886 = vpack.c.b16 %v5698, %v5694
      %v5887 = vpack.c.b16 %v5703, %v5699
      %v5888 = vpack.c.b16 %v5704, %v5700
      %v5889 = vpack.c.b16 %v5705, %v5701
      %v5890 = vpack.c.b16 %v5706, %v5702
      %v5891 = vpack.c.b16 %v5711, %v5707
      %v5892 = vpack.c.b16 %v5712, %v5708
      %v5893 = vpack.c.b16 %v5713, %v5709
      %v5894 = vpack.c.b16 %v5714, %v5710
      %v5895 = vpack.c.b16 %v5719, %v5715
      %v5896 = vpack.c.b16 %v5720, %v5716
      %v5897 = vpack.c.b16 %v5721, %v5717
      %v5898 = vpack.c.b16 %v5722, %v5718
      %v5899 = vpack.c.b16 %v5727, %v5723
      %v5900 = vpack.c.b16 %v5728, %v5724
      %v5901 = vpack.c.b16 %v5729, %v5725
      %v5902 = vpack.c.b16 %v5730, %v5726
      %v5903 = vpack.c.b16 %v5735, %v5731
      %v5904 = vpack.c.b16 %v5736, %v5732
      %v5905 = vpack.c.b16 %v5737, %v5733
      %v5906 = vpack.c.b16 %v5738, %v5734
      %v5907 = vpack.c.b16 %v5743, %v5739
      %v5908 = vpack.c.b16 %v5744, %v5740
      %v5909 = vpack.c.b16 %v5745, %v5741
      %v5910 = vpack.c.b16 %v5746, %v5742
      %v5911 = vpack.c.b16 %v5751, %v5747
      %v5912 = vpack.c.b16 %v5752, %v5748
      %v5913 = vpack.c.b16 %v5753, %v5749
      %v5914 = vpack.c.b16 %v5754, %v5750
      %v5915 = vpack.c.b16 %v5759, %v5755
      %v5916 = vpack.c.b16 %v5760, %v5756
      %v5917 = vpack.c.b16 %v5761, %v5757
      %v5918 = vpack.c.b16 %v5762, %v5758
      %v5919 = vpack.c.b16 %v5767, %v5763
      %v5920 = vpack.c.b16 %v5768, %v5764
      %v5921 = vpack.c.b16 %v5769, %v5765
      %v5922 = vpack.c.b16 %v5770, %v5766
      %v5923 = vpack.c.b16 %v5775, %v5771
      %v5924 = vpack.c.b16 %v5776, %v5772
      %v5925 = vpack.c.b16 %v5777, %v5773
      %v5926 = vpack.c.b16 %v5778, %v5774
      %v5927 = vpack.c.b16 %v5783, %v5779
      %v5928 = vpack.c.b16 %v5784, %v5780
      %v5929 = vpack.c.b16 %v5785, %v5781
      %v5930 = vpack.c.b16 %v5786, %v5782
      %v5931 = vpack.c.b16 %v5791, %v5787
      %v5932 = vpack.c.b16 %v5792, %v5788
      %v5933 = vpack.c.b16 %v5793, %v5789
      %v5934 = vpack.c.b16 %v5794, %v5790
      %v5935 = vpack.c.b16 %v5799, %v5795
      %v5936 = vpack.c.b16 %v5800, %v5796
      %v5937 = vpack.c.b16 %v5801, %v5797
      %v5938 = vpack.c.b16 %v5802, %v5798
      %v5939 = vpack.c.b16 %v5807, %v5803
      %v5940 = vpack.c.b16 %v5808, %v5804
      %v5941 = vpack.c.b16 %v5809, %v5805
      %v5942 = vpack.c.b16 %v5810, %v5806
      %v5943 = vpack.c.b16 %v5815, %v5811
      %v5944 = vpack.c.b16 %v5816, %v5812
      %v5945 = vpack.c.b16 %v5817, %v5813
      %v5946 = vpack.c.b16 %v5818, %v5814
      %6075 = vmatprep.subr.bf16.mxu0 %v5820
      %6076 = vmatpush1.bf16.msra.mxu0 %v5819
      %6077 = vmatprep.subr.bf16.mxu0 %v5824
      %6078 = vmatpush1.bf16.msra.mxu0 %v5823
      %6079 = vmatprep.subr.bf16.mxu0 %v5828
      %6080 = vmatpush1.bf16.msra.mxu0 %v5827
      %6081 = vmatprep.subr.bf16.mxu0 %v5832
      %6082 = vmatpush1.bf16.msra.mxu0 %v5831
      %6083 = vmatprep.subr.bf16.mxu0 %v5836
      %6084 = vmatpush1.bf16.msra.mxu0 %v5835
      %6085 = vmatprep.subr.bf16.mxu0 %v5840
      %6086 = vmatpush1.bf16.msra.mxu0 %v5839
      %6087 = vmatprep.subr.bf16.mxu0 %v5844
      %6088 = vmatpush1.bf16.msra.mxu0 %v5843
      %6089 = vmatprep.subr.bf16.mxu0 %v5848
      %6090 = vmatpush1.bf16.msra.mxu0 %v5847
      %6091 = vmatprep.subr.bf16.mxu0 %v5852
      %6092 = vmatpush1.bf16.msra.mxu0 %v5851
      %6093 = vmatprep.subr.bf16.mxu0 %v5856
      %6094 = vmatpush1.bf16.msra.mxu0 %v5855
      %6095 = vmatprep.subr.bf16.mxu0 %v5860
      %6096 = vmatpush1.bf16.msra.mxu0 %v5859
      %6097 = vmatprep.subr.bf16.mxu0 %v5864
      %6098 = vmatpush1.bf16.msra.mxu0 %v5863
      %6099 = vmatprep.subr.bf16.mxu0 %v5868
      %6100 = vmatpush1.bf16.msra.mxu0 %v5867
      %6101 = vmatprep.subr.bf16.mxu0 %v5872
      %6102 = vmatpush1.bf16.msra.mxu0 %v5871
      %6103 = vmatprep.subr.bf16.mxu0 %v5876
      %6104 = vmatpush1.bf16.msra.mxu0 %v5875
      %6105 = vmatprep.subr.bf16.mxu0 %v5880
      %6106 = vmatpush1.bf16.msra.mxu0 %v5879
      %6107 = vmatprep.mubr.bf16.mxu0 %v5404
      %6108 = vmatmul.mubr.bf16.gmra.mrb[0].mxu0 %v5403
      %v6109 = vpop.f32.mrb[0].mxu0
      %v6110 = vadd.f32 %v577, %v6109
      %v6111 = vpop.f32.mrb[0].mxu0
      %v6112 = vadd.f32 %v581, %v6111
      %v6113 = vpop.f32.mrb[0].mxu0
      %v6114 = vadd.f32 %v577, %v6113
      %v6115 = vpop.f32.mrb[0].mxu0
      %v6116 = vadd.f32 %v581, %v6115
      %6117 = vmatprep.mubr.bf16.mxu0 %v5408
      %6118 = vmatmul.mubr.bf16.gmra.mrb[0].mxu0 %v5407
      %v6119 = vpop.f32.mrb[0].mxu0
      %v6120 = vadd.f32 %v577, %v6119
      %v6121 = vpop.f32.mrb[0].mxu0
      %v6122 = vadd.f32 %v581, %v6121
      %v6123 = vpop.f32.mrb[0].mxu0
      %v6124 = vadd.f32 %v577, %v6123
      %v6125 = vpop.f32.mrb[0].mxu0
      %v6126 = vadd.f32 %v581, %v6125
      %6127 = vmatprep.mubr.bf16.mxu0 %v5412
      %6128 = vmatmul.mubr.bf16.gmra.mrb[0].mxu0 %v5411
      %v6129 = vpop.f32.mrb[0].mxu0
      %v6130 = vadd.f32 %v577, %v6129
      %v6131 = vpop.f32.mrb[0].mxu0
      %v6132 = vadd.f32 %v581, %v6131
      %v6133 = vpop.f32.mrb[0].mxu0
      %v6134 = vadd.f32 %v577, %v6133
      %v6135 = vpop.f32.mrb[0].mxu0
      %v6136 = vadd.f32 %v581, %v6135
      %6137 = vmatprep.mubr.bf16.mxu0 %v5416
      %6138 = vmatmul.mubr.bf16.gmra.mrb[0].mxu0 %v5415
      %v6139 = vpop.f32.mrb[0].mxu0
      %v6140 = vadd.f32 %v577, %v6139
      %v6141 = vpop.f32.mrb[0].mxu0
      %v6142 = vadd.f32 %v581, %v6141
      %v6143 = vpop.f32.mrb[0].mxu0
      %v6144 = vadd.f32 %v577, %v6143
      %v6145 = vpop.f32.mrb[0].mxu0
      %v6146 = vadd.f32 %v581, %v6145
      %6147 = vdwg.mxu0
      %6148 = vmatprep.subr.bf16.mxu0 %v5884
      %6149 = vmatpush1.bf16.msra.mxu0 %v5883
      %6150 = vmatprep.subr.bf16.mxu0 %v5888
      %6151 = vmatpush1.bf16.msra.mxu0 %v5887
      %6152 = vmatprep.subr.bf16.mxu0 %v5892
      %6153 = vmatpush1.bf16.msra.mxu0 %v5891
      %6154 = vmatprep.subr.bf16.mxu0 %v5896
      %6155 = vmatpush1.bf16.msra.mxu0 %v5895
      %6156 = vmatprep.subr.bf16.mxu0 %v5900
      %6157 = vmatpush1.bf16.msra.mxu0 %v5899
      %6158 = vmatprep.subr.bf16.mxu0 %v5904
      %6159 = vmatpush1.bf16.msra.mxu0 %v5903
      %6160 = vmatprep.subr.bf16.mxu0 %v5908
      %6161 = vmatpush1.bf16.msra.mxu0 %v5907
      %6162 = vmatprep.subr.bf16.mxu0 %v5912
      %6163 = vmatpush1.bf16.msra.mxu0 %v5911
      %6164 = vmatprep.subr.bf16.mxu0 %v5916
      %6165 = vmatpush1.bf16.msra.mxu0 %v5915
      %6166 = vmatprep.subr.bf16.mxu0 %v5920
      %6167 = vmatpush1.bf16.msra.mxu0 %v5919
      %6168 = vmatprep.subr.bf16.mxu0 %v5924
      %6169 = vmatpush1.bf16.msra.mxu0 %v5923
      %6170 = vmatprep.subr.bf16.mxu0 %v5928
      %6171 = vmatpush1.bf16.msra.mxu0 %v5927
      %6172 = vmatprep.subr.bf16.mxu0 %v5932
      %6173 = vmatpush1.bf16.msra.mxu0 %v5931
      %6174 = vmatprep.subr.bf16.mxu0 %v5936
      %6175 = vmatpush1.bf16.msra.mxu0 %v5935
      %6176 = vmatprep.subr.bf16.mxu0 %v5940
      %6177 = vmatpush1.bf16.msra.mxu0 %v5939
      %6178 = vmatprep.subr.bf16.mxu0 %v5944
      %6179 = vmatpush1.bf16.msra.mxu0 %v5943
      %6180 = vmatprep.mubr.bf16.mxu0 %v5406
      %6181 = vmatmul.mubr.bf16.gmra.mrb[0].mxu0 %v5405
      %v6182 = vpop.f32.mrb[0].mxu0
      %v6183 = vadd.f32 %v6110, %v6182
      %v6184 = vpop.f32.mrb[0].mxu0
      %v6185 = vadd.f32 %v6112, %v6184
      %v6186 = vpop.f32.mrb[0].mxu0
      %v6187 = vadd.f32 %v6114, %v6186
      %v6188 = vpop.f32.mrb[0].mxu0
      %v6189 = vadd.f32 %v6116, %v6188
      %6190 = vmatprep.mubr.bf16.mxu0 %v5410
      %6191 = vmatmul.mubr.bf16.gmra.mrb[0].mxu0 %v5409
      %v6192 = vpop.f32.mrb[0].mxu0
      %v6193 = vadd.f32 %v6120, %v6192
      %v6194 = vpop.f32.mrb[0].mxu0
      %v6195 = vadd.f32 %v6122, %v6194
      %v6196 = vpop.f32.mrb[0].mxu0
      %v6197 = vadd.f32 %v6124, %v6196
      %v6198 = vpop.f32.mrb[0].mxu0
      %v6199 = vadd.f32 %v6126, %v6198
      %6200 = vmatprep.mubr.bf16.mxu0 %v5414
      %6201 = vmatmul.mubr.bf16.gmra.mrb[0].mxu0 %v5413
      %v6202 = vpop.f32.mrb[0].mxu0
      %v6203 = vadd.f32 %v6130, %v6202
      %v6204 = vpop.f32.mrb[0].mxu0
      %v6205 = vadd.f32 %v6132, %v6204
      %v6206 = vpop.f32.mrb[0].mxu0
      %v6207 = vadd.f32 %v6134, %v6206
      %v6208 = vpop.f32.mrb[0].mxu0
      %v6209 = vadd.f32 %v6136, %v6208
      %6210 = vmatprep.mubr.bf16.mxu0 %v5418
      %6211 = vmatmul.mubr.bf16.gmra.mrb[0].mxu0 %v5417
      %v6212 = vpop.f32.mrb[0].mxu0
      %v6213 = vadd.f32 %v6140, %v6212
      %v6214 = vpop.f32.mrb[0].mxu0
      %v6215 = vadd.f32 %v6142, %v6214
      %v6216 = vpop.f32.mrb[0].mxu0
      %v6217 = vadd.f32 %v6144, %v6216
      %v6218 = vpop.f32.mrb[0].mxu0
      %v6219 = vadd.f32 %v6146, %v6218
      %6220 = vdwg.mxu0
      %6221 = vmatprep.subr.bf16.mxu0 %v5822
      %6222 = vmatpush1.bf16.msra.mxu0 %v5821
      %6223 = vmatprep.subr.bf16.mxu0 %v5826
      %6224 = vmatpush1.bf16.msra.mxu0 %v5825
      %6225 = vmatprep.subr.bf16.mxu0 %v5830
      %6226 = vmatpush1.bf16.msra.mxu0 %v5829
      %6227 = vmatprep.subr.bf16.mxu0 %v5834
      %6228 = vmatpush1.bf16.msra.mxu0 %v5833
      %6229 = vmatprep.subr.bf16.mxu0 %v5838
      %6230 = vmatpush1.bf16.msra.mxu0 %v5837
      %6231 = vmatprep.subr.bf16.mxu0 %v5842
      %6232 = vmatpush1.bf16.msra.mxu0 %v5841
      %6233 = vmatprep.subr.bf16.mxu0 %v5846
      %6234 = vmatpush1.bf16.msra.mxu0 %v5845
      %6235 = vmatprep.subr.bf16.mxu0 %v5850
      %6236 = vmatpush1.bf16.msra.mxu0 %v5849
      %6237 = vmatprep.subr.bf16.mxu0 %v5854
      %6238 = vmatpush1.bf16.msra.mxu0 %v5853
      %6239 = vmatprep.subr.bf16.mxu0 %v5858
      %6240 = vmatpush1.bf16.msra.mxu0 %v5857
      %6241 = vmatprep.subr.bf16.mxu0 %v5862
      %6242 = vmatpush1.bf16.msra.mxu0 %v5861
      %6243 = vmatprep.subr.bf16.mxu0 %v5866
      %6244 = vmatpush1.bf16.msra.mxu0 %v5865
      %6245 = vmatprep.subr.bf16.mxu0 %v5870
      %6246 = vmatpush1.bf16.msra.mxu0 %v5869
      %6247 = vmatprep.subr.bf16.mxu0 %v5874
      %6248 = vmatpush1.bf16.msra.mxu0 %v5873
      %6249 = vmatprep.subr.bf16.mxu0 %v5878
      %6250 = vmatpush1.bf16.msra.mxu0 %v5877
      %6251 = vmatprep.subr.bf16.mxu0 %v5882
      %6252 = vmatpush1.bf16.msra.mxu0 %v5881
      %6253 = vmatprep.mubr.bf16.mxu0 %v5404
      %6254 = vmatmul.mubr.bf16.gmra.mrb[0].mxu0 %v5403
      %v6255 = vpop.f32.mrb[0].mxu0
      %v6256 = vadd.f32 %v585, %v6255
      %v6257 = vpop.f32.mrb[0].mxu0
      %v6258 = vadd.f32 %v589, %v6257
      %v6259 = vpop.f32.mrb[0].mxu0
      %v6260 = vadd.f32 %v585, %v6259
      %v6261 = vpop.f32.mrb[0].mxu0
      %v6262 = vadd.f32 %v589, %v6261
      %6263 = vmatprep.mubr.bf16.mxu0 %v5408
      %6264 = vmatmul.mubr.bf16.gmra.mrb[0].mxu0 %v5407
      %v6265 = vpop.f32.mrb[0].mxu0
      %v6266 = vadd.f32 %v585, %v6265
      %v6267 = vpop.f32.mrb[0].mxu0
      %v6268 = vadd.f32 %v589, %v6267
      %v6269 = vpop.f32.mrb[0].mxu0
      %v6270 = vadd.f32 %v585, %v6269
      %v6271 = vpop.f32.mrb[0].mxu0
      %v6272 = vadd.f32 %v589, %v6271
      %6273 = vmatprep.mubr.bf16.mxu0 %v5412
      %6274 = vmatmul.mubr.bf16.gmra.mrb[0].mxu0 %v5411
      %v6275 = vpop.f32.mrb[0].mxu0
      %v6276 = vadd.f32 %v585, %v6275
      %v6277 = vpop.f32.mrb[0].mxu0
      %v6278 = vadd.f32 %v589, %v6277
      %v6279 = vpop.f32.mrb[0].mxu0
      %v6280 = vadd.f32 %v585, %v6279
      %v6281 = vpop.f32.mrb[0].mxu0
      %v6282 = vadd.f32 %v589, %v6281
      %6283 = vmatprep.mubr.bf16.mxu0 %v5416
      %6284 = vmatmul.mubr.bf16.gmra.mrb[0].mxu0 %v5415
      %v6285 = vpop.f32.mrb[0].mxu0
      %v6286 = vadd.f32 %v585, %v6285
      %v6287 = vpop.f32.mrb[0].mxu0
      %v6288 = vadd.f32 %v589, %v6287
      %v6289 = vpop.f32.mrb[0].mxu0
      %v6290 = vadd.f32 %v585, %v6289
      %v6291 = vpop.f32.mrb[0].mxu0
      %v6292 = vadd.f32 %v589, %v6291
      %6293 = vdwg.mxu0
      %6294 = vmatprep.subr.bf16.mxu0 %v5886
      %6295 = vmatpush1.bf16.msra.mxu0 %v5885
      %6296 = vmatprep.subr.bf16.mxu0 %v5890
      %6297 = vmatpush1.bf16.msra.mxu0 %v5889
      %6298 = vmatprep.subr.bf16.mxu0 %v5894
      %6299 = vmatpush1.bf16.msra.mxu0 %v5893
      %6300 = vmatprep.subr.bf16.mxu0 %v5898
      %6301 = vmatpush1.bf16.msra.mxu0 %v5897
      %6302 = vmatprep.subr.bf16.mxu0 %v5902
      %6303 = vmatpush1.bf16.msra.mxu0 %v5901
      %6304 = vmatprep.subr.bf16.mxu0 %v5906
      %6305 = vmatpush1.bf16.msra.mxu0 %v5905
      %6306 = vmatprep.subr.bf16.mxu0 %v5910
      %6307 = vmatpush1.bf16.msra.mxu0 %v5909
      %6308 = vmatprep.subr.bf16.mxu0 %v5914
      %6309 = vmatpush1.bf16.msra.mxu0 %v5913
      %6310 = vmatprep.subr.bf16.mxu0 %v5918
      %6311 = vmatpush1.bf16.msra.mxu0 %v5917
      %6312 = vmatprep.subr.bf16.mxu0 %v5922
      %6313 = vmatpush1.bf16.msra.mxu0 %v5921
      %6314 = vmatprep.subr.bf16.mxu0 %v5926
      %6315 = vmatpush1.bf16.msra.mxu0 %v5925
      %6316 = vmatprep.subr.bf16.mxu0 %v5930
      %6317 = vmatpush1.bf16.msra.mxu0 %v5929
      %6318 = vmatprep.subr.bf16.mxu0 %v5934
      %6319 = vmatpush1.bf16.msra.mxu0 %v5933
      %6320 = vmatprep.subr.bf16.mxu0 %v5938
      %6321 = vmatpush1.bf16.msra.mxu0 %v5937
      %6322 = vmatprep.subr.bf16.mxu0 %v5942
      %6323 = vmatpush1.bf16.msra.mxu0 %v5941
      %6324 = vmatprep.subr.bf16.mxu0 %v5946
      %6325 = vmatpush1.bf16.msra.mxu0 %v5945
      %6326 = vmatprep.mubr.bf16.mxu0 %v5406
      %6327 = vmatmul.mubr.bf16.gmra.mrb[0].mxu0 %v5405
      %v6328 = vpop.f32.mrb[0].mxu0
      %v6329 = vadd.f32 %v6256, %v6328
      %v6330 = vpop.f32.mrb[0].mxu0
      %v6331 = vadd.f32 %v6258, %v6330
      %v6332 = vpop.f32.mrb[0].mxu0
      %v6333 = vadd.f32 %v6260, %v6332
      %v6334 = vpop.f32.mrb[0].mxu0
      %v6335 = vadd.f32 %v6262, %v6334
      %6336 = vmatprep.mubr.bf16.mxu0 %v5410
      %6337 = vmatmul.mubr.bf16.gmra.mrb[0].mxu0 %v5409
      %v6338 = vpop.f32.mrb[0].mxu0
      %v6339 = vadd.f32 %v6266, %v6338
      %v6340 = vpop.f32.mrb[0].mxu0
      %v6341 = vadd.f32 %v6268, %v6340
      %v6342 = vpop.f32.mrb[0].mxu0
      %v6343 = vadd.f32 %v6270, %v6342
      %v6344 = vpop.f32.mrb[0].mxu0
      %v6345 = vadd.f32 %v6272, %v6344
      %6346 = vmatprep.mubr.bf16.mxu0 %v5414
      %6347 = vmatmul.mubr.bf16.gmra.mrb[0].mxu0 %v5413
      %v6348 = vpop.f32.mrb[0].mxu0
      %v6349 = vadd.f32 %v6276, %v6348
      %v6350 = vpop.f32.mrb[0].mxu0
      %v6351 = vadd.f32 %v6278, %v6350
      %v6352 = vpop.f32.mrb[0].mxu0
      %v6353 = vadd.f32 %v6280, %v6352
      %v6354 = vpop.f32.mrb[0].mxu0
      %v6355 = vadd.f32 %v6282, %v6354
      %6356 = vmatprep.mubr.bf16.mxu0 %v5418
      %6357 = vmatmul.mubr.bf16.gmra.mrb[0].mxu0 %v5417
      %v6358 = vpop.f32.mrb[0].mxu0
      %v6359 = vadd.f32 %v6286, %v6358
      %v6360 = vpop.f32.mrb[0].mxu0
      %v6361 = vadd.f32 %v6288, %v6360
      %v6362 = vpop.f32.mrb[0].mxu0
      %v6363 = vadd.f32 %v6290, %v6362
      %v6364 = vpop.f32.mrb[0].mxu0
      %v6365 = vadd.f32 %v6292, %v6364
      %6366 = vdwg.mxu0
      %6367 = vst [vmem:[%s4648 + $0x10] sm:$0xff] %v6183
      %6368 = vst [vmem:[%s4648 + $0x18] sm:$0xff] %v6185
      %6369 = vst [vmem:[%s4648 + $0x90] sm:$0xff] %v6187
      %6370 = vst [vmem:[%s4648 + $0x98] sm:$0xff] %v6189
      %6371 = vst [vmem:[%s4648 + $0x110] sm:$0xff] %v6193
      %6372 = vst [vmem:[%s4648 + $0x118] sm:$0xff] %v6195
      %6373 = vst [vmem:[%s4648 + $0x190] sm:$0xff] %v6197
      %6374 = vst [vmem:[%s4648 + $0x198] sm:$0xff] %v6199
      %6375 = vst [vmem:[%s4648 + $0x210] sm:$0xff] %v6203
      %6376 = vst [vmem:[%s4648 + $0x218] sm:$0xff] %v6205
      %6377 = vst [vmem:[%s4648 + $0x290] sm:$0xff] %v6207
      %6378 = vst [vmem:[%s4648 + $0x298] sm:$0xff] %v6209
      %6379 = vst [vmem:[%s4648 + $0x310] sm:$0xff] %v6213
      %6380 = vst [vmem:[%s4648 + $0x318] sm:$0xff] %v6215
      %6381 = vst [vmem:[%s4648 + $0x390] sm:$0xff] %v6217
      %6382 = vst [vmem:[%s4648 + $0x398] sm:$0xff] %v6219
      %6383 = vst [vmem:[%s4665 + $0x10] sm:$0xff] %v6329
      %6384 = vst [vmem:[%s4665 + $0x18] sm:$0xff] %v6331
      %6385 = vst [vmem:[%s4665 + $0x90] sm:$0xff] %v6333
      %6386 = vst [vmem:[%s4665 + $0x98] sm:$0xff] %v6335
      %6387 = vst [vmem:[%s4665 + $0x110] sm:$0xff] %v6339
      %6388 = vst [vmem:[%s4665 + $0x118] sm:$0xff] %v6341
      %6389 = vst [vmem:[%s4665 + $0x190] sm:$0xff] %v6343
      %6390 = vst [vmem:[%s4665 + $0x198] sm:$0xff] %v6345
      %6391 = vst [vmem:[%s4665 + $0x210] sm:$0xff] %v6349
      %6392 = vst [vmem:[%s4665 + $0x218] sm:$0xff] %v6351
      %6393 = vst [vmem:[%s4665 + $0x290] sm:$0xff] %v6353
      %6394 = vst [vmem:[%s4665 + $0x298] sm:$0xff] %v6355
      %6395 = vst [vmem:[%s4665 + $0x310] sm:$0xff] %v6359
      %6396 = vst [vmem:[%s4665 + $0x318] sm:$0xff] %v6361
      %6397 = vst [vmem:[%s4665 + $0x390] sm:$0xff] %v6363
      %6398 = vst [vmem:[%s4665 + $0x398] sm:$0xff] %v6365
      %s6399 = smul.u32 8, %s19
      %p6400 = scmp.lt.s32.totalorder %s18, 1
      %s6401 = scalar_select %p6400, %s18, 1
      %p6402 = scmp.lt.s32.totalorder %s6399, 7
      %s6403 = scalar_select %p6402, %s6399, 7
      %s6404 = smul.addr %s6403, 16
      %s6405 = smul.addr %s6401, 128
      %s6406 = sadd.s32 %s6404, %s6405
      %s6407 = smul.addr %s6406, 8
      %s6408 = scalar_lea.vmem %s3, %s6407
      // Predicated region
      $region33: #{model_forward.3} parent=31 // pred_check
        %p6409 = pneg %p114
      $region34: #{model_forward.3} parent=31 // pred_check_branch
        %6411 = sbr.rel (%p6409) target = $region36
      $region35: #{model_forward.3} parent=31 // pred_region
        %s6412 = smul.u32 8, %s19
      $region36: #{model_forward.3} parent=31 // pred_fallthru
        _
    $region32: #{model_forward.3} parent=5 // pred_fallthru
      _
    %p6413 = scmp.le.s32.totalorder 2, %s9
    // Predicated region
    $region37: #{model_forward.3} parent=5 // pred_check
      %p6414 = pneg %p6413
    $region38: #{model_forward.3} parent=5 // pred_check_branch
      %6416 = sbr.rel (%p6414) target = $region40
    $region39: #{model_forward.3} parent=5 // pred_region
      %s6417 = ssub.s32 %s9, 2
      // Predicated region
      $region41: #{model_forward.3} parent=39 // pred_check
        %p6418 = pneg %p120
      $region42: #{model_forward.3} parent=39 // pred_check_branch
        %6420 = sbr.rel (%p6418) target = $region44
      $region43: #{model_forward.3} parent=39 // pred_region
        %s6421 = smul.u32 8, %s21
        %p6422 = scmp.lt.s32.totalorder %s20, 1
        %s6423 = scalar_select %p6422, %s20, 1
        %p6424 = scmp.lt.s32.totalorder %s6421, 7
        %s6425 = scalar_select %p6424, %s6421, 7
        %s6426 = smul.addr %s6425, 16
        %s6427 = smul.addr %s6423, 128
        %s6428 = sadd.s32 %s6426, %s6427
        %s6429 = smul.addr %s6428, 8
        %s6430 = scalar_lea.vmem %s3, %s6429
      $region44: #{model_forward.3} parent=39 // pred_fallthru
        _
    $region40: #{model_forward.3} parent=5 // pred_fallthru
      _
  $region6: #{model_forward.3} parent=0 // loop_footer
    %s13 = sadd.s32 1, %s9
  $region7: #{model_forward.3} parent=0 // loop_footer_branch
    %8 = sbr.rel target = $region3
  $region8: #{model_forward.3} parent=0 // loop_exit
    _

</llo_original>
